<compile_context>
chip_gen: v7x
topology: tpu7x:2x2x1
jax: 0.10.0
libtpu: 0.0.40
codegen_flags: <defaults>
</compile_context>

<pallas_src>
import functools

import jax
import jax.numpy as jnp
from jax.experimental import pallas as pl
from jax.experimental.pallas import tpu as pltpu


# ------------------------------ fused kernel --------------------------------


def _bert_kernel(
    emb_ref, mask_ref,
    wqkv_ref, bqkv_ref, wo_ref, bo_ref,
    ln1g_ref, ln1b_ref, w1_ref, b1_ref, w2_ref, b2_ref, ln2g_ref, ln2b_ref,
    embg_ref, embb_ref, poolw_ref, poolb_ref, regw_ref, regb_ref,
    o_ref, x_ref,
    *, B, S, H, nH, dh, eps,
):
    layer = pl.program_id(0)
    n_layers = pl.num_programs(0)

    def layer_norm(x, g, b):
        mean = jnp.mean(x, axis=-1, keepdims=True)
        xc = x - mean
        var = jnp.mean(xc * xc, axis=-1, keepdims=True)
        return xc * jax.lax.rsqrt(var + eps) * g + b

    # ---- step 0: embedding LayerNorm into the carried hidden state ----
    @pl.when(layer == 0)
    def _():
        x_ref[...] = layer_norm(
            emb_ref[...].astype(jnp.float32), embg_ref[...], embb_ref[...]
        )

    x = x_ref[...]                                   # (B*S, H) f32 carried state

    # ---- self-attention: fused QKV matmul, all heads inside this kernel ----
    qkv = (
        jnp.dot(x, wqkv_ref[0], preferred_element_type=jnp.float32)
        + bqkv_ref[0]
    )                                                # (B*S, 3H)
    scale = dh ** -0.5
    mask = mask_ref[...]                             # (B, 1, S) additive bias

    ctx_heads = []
    for h in range(nH):
        qh = qkv[:, h * dh:(h + 1) * dh].reshape(B, S, dh)
        kh = qkv[:, H + h * dh:H + (h + 1) * dh].reshape(B, S, dh)
        vh = qkv[:, 2 * H + h * dh:2 * H + (h + 1) * dh].reshape(B, S, dh)
        s = jnp.einsum(
            "bqd,bkd->bqk", qh, kh, preferred_element_type=jnp.float32
        ) * scale + mask                              # (B, S, S)
        s = s - jnp.max(s, axis=-1, keepdims=True)
        p = jnp.exp(s)
        p = p * pl.reciprocal(jnp.sum(p, axis=-1, keepdims=True), approx=True)
        ctx = jnp.einsum(
            "bqk,bkd->bqd", p, vh, preferred_element_type=jnp.float32
        )                                             # (B, S, dh)
        ctx_heads.append(ctx.reshape(B * S, dh))
    ctx = jnp.concatenate(ctx_heads, axis=-1)         # (B*S, H)

    attn_out = (
        jnp.dot(ctx, wo_ref[0], preferred_element_type=jnp.float32) + bo_ref[0]
    )
    x = layer_norm(x + attn_out, ln1g_ref[0], ln1b_ref[0])

    # ---- feed-forward (GELU fused) ----
    ff = jnp.dot(x, w1_ref[0], preferred_element_type=jnp.float32) + b1_ref[0]
    # TODO(synk): HF BERT default is exact erf-GELU; tanh approximation used here.
    c = jnp.float32(0.7978845608028654)               # sqrt(2/pi)
    ff = 0.5 * ff * (1.0 + jnp.tanh(c * (ff + 0.044715 * ff * ff * ff)))
    ff = jnp.dot(ff, w2_ref[0], preferred_element_type=jnp.float32) + b2_ref[0]
    x = layer_norm(x + ff, ln2g_ref[0], ln2b_ref[0])

    x_ref[...] = x

    # ---- last step: pooler (tanh) + regression head, lane-dense output ----
    @pl.when(layer == n_layers - 1)
    def _():
        cls = jnp.concatenate(
            [x[b * S:b * S + 1, :] for b in range(B)], axis=0
        )                                             # (B, H) = [CLS] rows
        pooled = jnp.tanh(
            jnp.dot(cls, poolw_ref[...], preferred_element_type=jnp.float32)
            + poolb_ref[...]
        )
        rating = (
            jnp.dot(pooled, regw_ref[...], preferred_element_type=jnp.float32)
            + regb_ref[...]
        )                                             # (B, 1)
        o_ref[...] = jnp.broadcast_to(rating, o_ref.shape).astype(o_ref.dtype)


# --------------------------- model / parameters -----------------------------

CFG = dict(
    vocab_size=100,
    hidden=32,
    num_layers=2,
    num_heads=4,
    intermediate=64,
    max_pos=16,
    type_vocab=2,
    eps=1e-12,
)


def init_params(key, cfg):
    H, FF = cfg["hidden"], cfg["intermediate"]

    def normal(key, shape, std=0.02):
        return std * jax.random.normal(key, shape, dtype=jnp.float32)

    keys = iter(jax.random.split(key, 16 + 16 * cfg["num_layers"]))
    p = {
        "word_emb": normal(next(keys), (cfg["vocab_size"], H)),
        "pos_emb": normal(next(keys), (cfg["max_pos"], H)),
        "type_emb": normal(next(keys), (cfg["type_vocab"], H)),
        "emb_ln_g": jnp.ones((H,), jnp.float32),
        "emb_ln_b": jnp.zeros((H,), jnp.float32),
        "pool_w": normal(next(keys), (H, H)),
        "pool_b": jnp.zeros((H,), jnp.float32),
        "reg_w": normal(next(keys), (H, 1)),
        "reg_b": jnp.zeros((1,), jnp.float32),
        "layers": [],
    }
    for _ in range(cfg["num_layers"]):
        p["layers"].append({
            "wq": normal(next(keys), (H, H)), "bq": jnp.zeros((H,), jnp.float32),
            "wk": normal(next(keys), (H, H)), "bk": jnp.zeros((H,), jnp.float32),
            "wv": normal(next(keys), (H, H)), "bv": jnp.zeros((H,), jnp.float32),
            "wo": normal(next(keys), (H, H)), "bo": jnp.zeros((H,), jnp.float32),
            "ln1_g": jnp.ones((H,), jnp.float32), "ln1_b": jnp.zeros((H,), jnp.float32),
            "w1": normal(next(keys), (H, FF)), "b1": jnp.zeros((FF,), jnp.float32),
            "w2": normal(next(keys), (FF, H)), "b2": jnp.zeros((H,), jnp.float32),
            "ln2_g": jnp.ones((H,), jnp.float32), "ln2_b": jnp.zeros((H,), jnp.float32),
        })
    return p


def bert_for_regression(params, input_ids, attention_mask, cfg=CFG):
    B, S = input_ids.shape
    H, nH, FF, L = cfg["hidden"], cfg["num_heads"], cfg["intermediate"], cfg["num_layers"]
    dh = H // nH

    # ---- embeddings (gathers = glue, stays in JAX) ----
    pos_ids = jnp.arange(S, dtype=jnp.int32)
    emb = (jnp.take(params["word_emb"], input_ids, axis=0)
           + params["pos_emb"][pos_ids][None, :, :]
           + params["type_emb"][jnp.zeros((B, S), jnp.int32)])
    emb = emb.reshape(B * S, H)

    # additive attention-mask bias: 0 where attended, -1e9 where masked
    mask_bias = ((1.0 - attention_mask.astype(jnp.float32)) * -1e9).reshape(B, 1, S)

    # ---- stack per-layer weights on a leading layer axis; fuse QKV ----
    def stack(name):
        return jnp.stack([lp[name] for lp in params["layers"]], axis=0)

    wqkv = jnp.concatenate([stack("wq"), stack("wk"), stack("wv")], axis=-1)        # (L, H, 3H)
    bqkv = jnp.concatenate([stack("bq"), stack("bk"), stack("bv")], axis=-1)[:, None, :]  # (L,1,3H)
    wo, bo = stack("wo"), stack("bo")[:, None, :]
    ln1g, ln1b = stack("ln1_g")[:, None, :], stack("ln1_b")[:, None, :]
    w1, b1 = stack("w1"), stack("b1")[:, None, :]
    w2, b2 = stack("w2"), stack("b2")[:, None, :]
    ln2g, ln2b = stack("ln2_g")[:, None, :], stack("ln2_b")[:, None, :]

    per_layer_w = lambda k, n: pl.BlockSpec((1, k, n), lambda l: (l, 0, 0))
    per_layer_v = lambda n: pl.BlockSpec((1, 1, n), lambda l: (l, 0, 0))

    out = pl.pallas_call(
        functools.partial(_bert_kernel, B=B, S=S, H=H, nH=nH, dh=dh, eps=cfg["eps"]),
        out_shape=jax.ShapeDtypeStruct((B, 128), jnp.float32),
        grid=(L,),
        in_specs=[
            pl.BlockSpec((B * S, H), lambda l: (0, 0)),        # emb
            pl.BlockSpec((B, 1, S), lambda l: (0, 0, 0)),      # mask bias
            per_layer_w(H, 3 * H),                             # wqkv
            per_layer_v(3 * H),                                # bqkv
            per_layer_w(H, H),                                 # wo
            per_layer_v(H),                                    # bo
            per_layer_v(H), per_layer_v(H),                    # ln1 g/b
            per_layer_w(H, FF),                                # w1
            per_layer_v(FF),                                   # b1
            per_layer_w(FF, H),                                # w2
            per_layer_v(H),                                    # b2
            per_layer_v(H), per_layer_v(H),                    # ln2 g/b
            pl.BlockSpec((1, H), lambda l: (0, 0)),            # emb_ln_g
            pl.BlockSpec((1, H), lambda l: (0, 0)),            # emb_ln_b
            pl.BlockSpec((H, H), lambda l: (0, 0)),            # pool_w
            pl.BlockSpec((1, H), lambda l: (0, 0)),            # pool_b
            pl.BlockSpec((H, 1), lambda l: (0, 0)),            # reg_w
            pl.BlockSpec((1, 1), lambda l: (0, 0)),            # reg_b
        ],
        out_specs=pl.BlockSpec((B, 128), lambda l: (0, 0)),
        scratch_shapes=[pltpu.VMEM((B * S, H), jnp.float32)],  # carried hidden state
        compiler_params=pltpu.CompilerParams(dimension_semantics=("arbitrary",)),
    )(emb, mask_bias, wqkv, bqkv, wo, bo, ln1g, ln1b, w1, b1, w2, b2, ln2g, ln2b,
      params["emb_ln_g"].reshape(1, H), params["emb_ln_b"].reshape(1, H),
      params["pool_w"], params["pool_b"].reshape(1, H),
      params["reg_w"], params["reg_b"].reshape(1, 1))

    return out[:, :1]                                          # (B, 1) rating


# --------------------------------- main -------------------------------------

if __name__ == "__main__":
    key = jax.random.PRNGKey(0)
    k_param, k_ids = jax.random.split(key)

    B, S = 2, 8
    params = init_params(k_param, CFG)
    input_ids = jax.random.randint(k_ids, (B, S), 0, CFG["vocab_size"], dtype=jnp.int32)
    attention_mask = jnp.array(
        [[1, 1, 1, 1, 1, 1, 1, 1],
         [1, 1, 1, 1, 1, 1, 0, 0]], dtype=jnp.int32)

    rating = bert_for_regression(params, input_ids, attention_mask)
    rating = jax.block_until_ready(rating)
    assert rating.shape == (B, 1) and rating.dtype == jnp.float32
    print("KERNEL_OK")
</pallas_src>

<mosaic_0001>
module attributes {stable_mosaic.version = 11 : i64} {
  func.func @_bert_kernel(%arg0: i32, %arg1: memref<16x32xf32, #tpu.memory_space<vmem>>, %arg2: memref<2x1x8xf32, #tpu.memory_space<vmem>>, %arg3: memref<1x32x96xf32, #tpu.memory_space<vmem>>, %arg4: memref<1x1x96xf32, #tpu.memory_space<vmem>>, %arg5: memref<1x32x32xf32, #tpu.memory_space<vmem>>, %arg6: memref<1x1x32xf32, #tpu.memory_space<vmem>>, %arg7: memref<1x1x32xf32, #tpu.memory_space<vmem>>, %arg8: memref<1x1x32xf32, #tpu.memory_space<vmem>>, %arg9: memref<1x32x64xf32, #tpu.memory_space<vmem>>, %arg10: memref<1x1x64xf32, #tpu.memory_space<vmem>>, %arg11: memref<1x64x32xf32, #tpu.memory_space<vmem>>, %arg12: memref<1x1x32xf32, #tpu.memory_space<vmem>>, %arg13: memref<1x1x32xf32, #tpu.memory_space<vmem>>, %arg14: memref<1x1x32xf32, #tpu.memory_space<vmem>>, %arg15: memref<1x32xf32, #tpu.memory_space<vmem>>, %arg16: memref<1x32xf32, #tpu.memory_space<vmem>>, %arg17: memref<32x32xf32, #tpu.memory_space<vmem>>, %arg18: memref<1x32xf32, #tpu.memory_space<vmem>>, %arg19: memref<32x1xf32, #tpu.memory_space<vmem>>, %arg20: memref<1x1xf32, #tpu.memory_space<vmem>>, %arg21: memref<2x128xf32, #tpu.memory_space<vmem>>, %arg22: memref<16x32xf32, #tpu.memory_space<vmem>>) attributes {dimension_semantics = [#tpu.dimension_semantics<arbitrary>], iteration_bounds = array<i64: 2>, scalar_prefetch = 0 : i64, scratch_operands = 1 : i64, tpu.core_type = #tpu.core_type<tc>, window_params = [{pipeline_mode = #tpu.pipeline_mode<synchronous>, transform_indices = @transform_0, window_bounds = array<i64: 16, 32>}, {pipeline_mode = #tpu.pipeline_mode<synchronous>, transform_indices = @transform_1, window_bounds = array<i64: 2, 1, 8>}, {transform_indices = @transform_2, window_bounds = array<i64: 1, 32, 96>}, {transform_indices = @transform_3, window_bounds = array<i64: 1, 1, 96>}, {transform_indices = @transform_4, window_bounds = array<i64: 1, 32, 32>}, {transform_indices = @transform_5, window_bounds = array<i64: 1, 1, 32>}, {transform_indices = @transform_6, window_bounds = array<i64: 1, 1, 32>}, {transform_indices = @transform_7, window_bounds = array<i64: 1, 1, 32>}, {transform_indices = @transform_8, window_bounds = array<i64: 1, 32, 64>}, {transform_indices = @transform_9, window_bounds = array<i64: 1, 1, 64>}, {transform_indices = @transform_10, window_bounds = array<i64: 1, 64, 32>}, {transform_indices = @transform_11, window_bounds = array<i64: 1, 1, 32>}, {transform_indices = @transform_12, window_bounds = array<i64: 1, 1, 32>}, {transform_indices = @transform_13, window_bounds = array<i64: 1, 1, 32>}, {pipeline_mode = #tpu.pipeline_mode<synchronous>, transform_indices = @transform_14, window_bounds = array<i64: 1, 32>}, {pipeline_mode = #tpu.pipeline_mode<synchronous>, transform_indices = @transform_15, window_bounds = array<i64: 1, 32>}, {pipeline_mode = #tpu.pipeline_mode<synchronous>, transform_indices = @transform_16, window_bounds = array<i64: 32, 32>}, {pipeline_mode = #tpu.pipeline_mode<synchronous>, transform_indices = @transform_17, window_bounds = array<i64: 1, 32>}, {pipeline_mode = #tpu.pipeline_mode<synchronous>, transform_indices = @transform_18, window_bounds = array<i64: 32, 1>}, {pipeline_mode = #tpu.pipeline_mode<synchronous>, transform_indices = @transform_19, window_bounds = array<i64: 1, 1>}, {pipeline_mode = #tpu.pipeline_mode<synchronous>, transform_indices = @transform_20, window_bounds = array<i64: 2, 128>}]} {
    %c0_i32 = arith.constant 0 : i32
    %0 = arith.cmpi eq, %arg0, %c0_i32 : i32
    %1 = arith.extui %0 : i1 to i32
    %c0_i32_0 = arith.constant 0 : i32
    %2 = arith.cmpi ne, %1, %c0_i32_0 : i32
    scf.if %2 {
      %c0_81 = arith.constant 0 : index
      %c0_82 = arith.constant 0 : index
      %193 = vector.load %arg1[%c0_81, %c0_82] : memref<16x32xf32, #tpu.memory_space<vmem>>, vector<16x32xf32>
      %c0_83 = arith.constant 0 : index
      %c0_84 = arith.constant 0 : index
      %194 = vector.load %arg15[%c0_83, %c0_84] : memref<1x32xf32, #tpu.memory_space<vmem>>, vector<1x32xf32>
      %c0_85 = arith.constant 0 : index
      %c0_86 = arith.constant 0 : index
      %195 = vector.load %arg16[%c0_85, %c0_86] : memref<1x32xf32, #tpu.memory_space<vmem>>, vector<1x32xf32>
      %cst_87 = arith.constant dense<0.000000e+00> : vector<16xf32>
      %196 = vector.multi_reduction <add>, %193, %cst_87 [1] : vector<16x32xf32> to vector<16xf32>
      %197 = vector.shape_cast %196 : vector<16xf32> to vector<16x1xf32>
      %cst_88 = arith.constant 3.200000e+01 : f32
      %198 = vector.broadcast %cst_88 : f32 to vector<16x1xf32>
      %199 = arith.divf %197, %198 : vector<16x1xf32>
      %200 = vector.broadcast %199 : vector<16x1xf32> to vector<16x32xf32>
      %201 = arith.subf %193, %200 : vector<16x32xf32>
      %202 = arith.mulf %201, %201 : vector<16x32xf32>
      %cst_89 = arith.constant dense<0.000000e+00> : vector<16xf32>
      %203 = vector.multi_reduction <add>, %202, %cst_89 [1] : vector<16x32xf32> to vector<16xf32>
      %204 = vector.shape_cast %203 : vector<16xf32> to vector<16x1xf32>
      %cst_90 = arith.constant 3.200000e+01 : f32
      %205 = vector.broadcast %cst_90 : f32 to vector<16x1xf32>
      %206 = arith.divf %204, %205 : vector<16x1xf32>
      %cst_91 = arith.constant 9.99999996E-13 : f32
      %207 = vector.broadcast %cst_91 : f32 to vector<16x1xf32>
      %208 = arith.addf %206, %207 : vector<16x1xf32>
      %209 = math.rsqrt %208 : vector<16x1xf32>
      %210 = vector.broadcast %209 : vector<16x1xf32> to vector<16x32xf32>
      %211 = arith.mulf %201, %210 : vector<16x32xf32>
      %212 = vector.broadcast %194 : vector<1x32xf32> to vector<16x32xf32>
      %213 = arith.mulf %211, %212 : vector<16x32xf32>
      %214 = vector.broadcast %195 : vector<1x32xf32> to vector<16x32xf32>
      %215 = arith.addf %213, %214 : vector<16x32xf32>
      %c0_92 = arith.constant 0 : index
      %c0_93 = arith.constant 0 : index
      %216 = vector.load %arg22[%c0_92, %c0_93] : memref<16x32xf32, #tpu.memory_space<vmem>>, vector<16x32xf32>
      tpu.vector_store %arg22[%c0_92, %c0_93], %215 {strides = array<i32>} : memref<16x32xf32, #tpu.memory_space<vmem>>, vector<16x32xf32>,
    } else {
    }
    %c0 = arith.constant 0 : index
    %c0_1 = arith.constant 0 : index
    %3 = vector.load %arg22[%c0, %c0_1] : memref<16x32xf32, #tpu.memory_space<vmem>>, vector<16x32xf32>
    %c0_2 = arith.constant 0 : index
    %c0_3 = arith.constant 0 : index
    %c0_4 = arith.constant 0 : index
    %4 = vector.load %arg3[%c0_2, %c0_3, %c0_4] : memref<1x32x96xf32, #tpu.memory_space<vmem>>, vector<1x32x96xf32>
    %5 = vector.shape_cast %4 : vector<1x32x96xf32> to vector<32x96xf32>
    %cst = arith.constant dense<0.000000e+00> : vector<16x96xf32>
    %6 = tpu.matmul %3, %5, %cst {dimension_numbers = #tpu.dot_dimension_numbers<[1], [0], [0], [1], [0, 0, 1, 1], [], []>} : vector<16x32xf32>, vector<32x96xf32>, vector<16x96xf32> -> vector<16x96xf32>
    %c0_5 = arith.constant 0 : index
    %c0_6 = arith.constant 0 : index
    %c0_7 = arith.constant 0 : index
    %7 = vector.load %arg4[%c0_5, %c0_6, %c0_7] : memref<1x1x96xf32, #tpu.memory_space<vmem>>, vector<1x1x96xf32>
    %8 = vector.shape_cast %7 : vector<1x1x96xf32> to vector<1x96xf32>
    %9 = vector.broadcast %8 : vector<1x96xf32> to vector<16x96xf32>
    %10 = arith.addf %6, %9 : vector<16x96xf32>
    %c0_8 = arith.constant 0 : index
    %c0_9 = arith.constant 0 : index
    %c0_10 = arith.constant 0 : index
    %11 = vector.load %arg2[%c0_8, %c0_9, %c0_10] : memref<2x1x8xf32, #tpu.memory_space<vmem>>, vector<2x1x8xf32>
    %12 = vector.extract_strided_slice %10 {offsets = [0, 0], sizes = [16, 8], strides = [1, 1]} : vector<16x96xf32> to vector<16x8xf32>
    %13 = vector.shape_cast %12 : vector<16x8xf32> to vector<2x8x8xf32>
    %14 = vector.extract_strided_slice %10 {offsets = [0, 32], sizes = [16, 8], strides = [1, 1]} : vector<16x96xf32> to vector<16x8xf32>
    %15 = vector.shape_cast %14 : vector<16x8xf32> to vector<2x8x8xf32>
    %16 = vector.extract_strided_slice %10 {offsets = [0, 64], sizes = [16, 8], strides = [1, 1]} : vector<16x96xf32> to vector<16x8xf32>
    %17 = vector.shape_cast %16 : vector<16x8xf32> to vector<2x8x8xf32>
    "tpu.trace_start"() <{level = 10 : i32, message = "bqd,bkd->bqk"}> : () -> ()
    %cst_11 = arith.constant dense<0.000000e+00> : vector<2x8x8xf32>
    %18 = tpu.matmul %13, %15, %cst_11 {dimension_numbers = #tpu.dot_dimension_numbers<[2], [2], [1], [1], [0, 0, 0, 1, 1, 1], [0], [0]>} : vector<2x8x8xf32>, vector<2x8x8xf32>, vector<2x8x8xf32> -> vector<2x8x8xf32>
    "tpu.trace_stop"() : () -> ()
    %cst_12 = arith.constant 0.353553385 : f32
    %19 = vector.broadcast %cst_12 : f32 to vector<2x8x8xf32>
    %20 = arith.mulf %18, %19 : vector<2x8x8xf32>
    %21 = vector.broadcast %11 : vector<2x1x8xf32> to vector<2x8x8xf32>
    %22 = arith.addf %20, %21 : vector<2x8x8xf32>
    %cst_13 = arith.constant dense<0xFF800000> : vector<2x8xf32>
    %23 = vector.multi_reduction <maximumf>, %22, %cst_13 [2] : vector<2x8x8xf32> to vector<2x8xf32>
    %24 = vector.shape_cast %23 : vector<2x8xf32> to vector<2x8x1xf32>
    %25 = vector.broadcast %24 : vector<2x8x1xf32> to vector<2x8x8xf32>
    %26 = arith.subf %22, %25 : vector<2x8x8xf32>
    %27 = math.exp %26 : vector<2x8x8xf32>
    %cst_14 = arith.constant dense<0.000000e+00> : vector<2x8xf32>
    %28 = vector.multi_reduction <add>, %27, %cst_14 [2] : vector<2x8x8xf32> to vector<2x8xf32>
    %29 = vector.shape_cast %28 : vector<2x8xf32> to vector<2x8x1xf32>
    %30 = tpu.reciprocal %29 {approx = true} : vector<2x8x1xf32> -> vector<2x8x1xf32>
    %31 = vector.broadcast %30 : vector<2x8x1xf32> to vector<2x8x8xf32>
    %32 = arith.mulf %27, %31 : vector<2x8x8xf32>
    "tpu.trace_start"() <{level = 10 : i32, message = "bqk,bkd->bqd"}> : () -> ()
    %cst_15 = arith.constant dense<0.000000e+00> : vector<2x8x8xf32>
    %33 = tpu.matmul %32, %17, %cst_15 {dimension_numbers = #tpu.dot_dimension_numbers<[2], [1], [1], [2], [0, 0, 0, 1, 1, 2], [0], [0]>} : vector<2x8x8xf32>, vector<2x8x8xf32>, vector<2x8x8xf32> -> vector<2x8x8xf32>
    "tpu.trace_stop"() : () -> ()
    %34 = vector.shape_cast %33 : vector<2x8x8xf32> to vector<16x8xf32>
    %35 = vector.extract_strided_slice %10 {offsets = [0, 8], sizes = [16, 8], strides = [1, 1]} : vector<16x96xf32> to vector<16x8xf32>
    %36 = vector.shape_cast %35 : vector<16x8xf32> to vector<2x8x8xf32>
    %37 = vector.extract_strided_slice %10 {offsets = [0, 40], sizes = [16, 8], strides = [1, 1]} : vector<16x96xf32> to vector<16x8xf32>
    %38 = vector.shape_cast %37 : vector<16x8xf32> to vector<2x8x8xf32>
    %39 = vector.extract_strided_slice %10 {offsets = [0, 72], sizes = [16, 8], strides = [1, 1]} : vector<16x96xf32> to vector<16x8xf32>
    %40 = vector.shape_cast %39 : vector<16x8xf32> to vector<2x8x8xf32>
    "tpu.trace_start"() <{level = 10 : i32, message = "bqd,bkd->bqk"}> : () -> ()
    %cst_16 = arith.constant dense<0.000000e+00> : vector<2x8x8xf32>
    %41 = tpu.matmul %36, %38, %cst_16 {dimension_numbers = #tpu.dot_dimension_numbers<[2], [2], [1], [1], [0, 0, 0, 1, 1, 1], [0], [0]>} : vector<2x8x8xf32>, vector<2x8x8xf32>, vector<2x8x8xf32> -> vector<2x8x8xf32>
    "tpu.trace_stop"() : () -> ()
    %cst_17 = arith.constant 0.353553385 : f32
    %42 = vector.broadcast %cst_17 : f32 to vector<2x8x8xf32>
    %43 = arith.mulf %41, %42 : vector<2x8x8xf32>
    %44 = vector.broadcast %11 : vector<2x1x8xf32> to vector<2x8x8xf32>
    %45 = arith.addf %43, %44 : vector<2x8x8xf32>
    %cst_18 = arith.constant dense<0xFF800000> : vector<2x8xf32>
    %46 = vector.multi_reduction <maximumf>, %45, %cst_18 [2] : vector<2x8x8xf32> to vector<2x8xf32>
    %47 = vector.shape_cast %46 : vector<2x8xf32> to vector<2x8x1xf32>
    %48 = vector.broadcast %47 : vector<2x8x1xf32> to vector<2x8x8xf32>
    %49 = arith.subf %45, %48 : vector<2x8x8xf32>
    %50 = math.exp %49 : vector<2x8x8xf32>
    %cst_19 = arith.constant dense<0.000000e+00> : vector<2x8xf32>
    %51 = vector.multi_reduction <add>, %50, %cst_19 [2] : vector<2x8x8xf32> to vector<2x8xf32>
    %52 = vector.shape_cast %51 : vector<2x8xf32> to vector<2x8x1xf32>
    %53 = tpu.reciprocal %52 {approx = true} : vector<2x8x1xf32> -> vector<2x8x1xf32>
    %54 = vector.broadcast %53 : vector<2x8x1xf32> to vector<2x8x8xf32>
    %55 = arith.mulf %50, %54 : vector<2x8x8xf32>
    "tpu.trace_start"() <{level = 10 : i32, message = "bqk,bkd->bqd"}> : () -> ()
    %cst_20 = arith.constant dense<0.000000e+00> : vector<2x8x8xf32>
    %56 = tpu.matmul %55, %40, %cst_20 {dimension_numbers = #tpu.dot_dimension_numbers<[2], [1], [1], [2], [0, 0, 0, 1, 1, 2], [0], [0]>} : vector<2x8x8xf32>, vector<2x8x8xf32>, vector<2x8x8xf32> -> vector<2x8x8xf32>
    "tpu.trace_stop"() : () -> ()
    %57 = vector.shape_cast %56 : vector<2x8x8xf32> to vector<16x8xf32>
    %58 = vector.extract_strided_slice %10 {offsets = [0, 16], sizes = [16, 8], strides = [1, 1]} : vector<16x96xf32> to vector<16x8xf32>
    %59 = vector.shape_cast %58 : vector<16x8xf32> to vector<2x8x8xf32>
    %60 = vector.extract_strided_slice %10 {offsets = [0, 48], sizes = [16, 8], strides = [1, 1]} : vector<16x96xf32> to vector<16x8xf32>
    %61 = vector.shape_cast %60 : vector<16x8xf32> to vector<2x8x8xf32>
    %62 = vector.extract_strided_slice %10 {offsets = [0, 80], sizes = [16, 8], strides = [1, 1]} : vector<16x96xf32> to vector<16x8xf32>
    %63 = vector.shape_cast %62 : vector<16x8xf32> to vector<2x8x8xf32>
    "tpu.trace_start"() <{level = 10 : i32, message = "bqd,bkd->bqk"}> : () -> ()
    %cst_21 = arith.constant dense<0.000000e+00> : vector<2x8x8xf32>
    %64 = tpu.matmul %59, %61, %cst_21 {dimension_numbers = #tpu.dot_dimension_numbers<[2], [2], [1], [1], [0, 0, 0, 1, 1, 1], [0], [0]>} : vector<2x8x8xf32>, vector<2x8x8xf32>, vector<2x8x8xf32> -> vector<2x8x8xf32>
    "tpu.trace_stop"() : () -> ()
    %cst_22 = arith.constant 0.353553385 : f32
    %65 = vector.broadcast %cst_22 : f32 to vector<2x8x8xf32>
    %66 = arith.mulf %64, %65 : vector<2x8x8xf32>
    %67 = vector.broadcast %11 : vector<2x1x8xf32> to vector<2x8x8xf32>
    %68 = arith.addf %66, %67 : vector<2x8x8xf32>
    %cst_23 = arith.constant dense<0xFF800000> : vector<2x8xf32>
    %69 = vector.multi_reduction <maximumf>, %68, %cst_23 [2] : vector<2x8x8xf32> to vector<2x8xf32>
    %70 = vector.shape_cast %69 : vector<2x8xf32> to vector<2x8x1xf32>
    %71 = vector.broadcast %70 : vector<2x8x1xf32> to vector<2x8x8xf32>
    %72 = arith.subf %68, %71 : vector<2x8x8xf32>
    %73 = math.exp %72 : vector<2x8x8xf32>
    %cst_24 = arith.constant dense<0.000000e+00> : vector<2x8xf32>
    %74 = vector.multi_reduction <add>, %73, %cst_24 [2] : vector<2x8x8xf32> to vector<2x8xf32>
    %75 = vector.shape_cast %74 : vector<2x8xf32> to vector<2x8x1xf32>
    %76 = tpu.reciprocal %75 {approx = true} : vector<2x8x1xf32> -> vector<2x8x1xf32>
    %77 = vector.broadcast %76 : vector<2x8x1xf32> to vector<2x8x8xf32>
    %78 = arith.mulf %73, %77 : vector<2x8x8xf32>
    "tpu.trace_start"() <{level = 10 : i32, message = "bqk,bkd->bqd"}> : () -> ()
    %cst_25 = arith.constant dense<0.000000e+00> : vector<2x8x8xf32>
    %79 = tpu.matmul %78, %63, %cst_25 {dimension_numbers = #tpu.dot_dimension_numbers<[2], [1], [1], [2], [0, 0, 0, 1, 1, 2], [0], [0]>} : vector<2x8x8xf32>, vector<2x8x8xf32>, vector<2x8x8xf32> -> vector<2x8x8xf32>
    "tpu.trace_stop"() : () -> ()
    %80 = vector.shape_cast %79 : vector<2x8x8xf32> to vector<16x8xf32>
    %81 = vector.extract_strided_slice %10 {offsets = [0, 24], sizes = [16, 8], strides = [1, 1]} : vector<16x96xf32> to vector<16x8xf32>
    %82 = vector.shape_cast %81 : vector<16x8xf32> to vector<2x8x8xf32>
    %83 = vector.extract_strided_slice %10 {offsets = [0, 56], sizes = [16, 8], strides = [1, 1]} : vector<16x96xf32> to vector<16x8xf32>
    %84 = vector.shape_cast %83 : vector<16x8xf32> to vector<2x8x8xf32>
    %85 = vector.extract_strided_slice %10 {offsets = [0, 88], sizes = [16, 8], strides = [1, 1]} : vector<16x96xf32> to vector<16x8xf32>
    %86 = vector.shape_cast %85 : vector<16x8xf32> to vector<2x8x8xf32>
    "tpu.trace_start"() <{level = 10 : i32, message = "bqd,bkd->bqk"}> : () -> ()
    %cst_26 = arith.constant dense<0.000000e+00> : vector<2x8x8xf32>
    %87 = tpu.matmul %82, %84, %cst_26 {dimension_numbers = #tpu.dot_dimension_numbers<[2], [2], [1], [1], [0, 0, 0, 1, 1, 1], [0], [0]>} : vector<2x8x8xf32>, vector<2x8x8xf32>, vector<2x8x8xf32> -> vector<2x8x8xf32>
    "tpu.trace_stop"() : () -> ()
    %cst_27 = arith.constant 0.353553385 : f32
    %88 = vector.broadcast %cst_27 : f32 to vector<2x8x8xf32>
    %89 = arith.mulf %87, %88 : vector<2x8x8xf32>
    %90 = vector.broadcast %11 : vector<2x1x8xf32> to vector<2x8x8xf32>
    %91 = arith.addf %89, %90 : vector<2x8x8xf32>
    %cst_28 = arith.constant dense<0xFF800000> : vector<2x8xf32>
    %92 = vector.multi_reduction <maximumf>, %91, %cst_28 [2] : vector<2x8x8xf32> to vector<2x8xf32>
    %93 = vector.shape_cast %92 : vector<2x8xf32> to vector<2x8x1xf32>
    %94 = vector.broadcast %93 : vector<2x8x1xf32> to vector<2x8x8xf32>
    %95 = arith.subf %91, %94 : vector<2x8x8xf32>
    %96 = math.exp %95 : vector<2x8x8xf32>
    %cst_29 = arith.constant dense<0.000000e+00> : vector<2x8xf32>
    %97 = vector.multi_reduction <add>, %96, %cst_29 [2] : vector<2x8x8xf32> to vector<2x8xf32>
    %98 = vector.shape_cast %97 : vector<2x8xf32> to vector<2x8x1xf32>
    %99 = tpu.reciprocal %98 {approx = true} : vector<2x8x1xf32> -> vector<2x8x1xf32>
    %100 = vector.broadcast %99 : vector<2x8x1xf32> to vector<2x8x8xf32>
    %101 = arith.mulf %96, %100 : vector<2x8x8xf32>
    "tpu.trace_start"() <{level = 10 : i32, message = "bqk,bkd->bqd"}> : () -> ()
    %cst_30 = arith.constant dense<0.000000e+00> : vector<2x8x8xf32>
    %102 = tpu.matmul %101, %86, %cst_30 {dimension_numbers = #tpu.dot_dimension_numbers<[2], [1], [1], [2], [0, 0, 0, 1, 1, 2], [0], [0]>} : vector<2x8x8xf32>, vector<2x8x8xf32>, vector<2x8x8xf32> -> vector<2x8x8xf32>
    "tpu.trace_stop"() : () -> ()
    %103 = vector.shape_cast %102 : vector<2x8x8xf32> to vector<16x8xf32>
    %104 = tpu.concatenate %34, %57, %80, %103 in 1 : vector<16x8xf32>, vector<16x8xf32>, vector<16x8xf32>, vector<16x8xf32> -> vector<16x32xf32>
    %c0_31 = arith.constant 0 : index
    %c0_32 = arith.constant 0 : index
    %c0_33 = arith.constant 0 : index
    %105 = vector.load %arg5[%c0_31, %c0_32, %c0_33] : memref<1x32x32xf32, #tpu.memory_space<vmem>>, vector<1x32x32xf32>
    %106 = vector.shape_cast %105 : vector<1x32x32xf32> to vector<32x32xf32>
    %cst_34 = arith.constant dense<0.000000e+00> : vector<16x32xf32>
    %107 = tpu.matmul %104, %106, %cst_34 {dimension_numbers = #tpu.dot_dimension_numbers<[1], [0], [0], [1], [0, 0, 1, 1], [], []>} : vector<16x32xf32>, vector<32x32xf32>, vector<16x32xf32> -> vector<16x32xf32>
    %c0_35 = arith.constant 0 : index
    %c0_36 = arith.constant 0 : index
    %c0_37 = arith.constant 0 : index
    %108 = vector.load %arg6[%c0_35, %c0_36, %c0_37] : memref<1x1x32xf32, #tpu.memory_space<vmem>>, vector<1x1x32xf32>
    %109 = vector.shape_cast %108 : vector<1x1x32xf32> to vector<1x32xf32>
    %110 = vector.broadcast %109 : vector<1x32xf32> to vector<16x32xf32>
    %111 = arith.addf %107, %110 : vector<16x32xf32>
    %112 = arith.addf %3, %111 : vector<16x32xf32>
    %c0_38 = arith.constant 0 : index
    %c0_39 = arith.constant 0 : index
    %c0_40 = arith.constant 0 : index
    %113 = vector.load %arg7[%c0_38, %c0_39, %c0_40] : memref<1x1x32xf32, #tpu.memory_space<vmem>>, vector<1x1x32xf32>
    %114 = vector.shape_cast %113 : vector<1x1x32xf32> to vector<1x32xf32>
    %c0_41 = arith.constant 0 : index
    %c0_42 = arith.constant 0 : index
    %c0_43 = arith.constant 0 : index
    %115 = vector.load %arg8[%c0_41, %c0_42, %c0_43] : memref<1x1x32xf32, #tpu.memory_space<vmem>>, vector<1x1x32xf32>
    %116 = vector.shape_cast %115 : vector<1x1x32xf32> to vector<1x32xf32>
    %cst_44 = arith.constant dense<0.000000e+00> : vector<16xf32>
    %117 = vector.multi_reduction <add>, %112, %cst_44 [1] : vector<16x32xf32> to vector<16xf32>
    %118 = vector.shape_cast %117 : vector<16xf32> to vector<16x1xf32>
    %cst_45 = arith.constant 3.200000e+01 : f32
    %119 = vector.broadcast %cst_45 : f32 to vector<16x1xf32>
    %120 = arith.divf %118, %119 : vector<16x1xf32>
    %121 = vector.broadcast %120 : vector<16x1xf32> to vector<16x32xf32>
    %122 = arith.subf %112, %121 : vector<16x32xf32>
    %123 = arith.mulf %122, %122 : vector<16x32xf32>
    %cst_46 = arith.constant dense<0.000000e+00> : vector<16xf32>
    %124 = vector.multi_reduction <add>, %123, %cst_46 [1] : vector<16x32xf32> to vector<16xf32>
    %125 = vector.shape_cast %124 : vector<16xf32> to vector<16x1xf32>
    %cst_47 = arith.constant 3.200000e+01 : f32
    %126 = vector.broadcast %cst_47 : f32 to vector<16x1xf32>
    %127 = arith.divf %125, %126 : vector<16x1xf32>
    %cst_48 = arith.constant 9.99999996E-13 : f32
    %128 = vector.broadcast %cst_48 : f32 to vector<16x1xf32>
    %129 = arith.addf %127, %128 : vector<16x1xf32>
    %130 = math.rsqrt %129 : vector<16x1xf32>
    %131 = vector.broadcast %130 : vector<16x1xf32> to vector<16x32xf32>
    %132 = arith.mulf %122, %131 : vector<16x32xf32>
    %133 = vector.broadcast %114 : vector<1x32xf32> to vector<16x32xf32>
    %134 = arith.mulf %132, %133 : vector<16x32xf32>
    %135 = vector.broadcast %116 : vector<1x32xf32> to vector<16x32xf32>
    %136 = arith.addf %134, %135 : vector<16x32xf32>
    %c0_49 = arith.constant 0 : index
    %c0_50 = arith.constant 0 : index
    %c0_51 = arith.constant 0 : index
    %137 = vector.load %arg9[%c0_49, %c0_50, %c0_51] : memref<1x32x64xf32, #tpu.memory_space<vmem>>, vector<1x32x64xf32>
    %138 = vector.shape_cast %137 : vector<1x32x64xf32> to vector<32x64xf32>
    %cst_52 = arith.constant dense<0.000000e+00> : vector<16x64xf32>
    %139 = tpu.matmul %136, %138, %cst_52 {dimension_numbers = #tpu.dot_dimension_numbers<[1], [0], [0], [1], [0, 0, 1, 1], [], []>} : vector<16x32xf32>, vector<32x64xf32>, vector<16x64xf32> -> vector<16x64xf32>
    %c0_53 = arith.constant 0 : index
    %c0_54 = arith.constant 0 : index
    %c0_55 = arith.constant 0 : index
    %140 = vector.load %arg10[%c0_53, %c0_54, %c0_55] : memref<1x1x64xf32, #tpu.memory_space<vmem>>, vector<1x1x64xf32>
    %141 = vector.shape_cast %140 : vector<1x1x64xf32> to vector<1x64xf32>
    %142 = vector.broadcast %141 : vector<1x64xf32> to vector<16x64xf32>
    %143 = arith.addf %139, %142 : vector<16x64xf32>
    %cst_56 = arith.constant 5.000000e-01 : f32
    %144 = vector.broadcast %cst_56 : f32 to vector<16x64xf32>
    %145 = arith.mulf %144, %143 : vector<16x64xf32>
    %cst_57 = arith.constant 4.471500e-02 : f32
    %146 = vector.broadcast %cst_57 : f32 to vector<16x64xf32>
    %147 = arith.mulf %146, %143 : vector<16x64xf32>
    %148 = arith.mulf %147, %143 : vector<16x64xf32>
    %149 = arith.mulf %148, %143 : vector<16x64xf32>
    %150 = arith.addf %143, %149 : vector<16x64xf32>
    %cst_58 = arith.constant 0.797884583 : f32
    %151 = vector.broadcast %cst_58 : f32 to vector<16x64xf32>
    %152 = arith.mulf %151, %150 : vector<16x64xf32>
    %153 = math.tanh %152 : vector<16x64xf32>
    %cst_59 = arith.constant 1.000000e+00 : f32
    %154 = vector.broadcast %cst_59 : f32 to vector<16x64xf32>
    %155 = arith.addf %154, %153 : vector<16x64xf32>
    %156 = arith.mulf %145, %155 : vector<16x64xf32>
    %c0_60 = arith.constant 0 : index
    %c0_61 = arith.constant 0 : index
    %c0_62 = arith.constant 0 : index
    %157 = vector.load %arg11[%c0_60, %c0_61, %c0_62] : memref<1x64x32xf32, #tpu.memory_space<vmem>>, vector<1x64x32xf32>
    %158 = vector.shape_cast %157 : vector<1x64x32xf32> to vector<64x32xf32>
    %cst_63 = arith.constant dense<0.000000e+00> : vector<16x32xf32>
    %159 = tpu.matmul %156, %158, %cst_63 {dimension_numbers = #tpu.dot_dimension_numbers<[1], [0], [0], [1], [0, 0, 1, 1], [], []>} : vector<16x64xf32>, vector<64x32xf32>, vector<16x32xf32> -> vector<16x32xf32>
    %c0_64 = arith.constant 0 : index
    %c0_65 = arith.constant 0 : index
    %c0_66 = arith.constant 0 : index
    %160 = vector.load %arg12[%c0_64, %c0_65, %c0_66] : memref<1x1x32xf32, #tpu.memory_space<vmem>>, vector<1x1x32xf32>
    %161 = vector.shape_cast %160 : vector<1x1x32xf32> to vector<1x32xf32>
    %162 = vector.broadcast %161 : vector<1x32xf32> to vector<16x32xf32>
    %163 = arith.addf %159, %162 : vector<16x32xf32>
    %164 = arith.addf %136, %163 : vector<16x32xf32>
    %c0_67 = arith.constant 0 : index
    %c0_68 = arith.constant 0 : index
    %c0_69 = arith.constant 0 : index
    %165 = vector.load %arg13[%c0_67, %c0_68, %c0_69] : memref<1x1x32xf32, #tpu.memory_space<vmem>>, vector<1x1x32xf32>
    %166 = vector.shape_cast %165 : vector<1x1x32xf32> to vector<1x32xf32>
    %c0_70 = arith.constant 0 : index
    %c0_71 = arith.constant 0 : index
    %c0_72 = arith.constant 0 : index
    %167 = vector.load %arg14[%c0_70, %c0_71, %c0_72] : memref<1x1x32xf32, #tpu.memory_space<vmem>>, vector<1x1x32xf32>
    %168 = vector.shape_cast %167 : vector<1x1x32xf32> to vector<1x32xf32>
    %cst_73 = arith.constant dense<0.000000e+00> : vector<16xf32>
    %169 = vector.multi_reduction <add>, %164, %cst_73 [1] : vector<16x32xf32> to vector<16xf32>
    %170 = vector.shape_cast %169 : vector<16xf32> to vector<16x1xf32>
    %cst_74 = arith.constant 3.200000e+01 : f32
    %171 = vector.broadcast %cst_74 : f32 to vector<16x1xf32>
    %172 = arith.divf %170, %171 : vector<16x1xf32>
    %173 = vector.broadcast %172 : vector<16x1xf32> to vector<16x32xf32>
    %174 = arith.subf %164, %173 : vector<16x32xf32>
    %175 = arith.mulf %174, %174 : vector<16x32xf32>
    %cst_75 = arith.constant dense<0.000000e+00> : vector<16xf32>
    %176 = vector.multi_reduction <add>, %175, %cst_75 [1] : vector<16x32xf32> to vector<16xf32>
    %177 = vector.shape_cast %176 : vector<16xf32> to vector<16x1xf32>
    %cst_76 = arith.constant 3.200000e+01 : f32
    %178 = vector.broadcast %cst_76 : f32 to vector<16x1xf32>
    %179 = arith.divf %177, %178 : vector<16x1xf32>
    %cst_77 = arith.constant 9.99999996E-13 : f32
    %180 = vector.broadcast %cst_77 : f32 to vector<16x1xf32>
    %181 = arith.addf %179, %180 : vector<16x1xf32>
    %182 = math.rsqrt %181 : vector<16x1xf32>
    %183 = vector.broadcast %182 : vector<16x1xf32> to vector<16x32xf32>
    %184 = arith.mulf %174, %183 : vector<16x32xf32>
    %185 = vector.broadcast %166 : vector<1x32xf32> to vector<16x32xf32>
    %186 = arith.mulf %184, %185 : vector<16x32xf32>
    %187 = vector.broadcast %168 : vector<1x32xf32> to vector<16x32xf32>
    %188 = arith.addf %186, %187 : vector<16x32xf32>
    %c0_78 = arith.constant 0 : index
    %c0_79 = arith.constant 0 : index
    %189 = vector.load %arg22[%c0_78, %c0_79] : memref<16x32xf32, #tpu.memory_space<vmem>>, vector<16x32xf32>
    tpu.vector_store %arg22[%c0_78, %c0_79], %188 {strides = array<i32>} : memref<16x32xf32, #tpu.memory_space<vmem>>, vector<16x32xf32>,
    %c1_i32 = arith.constant 1 : i32
    %190 = arith.cmpi eq, %arg0, %c1_i32 : i32
    %191 = arith.extui %190 : i1 to i32
    %c0_i32_80 = arith.constant 0 : i32
    %192 = arith.cmpi ne, %191, %c0_i32_80 : i32
    scf.if %192 {
      %193 = vector.extract_strided_slice %188 {offsets = [0, 0], sizes = [1, 32], strides = [1, 1]} : vector<16x32xf32> to vector<1x32xf32>
      %194 = vector.extract_strided_slice %188 {offsets = [8, 0], sizes = [1, 32], strides = [1, 1]} : vector<16x32xf32> to vector<1x32xf32>
      %195 = tpu.concatenate %193, %194 in 0 : vector<1x32xf32>, vector<1x32xf32> -> vector<2x32xf32>
      %c0_81 = arith.constant 0 : index
      %c0_82 = arith.constant 0 : index
      %196 = vector.load %arg17[%c0_81, %c0_82] : memref<32x32xf32, #tpu.memory_space<vmem>>, vector<32x32xf32>
      %cst_83 = arith.constant dense<0.000000e+00> : vector<2x32xf32>
      %197 = tpu.matmul %195, %196, %cst_83 {dimension_numbers = #tpu.dot_dimension_numbers<[1], [0], [0], [1], [0, 0, 1, 1], [], []>} : vector<2x32xf32>, vector<32x32xf32>, vector<2x32xf32> -> vector<2x32xf32>
      %c0_84 = arith.constant 0 : index
      %c0_85 = arith.constant 0 : index
      %198 = vector.load %arg18[%c0_84, %c0_85] : memref<1x32xf32, #tpu.memory_space<vmem>>, vector<1x32xf32>
      %199 = vector.broadcast %198 : vector<1x32xf32> to vector<2x32xf32>
      %200 = arith.addf %197, %199 : vector<2x32xf32>
      %201 = math.tanh %200 : vector<2x32xf32>
      %c0_86 = arith.constant 0 : index
      %c0_87 = arith.constant 0 : index
      %202 = vector.load %arg19[%c0_86, %c0_87] : memref<32x1xf32, #tpu.memory_space<vmem>>, vector<32x1xf32>
      %cst_88 = arith.constant dense<0.000000e+00> : vector<2x1xf32>
      %203 = tpu.matmul %201, %202, %cst_88 {dimension_numbers = #tpu.dot_dimension_numbers<[1], [0], [0], [1], [0, 0, 1, 1], [], []>} : vector<2x32xf32>, vector<32x1xf32>, vector<2x1xf32> -> vector<2x1xf32>
      %c0_89 = arith.constant 0 : index
      %c0_90 = arith.constant 0 : index
      %204 = vector.load %arg20[%c0_89, %c0_90] : memref<1x1xf32, #tpu.memory_space<vmem>>, vector<1x1xf32>
      %205 = vector.broadcast %204 : vector<1x1xf32> to vector<2x1xf32>
      %206 = arith.addf %203, %205 : vector<2x1xf32>
      %207 = vector.shape_cast %206 : vector<2x1xf32> to vector<2x1xf32>
      %208 = vector.broadcast %207 : vector<2x1xf32> to vector<2x128xf32>
      %c0_91 = arith.constant 0 : index
      %c0_92 = arith.constant 0 : index
      %209 = vector.load %arg21[%c0_91, %c0_92] : memref<2x128xf32, #tpu.memory_space<vmem>>, vector<2x128xf32>
      tpu.vector_store %arg21[%c0_91, %c0_92], %208 {strides = array<i32>} : memref<2x128xf32, #tpu.memory_space<vmem>>, vector<2x128xf32>,
    } else {
    }
    return
  }
  func.func @transform_0(%arg0: i32) -> (i32, i32) {
    %c0_i32 = arith.constant 0 : i32
    %c0_i32_0 = arith.constant 0 : i32
    %c0_i32_1 = arith.constant 0 : i32
    return %c0_i32, %c0_i32_0 : i32, i32
  }
  func.func @transform_1(%arg0: i32) -> (i32, i32, i32) {
    %c0_i32 = arith.constant 0 : i32
    %c0_i32_0 = arith.constant 0 : i32
    %c0_i32_1 = arith.constant 0 : i32
    %c0_i32_2 = arith.constant 0 : i32
    return %c0_i32, %c0_i32_0, %c0_i32_1 : i32, i32, i32
  }
  func.func @transform_2(%arg0: i32) -> (i32, i32, i32) {
    %c0_i32 = arith.constant 0 : i32
    %c0_i32_0 = arith.constant 0 : i32
    %c0_i32_1 = arith.constant 0 : i32
    return %arg0, %c0_i32, %c0_i32_0 : i32, i32, i32
  }
  func.func @transform_3(%arg0: i32) -> (i32, i32, i32) {
    %c0_i32 = arith.constant 0 : i32
    %c0_i32_0 = arith.constant 0 : i32
    %c0_i32_1 = arith.constant 0 : i32
    return %arg0, %c0_i32, %c0_i32_0 : i32, i32, i32
  }
  func.func @transform_4(%arg0: i32) -> (i32, i32, i32) {
    %c0_i32 = arith.constant 0 : i32
    %c0_i32_0 = arith.constant 0 : i32
    %c0_i32_1 = arith.constant 0 : i32
    return %arg0, %c0_i32, %c0_i32_0 : i32, i32, i32
  }
  func.func @transform_5(%arg0: i32) -> (i32, i32, i32) {
    %c0_i32 = arith.constant 0 : i32
    %c0_i32_0 = arith.constant 0 : i32
    %c0_i32_1 = arith.constant 0 : i32
    return %arg0, %c0_i32, %c0_i32_0 : i32, i32, i32
  }
  func.func @transform_6(%arg0: i32) -> (i32, i32, i32) {
    %c0_i32 = arith.constant 0 : i32
    %c0_i32_0 = arith.constant 0 : i32
    %c0_i32_1 = arith.constant 0 : i32
    return %arg0, %c0_i32, %c0_i32_0 : i32, i32, i32
  }
  func.func @transform_7(%arg0: i32) -> (i32, i32, i32) {
    %c0_i32 = arith.constant 0 : i32
    %c0_i32_0 = arith.constant 0 : i32
    %c0_i32_1 = arith.constant 0 : i32
    return %arg0, %c0_i32, %c0_i32_0 : i32, i32, i32
  }
  func.func @transform_8(%arg0: i32) -> (i32, i32, i32) {
    %c0_i32 = arith.constant 0 : i32
    %c0_i32_0 = arith.constant 0 : i32
    %c0_i32_1 = arith.constant 0 : i32
    return %arg0, %c0_i32, %c0_i32_0 : i32, i32, i32
  }
  func.func @transform_9(%arg0: i32) -> (i32, i32, i32) {
    %c0_i32 = arith.constant 0 : i32
    %c0_i32_0 = arith.constant 0 : i32
    %c0_i32_1 = arith.constant 0 : i32
    return %arg0, %c0_i32, %c0_i32_0 : i32, i32, i32
  }
  func.func @transform_10(%arg0: i32) -> (i32, i32, i32) {
    %c0_i32 = arith.constant 0 : i32
    %c0_i32_0 = arith.constant 0 : i32
    %c0_i32_1 = arith.constant 0 : i32
    return %arg0, %c0_i32, %c0_i32_0 : i32, i32, i32
  }
  func.func @transform_11(%arg0: i32) -> (i32, i32, i32) {
    %c0_i32 = arith.constant 0 : i32
    %c0_i32_0 = arith.constant 0 : i32
    %c0_i32_1 = arith.constant 0 : i32
    return %arg0, %c0_i32, %c0_i32_0 : i32, i32, i32
  }
  func.func @transform_12(%arg0: i32) -> (i32, i32, i32) {
    %c0_i32 = arith.constant 0 : i32
    %c0_i32_0 = arith.constant 0 : i32
    %c0_i32_1 = arith.constant 0 : i32
    return %arg0, %c0_i32, %c0_i32_0 : i32, i32, i32
  }
  func.func @transform_13(%arg0: i32) -> (i32, i32, i32) {
    %c0_i32 = arith.constant 0 : i32
    %c0_i32_0 = arith.constant 0 : i32
    %c0_i32_1 = arith.constant 0 : i32
    return %arg0, %c0_i32, %c0_i32_0 : i32, i32, i32
  }
  func.func @transform_14(%arg0: i32) -> (i32, i32) {
    %c0_i32 = arith.constant 0 : i32
    %c0_i32_0 = arith.constant 0 : i32
    %c0_i32_1 = arith.constant 0 : i32
    return %c0_i32, %c0_i32_0 : i32, i32
  }
  func.func @transform_15(%arg0: i32) -> (i32, i32) {
    %c0_i32 = arith.constant 0 : i32
    %c0_i32_0 = arith.constant 0 : i32
    %c0_i32_1 = arith.constant 0 : i32
    return %c0_i32, %c0_i32_0 : i32, i32
  }
  func.func @transform_16(%arg0: i32) -> (i32, i32) {
    %c0_i32 = arith.constant 0 : i32
    %c0_i32_0 = arith.constant 0 : i32
    %c0_i32_1 = arith.constant 0 : i32
    return %c0_i32, %c0_i32_0 : i32, i32
  }
  func.func @transform_17(%arg0: i32) -> (i32, i32) {
    %c0_i32 = arith.constant 0 : i32
    %c0_i32_0 = arith.constant 0 : i32
    %c0_i32_1 = arith.constant 0 : i32
    return %c0_i32, %c0_i32_0 : i32, i32
  }
  func.func @transform_18(%arg0: i32) -> (i32, i32) {
    %c0_i32 = arith.constant 0 : i32
    %c0_i32_0 = arith.constant 0 : i32
    %c0_i32_1 = arith.constant 0 : i32
    return %c0_i32, %c0_i32_0 : i32, i32
  }
  func.func @transform_19(%arg0: i32) -> (i32, i32) {
    %c0_i32 = arith.constant 0 : i32
    %c0_i32_0 = arith.constant 0 : i32
    %c0_i32_1 = arith.constant 0 : i32
    return %c0_i32, %c0_i32_0 : i32, i32
  }
  func.func @transform_20(%arg0: i32) -> (i32, i32) {
    %c0_i32 = arith.constant 0 : i32
    %c0_i32_0 = arith.constant 0 : i32
    %c0_i32_1 = arith.constant 0 : i32
    return %c0_i32, %c0_i32_0 : i32, i32
  }
}

</mosaic_0001>

<llo_original>
// kernel: tpu_custom_call.1
$region0: #{tpu_custom_call.1}
  #allocation0 [shape = 'u32[]', space=smem, size = 0x4, offset = 0x4, fixed_abs, tag = 'smem constant byte address 0x4 - core index']
  #allocation1 [shape = 'u32[144,128]{1,0:T(1,128)}', space=vmem, size = 0x12000, scoped, tag = 'internal scratch']
  #allocation2 [shape = 'f32[16,32]{1,0:T(8,128)}', space=vmem, size = 0x2000, scoped, tag = 'scratch operand']
  #allocation3 [shape = 'f32[1,1]{1,0:T(1,128)S(1)}', space=vmem, size = 0x200, scoped, tag = 'scoped memory for tpu_custom_call.1']
  %s0 = inlined_call_operand.hbm [shape: f32[16,32], index: 0, kind: input, shape index: {}]
  %s1 = inlined_call_operand.hbm [shape: f32[2,1,8], index: 1, kind: input, shape index: {}]
  %s2 = inlined_call_operand.vmem [shape: f32[2,32,96], index: 2, kind: input, shape index: {}]
  %s3 = inlined_call_operand.hbm [shape: f32[2,1,96], index: 3, kind: input, shape index: {}]
  %s4 = inlined_call_operand.vmem [shape: f32[2,32,32], index: 4, kind: input, shape index: {}]
  %s5 = inlined_call_operand.hbm [shape: f32[2,1,32], index: 5, kind: input, shape index: {}]
  %s6 = inlined_call_operand.hbm [shape: f32[2,1,32], index: 6, kind: input, shape index: {}]
  %s7 = inlined_call_operand.hbm [shape: f32[2,1,32], index: 7, kind: input, shape index: {}]
  %s8 = inlined_call_operand.vmem [shape: f32[2,32,64], index: 8, kind: input, shape index: {}]
  %s9 = inlined_call_operand.hbm [shape: f32[2,1,64], index: 9, kind: input, shape index: {}]
  %s10 = inlined_call_operand.vmem [shape: f32[2,64,32], index: 10, kind: input, shape index: {}]
  %s11 = inlined_call_operand.hbm [shape: f32[2,1,32], index: 11, kind: input, shape index: {}]
  %s12 = inlined_call_operand.hbm [shape: f32[2,1,32], index: 12, kind: input, shape index: {}]
  %s13 = inlined_call_operand.hbm [shape: f32[2,1,32], index: 13, kind: input, shape index: {}]
  %s14 = inlined_call_operand.vmem [shape: f32[1,32], index: 14, kind: input, shape index: {}]
  %s15 = inlined_call_operand.hbm [shape: f32[1,32], index: 15, kind: input, shape index: {}]
  %s16 = inlined_call_operand.vmem [shape: f32[32,32], index: 16, kind: input, shape index: {}]
  %s17 = inlined_call_operand.vmem [shape: f32[1,32], index: 17, kind: input, shape index: {}]
  %s18 = inlined_call_operand.vmem [shape: f32[32,1], index: 18, kind: input, shape index: {}]
  %s19 = inlined_call_operand.<no memory space> [shape: f32[1,1], index: 19, kind: input, shape index: {}]
  %s20 = inlined_call_operand.hbm [shape: f32[2,128], index: 20, kind: output, shape index: {}]
  %s21 = sld [smem:[#allocation0]]
  $region165: #{tpu_custom_call.1} parent=0
    _
  %s23 = ssub.s32 1, %s21
  %s24 = scalar_select 0, %s23, %s21
  %v25 = vstv %s19
  %26 = vst [vmem:[#allocation3] sm:$0x1] %v25
  $region1: #{tpu_custom_call.1} parent=0
    #allocation4 [shape = 'u8[8192]{0}', space=vmem, size = 0x2000, scoped, tag = 'input window, operand 0, single buffered']
    #allocation5 [shape = 's32[2]{0}', space=sflag, size = 0x8, scoped, tag = 'scoped memory for tpu_custom_call.1']
    #allocation6 [shape = 's32[2]{0}', space=sflag, size = 0x8, scoped, tag = 'scoped memory for tpu_custom_call.1']
    #allocation7 [shape = 'u8[1024]{0}', space=vmem, size = 0x400, scoped, tag = 'input window, operand 1, single buffered']
    #allocation8 [shape = 's32[1]{0}', space=sflag, size = 0x4, scoped, tag = 'scoped memory for tpu_custom_call.1']
    #allocation9 [shape = 'u8[1024]{0}', space=vmem, size = 0x400, scoped, tag = 'input window, operand 3']
    #allocation10 [shape = 'u8[1024]{0}', space=vmem, size = 0x400, scoped, tag = 'input window, operand 5']
    #allocation11 [shape = 'u8[1024]{0}', space=vmem, size = 0x400, scoped, tag = 'input window, operand 6']
    #allocation12 [shape = 'u8[1024]{0}', space=vmem, size = 0x400, scoped, tag = 'input window, operand 7']
    #allocation13 [shape = 'u8[1024]{0}', space=vmem, size = 0x400, scoped, tag = 'input window, operand 9']
    #allocation14 [shape = 'u8[1024]{0}', space=vmem, size = 0x400, scoped, tag = 'input window, operand 11']
    #allocation15 [shape = 'u8[1024]{0}', space=vmem, size = 0x400, scoped, tag = 'input window, operand 12']
    #allocation16 [shape = 'u8[1024]{0}', space=vmem, size = 0x400, scoped, tag = 'input window, operand 13']
    #allocation17 [shape = 'u8[512]{0}', space=vmem, size = 0x400, scoped, tag = 'input window, operand 15, single buffered']
    #allocation18 [shape = 'u8[1024]{0}', space=vmem, size = 0x400, scoped, tag = 'output window, operand 0, single buffered']
    %27 = vsyncpa [#allocation5], 0
    %28 = vsyncpa [#allocation8], 0
    %29 = vsyncpa [#allocation6], 0
    loop: start=0, step=1, limit=4
    $region2: #{tpu_custom_call.1} parent=1 // loop_pre_header
      _
    $region3: #{tpu_custom_call.1} parent=1 // loop_header
      %s31 = sphi 0, %s35
      %p32 = scmp.ge.s32.totalorder %s31, 4
      %s39 = sphi 0, %s39
      %s41 = sphi 0, %s39
      %s42 = sphi 0, %s41
      %s56 = sphi 0, %s42
      %s60 = sphi 0, %s60
      %s62 = sphi 0, %s60
      %s63 = sphi 0, %s62
      %s77 = sphi 0, %s63
      %s83 = sphi 0, %s85
      %s86 = sphi 0, %s83
      %s87 = sphi 0, %s86
      %s103 = sphi 0, %s87
      %s109 = sphi 0, %s111
      %s112 = sphi 0, %s109
      %s113 = sphi 0, %s112
      %s129 = sphi 0, %s113
      %s135 = sphi 0, %s137
      %s138 = sphi 0, %s135
      %s139 = sphi 0, %s138
      %s155 = sphi 0, %s139
      %s161 = sphi 0, %s163
      %s164 = sphi 0, %s161
      %s165 = sphi 0, %s164
      %s181 = sphi 0, %s165
      %s187 = sphi 0, %s189
      %s190 = sphi 0, %s187
      %s191 = sphi 0, %s190
      %s207 = sphi 0, %s191
      %s213 = sphi 0, %s215
      %s216 = sphi 0, %s213
      %s217 = sphi 0, %s216
      %s233 = sphi 0, %s217
      %s239 = sphi 0, %s241
      %s242 = sphi 0, %s239
      %s243 = sphi 0, %s242
      %s259 = sphi 0, %s243
      %s265 = sphi 0, %s267
      %s268 = sphi 0, %s265
      %s269 = sphi 0, %s268
      %s285 = sphi 0, %s269
      %s291 = sphi 0, %s293
      %s294 = sphi 0, %s291
      %s295 = sphi 0, %s294
      %s311 = sphi 0, %s295
      %s317 = sphi 0, %s319
      %s320 = sphi 0, %s317
      %s321 = sphi 0, %s320
      %s337 = sphi 0, %s321
      %s343 = sphi 0, %s345
      %s346 = sphi 0, %s343
      %s347 = sphi 0, %s346
      %s363 = sphi 0, %s347
      %s369 = sphi 0, %s371
      %s372 = sphi 0, %s369
      %s373 = sphi 0, %s372
      %s389 = sphi 0, %s373
      %s393 = sphi 0, %s393
      %s395 = sphi 0, %s393
      %s396 = sphi 0, %s395
      %s410 = sphi 0, %s396
      %s414 = sphi 0, %s414
      %s416 = sphi 0, %s414
      %s417 = sphi 0, %s416
      %s431 = sphi 0, %s417
      %s435 = sphi 0, %s435
      %s437 = sphi 0, %s435
      %s438 = sphi 0, %s437
      %s452 = sphi 0, %s438
      %s456 = sphi 0, %s456
      %s458 = sphi 0, %s456
      %s459 = sphi 0, %s458
      %s473 = sphi 0, %s459
      %s477 = sphi 0, %s477
      %s479 = sphi 0, %s477
      %s480 = sphi 0, %s479
      %s494 = sphi 0, %s480
      %s498 = sphi 0, %s498
      %s500 = sphi 0, %s498
      %s501 = sphi 0, %s500
      %s515 = sphi 0, %s501
      %s519 = sphi 0, %s519
      %s521 = sphi 0, %s519
      %s522 = sphi 0, %s521
      %s536 = sphi 0, %s522
    $region4: #{tpu_custom_call.1} parent=1 // loop_header_branch
      %34 = sbr.rel (%p32) target = $region8
    $region5: #{tpu_custom_call.1} parent=1 // loop_body
      %s36 = ssub.s32 %s31, 1
      %s37 = ssub.s32 %s31, 2
      %s38 = sadd.s32 %s31, 1
      %s40 = sadd.s32 %s39, 1
      %p43 = scmp.eq.s32.totalorder %s31, 1
      %p44 = scmp.ne.s32.totalorder %s39, %s41
      %p45 = scmp.eq.s32.totalorder %s31, 0
      %p46 = por %p44, %p45
      %p47 = scmp.ne.s32.totalorder %s39, %s41
      %p48 = scmp.eq.s32.totalorder %s36, 1
      %p49 = por %p47, %p48
      %p50 = scmp.ne.s32.totalorder %s41, %s42
      %p51 = scmp.eq.s32.totalorder %s36, 0
      %p52 = por %p50, %p51
      %p53 = scmp.ne.s32.totalorder %s41, %s42
      %p54 = scmp.eq.s32.totalorder %s37, 1
      %p55 = por %p53, %p54
      %p57 = scmp.ne.s32.totalorder %s42, %s56
      %p58 = scmp.eq.s32.totalorder %s37, 0
      %p59 = por %p57, %p58
      %s61 = sadd.s32 %s60, 1
      %p64 = scmp.eq.s32.totalorder %s31, 1
      %p65 = scmp.ne.s32.totalorder %s60, %s62
      %p66 = scmp.eq.s32.totalorder %s31, 0
      %p67 = por %p65, %p66
      %p68 = scmp.ne.s32.totalorder %s60, %s62
      %p69 = scmp.eq.s32.totalorder %s36, 1
      %p70 = por %p68, %p69
      %p71 = scmp.ne.s32.totalorder %s62, %s63
      %p72 = scmp.eq.s32.totalorder %s36, 0
      %p73 = por %p71, %p72
      %p74 = scmp.ne.s32.totalorder %s62, %s63
      %p75 = scmp.eq.s32.totalorder %s37, 1
      %p76 = por %p74, %p75
      %p78 = scmp.ne.s32.totalorder %s63, %s77
      %p79 = scmp.eq.s32.totalorder %s37, 0
      %p80 = por %p78, %p79
      %s81 = ssub.s32 %s31, %s38
      %p82 = scmp.eq.s32.totalorder %s81, 0
      %s84 = sadd.s32 %s83, 1
      %s85 = scalar_select %p82, %s83, %s84
      %p88 = pneg %p82
      %p89 = scmp.eq.s32.totalorder %s31, 1
      %p90 = por %p88, %p89
      %p91 = scmp.ne.s32.totalorder %s83, %s86
      %p92 = scmp.eq.s32.totalorder %s31, 0
      %p93 = por %p91, %p92
      %p94 = scmp.ne.s32.totalorder %s83, %s86
      %p95 = scmp.eq.s32.totalorder %s36, 1
      %p96 = por %p94, %p95
      %p97 = scmp.ne.s32.totalorder %s86, %s87
      %p98 = scmp.eq.s32.totalorder %s36, 0
      %p99 = por %p97, %p98
      %p100 = scmp.ne.s32.totalorder %s86, %s87
      %p101 = scmp.eq.s32.totalorder %s37, 1
      %p102 = por %p100, %p101
      %p104 = scmp.ne.s32.totalorder %s87, %s103
      %p105 = scmp.eq.s32.totalorder %s37, 0
      %p106 = por %p104, %p105
      %s107 = ssub.s32 %s31, %s38
      %p108 = scmp.eq.s32.totalorder %s107, 0
      %s110 = sadd.s32 %s109, 1
      %s111 = scalar_select %p108, %s109, %s110
      %p114 = pneg %p108
      %p115 = scmp.eq.s32.totalorder %s31, 1
      %p116 = por %p114, %p115
      %p117 = scmp.ne.s32.totalorder %s109, %s112
      %p118 = scmp.eq.s32.totalorder %s31, 0
      %p119 = por %p117, %p118
      %p120 = scmp.ne.s32.totalorder %s109, %s112
      %p121 = scmp.eq.s32.totalorder %s36, 1
      %p122 = por %p120, %p121
      %p123 = scmp.ne.s32.totalorder %s112, %s113
      %p124 = scmp.eq.s32.totalorder %s36, 0
      %p125 = por %p123, %p124
      %p126 = scmp.ne.s32.totalorder %s112, %s113
      %p127 = scmp.eq.s32.totalorder %s37, 1
      %p128 = por %p126, %p127
      %p130 = scmp.ne.s32.totalorder %s113, %s129
      %p131 = scmp.eq.s32.totalorder %s37, 0
      %p132 = por %p130, %p131
      %s133 = ssub.s32 %s31, %s38
      %p134 = scmp.eq.s32.totalorder %s133, 0
      %s136 = sadd.s32 %s135, 1
      %s137 = scalar_select %p134, %s135, %s136
      %p140 = pneg %p134
      %p141 = scmp.eq.s32.totalorder %s31, 1
      %p142 = por %p140, %p141
      %p143 = scmp.ne.s32.totalorder %s135, %s138
      %p144 = scmp.eq.s32.totalorder %s31, 0
      %p145 = por %p143, %p144
      %p146 = scmp.ne.s32.totalorder %s135, %s138
      %p147 = scmp.eq.s32.totalorder %s36, 1
      %p148 = por %p146, %p147
      %p149 = scmp.ne.s32.totalorder %s138, %s139
      %p150 = scmp.eq.s32.totalorder %s36, 0
      %p151 = por %p149, %p150
      %p152 = scmp.ne.s32.totalorder %s138, %s139
      %p153 = scmp.eq.s32.totalorder %s37, 1
      %p154 = por %p152, %p153
      %p156 = scmp.ne.s32.totalorder %s139, %s155
      %p157 = scmp.eq.s32.totalorder %s37, 0
      %p158 = por %p156, %p157
      %s159 = ssub.s32 %s31, %s38
      %p160 = scmp.eq.s32.totalorder %s159, 0
      %s162 = sadd.s32 %s161, 1
      %s163 = scalar_select %p160, %s161, %s162
      %p166 = pneg %p160
      %p167 = scmp.eq.s32.totalorder %s31, 1
      %p168 = por %p166, %p167
      %p169 = scmp.ne.s32.totalorder %s161, %s164
      %p170 = scmp.eq.s32.totalorder %s31, 0
      %p171 = por %p169, %p170
      %p172 = scmp.ne.s32.totalorder %s161, %s164
      %p173 = scmp.eq.s32.totalorder %s36, 1
      %p174 = por %p172, %p173
      %p175 = scmp.ne.s32.totalorder %s164, %s165
      %p176 = scmp.eq.s32.totalorder %s36, 0
      %p177 = por %p175, %p176
      %p178 = scmp.ne.s32.totalorder %s164, %s165
      %p179 = scmp.eq.s32.totalorder %s37, 1
      %p180 = por %p178, %p179
      %p182 = scmp.ne.s32.totalorder %s165, %s181
      %p183 = scmp.eq.s32.totalorder %s37, 0
      %p184 = por %p182, %p183
      %s185 = ssub.s32 %s31, %s38
      %p186 = scmp.eq.s32.totalorder %s185, 0
      %s188 = sadd.s32 %s187, 1
      %s189 = scalar_select %p186, %s187, %s188
      %p192 = pneg %p186
      %p193 = scmp.eq.s32.totalorder %s31, 1
      %p194 = por %p192, %p193
      %p195 = scmp.ne.s32.totalorder %s187, %s190
      %p196 = scmp.eq.s32.totalorder %s31, 0
      %p197 = por %p195, %p196
      %p198 = scmp.ne.s32.totalorder %s187, %s190
      %p199 = scmp.eq.s32.totalorder %s36, 1
      %p200 = por %p198, %p199
      %p201 = scmp.ne.s32.totalorder %s190, %s191
      %p202 = scmp.eq.s32.totalorder %s36, 0
      %p203 = por %p201, %p202
      %p204 = scmp.ne.s32.totalorder %s190, %s191
      %p205 = scmp.eq.s32.totalorder %s37, 1
      %p206 = por %p204, %p205
      %p208 = scmp.ne.s32.totalorder %s191, %s207
      %p209 = scmp.eq.s32.totalorder %s37, 0
      %p210 = por %p208, %p209
      %s211 = ssub.s32 %s31, %s38
      %p212 = scmp.eq.s32.totalorder %s211, 0
      %s214 = sadd.s32 %s213, 1
      %s215 = scalar_select %p212, %s213, %s214
      %p218 = pneg %p212
      %p219 = scmp.eq.s32.totalorder %s31, 1
      %p220 = por %p218, %p219
      %p221 = scmp.ne.s32.totalorder %s213, %s216
      %p222 = scmp.eq.s32.totalorder %s31, 0
      %p223 = por %p221, %p222
      %p224 = scmp.ne.s32.totalorder %s213, %s216
      %p225 = scmp.eq.s32.totalorder %s36, 1
      %p226 = por %p224, %p225
      %p227 = scmp.ne.s32.totalorder %s216, %s217
      %p228 = scmp.eq.s32.totalorder %s36, 0
      %p229 = por %p227, %p228
      %p230 = scmp.ne.s32.totalorder %s216, %s217
      %p231 = scmp.eq.s32.totalorder %s37, 1
      %p232 = por %p230, %p231
      %p234 = scmp.ne.s32.totalorder %s217, %s233
      %p235 = scmp.eq.s32.totalorder %s37, 0
      %p236 = por %p234, %p235
      %s237 = ssub.s32 %s31, %s38
      %p238 = scmp.eq.s32.totalorder %s237, 0
      %s240 = sadd.s32 %s239, 1
      %s241 = scalar_select %p238, %s239, %s240
      %p244 = pneg %p238
      %p245 = scmp.eq.s32.totalorder %s31, 1
      %p246 = por %p244, %p245
      %p247 = scmp.ne.s32.totalorder %s239, %s242
      %p248 = scmp.eq.s32.totalorder %s31, 0
      %p249 = por %p247, %p248
      %p250 = scmp.ne.s32.totalorder %s239, %s242
      %p251 = scmp.eq.s32.totalorder %s36, 1
      %p252 = por %p250, %p251
      %p253 = scmp.ne.s32.totalorder %s242, %s243
      %p254 = scmp.eq.s32.totalorder %s36, 0
      %p255 = por %p253, %p254
      %p256 = scmp.ne.s32.totalorder %s242, %s243
      %p257 = scmp.eq.s32.totalorder %s37, 1
      %p258 = por %p256, %p257
      %p260 = scmp.ne.s32.totalorder %s243, %s259
      %p261 = scmp.eq.s32.totalorder %s37, 0
      %p262 = por %p260, %p261
      %s263 = ssub.s32 %s31, %s38
      %p264 = scmp.eq.s32.totalorder %s263, 0
      %s266 = sadd.s32 %s265, 1
      %s267 = scalar_select %p264, %s265, %s266
      %p270 = pneg %p264
      %p271 = scmp.eq.s32.totalorder %s31, 1
      %p272 = por %p270, %p271
      %p273 = scmp.ne.s32.totalorder %s265, %s268
      %p274 = scmp.eq.s32.totalorder %s31, 0
      %p275 = por %p273, %p274
      %p276 = scmp.ne.s32.totalorder %s265, %s268
      %p277 = scmp.eq.s32.totalorder %s36, 1
      %p278 = por %p276, %p277
      %p279 = scmp.ne.s32.totalorder %s268, %s269
      %p280 = scmp.eq.s32.totalorder %s36, 0
      %p281 = por %p279, %p280
      %p282 = scmp.ne.s32.totalorder %s268, %s269
      %p283 = scmp.eq.s32.totalorder %s37, 1
      %p284 = por %p282, %p283
      %p286 = scmp.ne.s32.totalorder %s269, %s285
      %p287 = scmp.eq.s32.totalorder %s37, 0
      %p288 = por %p286, %p287
      %s289 = ssub.s32 %s31, %s38
      %p290 = scmp.eq.s32.totalorder %s289, 0
      %s292 = sadd.s32 %s291, 1
      %s293 = scalar_select %p290, %s291, %s292
      %p296 = pneg %p290
      %p297 = scmp.eq.s32.totalorder %s31, 1
      %p298 = por %p296, %p297
      %p299 = scmp.ne.s32.totalorder %s291, %s294
      %p300 = scmp.eq.s32.totalorder %s31, 0
      %p301 = por %p299, %p300
      %p302 = scmp.ne.s32.totalorder %s291, %s294
      %p303 = scmp.eq.s32.totalorder %s36, 1
      %p304 = por %p302, %p303
      %p305 = scmp.ne.s32.totalorder %s294, %s295
      %p306 = scmp.eq.s32.totalorder %s36, 0
      %p307 = por %p305, %p306
      %p308 = scmp.ne.s32.totalorder %s294, %s295
      %p309 = scmp.eq.s32.totalorder %s37, 1
      %p310 = por %p308, %p309
      %p312 = scmp.ne.s32.totalorder %s295, %s311
      %p313 = scmp.eq.s32.totalorder %s37, 0
      %p314 = por %p312, %p313
      %s315 = ssub.s32 %s31, %s38
      %p316 = scmp.eq.s32.totalorder %s315, 0
      %s318 = sadd.s32 %s317, 1
      %s319 = scalar_select %p316, %s317, %s318
      %p322 = pneg %p316
      %p323 = scmp.eq.s32.totalorder %s31, 1
      %p324 = por %p322, %p323
      %p325 = scmp.ne.s32.totalorder %s317, %s320
      %p326 = scmp.eq.s32.totalorder %s31, 0
      %p327 = por %p325, %p326
      %p328 = scmp.ne.s32.totalorder %s317, %s320
      %p329 = scmp.eq.s32.totalorder %s36, 1
      %p330 = por %p328, %p329
      %p331 = scmp.ne.s32.totalorder %s320, %s321
      %p332 = scmp.eq.s32.totalorder %s36, 0
      %p333 = por %p331, %p332
      %p334 = scmp.ne.s32.totalorder %s320, %s321
      %p335 = scmp.eq.s32.totalorder %s37, 1
      %p336 = por %p334, %p335
      %p338 = scmp.ne.s32.totalorder %s321, %s337
      %p339 = scmp.eq.s32.totalorder %s37, 0
      %p340 = por %p338, %p339
      %s341 = ssub.s32 %s31, %s38
      %p342 = scmp.eq.s32.totalorder %s341, 0
      %s344 = sadd.s32 %s343, 1
      %s345 = scalar_select %p342, %s343, %s344
      %p348 = pneg %p342
      %p349 = scmp.eq.s32.totalorder %s31, 1
      %p350 = por %p348, %p349
      %p351 = scmp.ne.s32.totalorder %s343, %s346
      %p352 = scmp.eq.s32.totalorder %s31, 0
      %p353 = por %p351, %p352
      %p354 = scmp.ne.s32.totalorder %s343, %s346
      %p355 = scmp.eq.s32.totalorder %s36, 1
      %p356 = por %p354, %p355
      %p357 = scmp.ne.s32.totalorder %s346, %s347
      %p358 = scmp.eq.s32.totalorder %s36, 0
      %p359 = por %p357, %p358
      %p360 = scmp.ne.s32.totalorder %s346, %s347
      %p361 = scmp.eq.s32.totalorder %s37, 1
      %p362 = por %p360, %p361
      %p364 = scmp.ne.s32.totalorder %s347, %s363
      %p365 = scmp.eq.s32.totalorder %s37, 0
      %p366 = por %p364, %p365
      %s367 = ssub.s32 %s31, %s38
      %p368 = scmp.eq.s32.totalorder %s367, 0
      %s370 = sadd.s32 %s369, 1
      %s371 = scalar_select %p368, %s369, %s370
      %p374 = pneg %p368
      %p375 = scmp.eq.s32.totalorder %s31, 1
      %p376 = por %p374, %p375
      %p377 = scmp.ne.s32.totalorder %s369, %s372
      %p378 = scmp.eq.s32.totalorder %s31, 0
      %p379 = por %p377, %p378
      %p380 = scmp.ne.s32.totalorder %s369, %s372
      %p381 = scmp.eq.s32.totalorder %s36, 1
      %p382 = por %p380, %p381
      %p383 = scmp.ne.s32.totalorder %s372, %s373
      %p384 = scmp.eq.s32.totalorder %s36, 0
      %p385 = por %p383, %p384
      %p386 = scmp.ne.s32.totalorder %s372, %s373
      %p387 = scmp.eq.s32.totalorder %s37, 1
      %p388 = por %p386, %p387
      %p390 = scmp.ne.s32.totalorder %s373, %s389
      %p391 = scmp.eq.s32.totalorder %s37, 0
      %p392 = por %p390, %p391
      %s394 = sadd.s32 %s393, 1
      %p397 = scmp.eq.s32.totalorder %s31, 1
      %p398 = scmp.ne.s32.totalorder %s393, %s395
      %p399 = scmp.eq.s32.totalorder %s31, 0
      %p400 = por %p398, %p399
      %p401 = scmp.ne.s32.totalorder %s393, %s395
      %p402 = scmp.eq.s32.totalorder %s36, 1
      %p403 = por %p401, %p402
      %p404 = scmp.ne.s32.totalorder %s395, %s396
      %p405 = scmp.eq.s32.totalorder %s36, 0
      %p406 = por %p404, %p405
      %p407 = scmp.ne.s32.totalorder %s395, %s396
      %p408 = scmp.eq.s32.totalorder %s37, 1
      %p409 = por %p407, %p408
      %p411 = scmp.ne.s32.totalorder %s396, %s410
      %p412 = scmp.eq.s32.totalorder %s37, 0
      %p413 = por %p411, %p412
      %s415 = sadd.s32 %s414, 1
      %p418 = scmp.eq.s32.totalorder %s31, 1
      %p419 = scmp.ne.s32.totalorder %s414, %s416
      %p420 = scmp.eq.s32.totalorder %s31, 0
      %p421 = por %p419, %p420
      %p422 = scmp.ne.s32.totalorder %s414, %s416
      %p423 = scmp.eq.s32.totalorder %s36, 1
      %p424 = por %p422, %p423
      %p425 = scmp.ne.s32.totalorder %s416, %s417
      %p426 = scmp.eq.s32.totalorder %s36, 0
      %p427 = por %p425, %p426
      %p428 = scmp.ne.s32.totalorder %s416, %s417
      %p429 = scmp.eq.s32.totalorder %s37, 1
      %p430 = por %p428, %p429
      %p432 = scmp.ne.s32.totalorder %s417, %s431
      %p433 = scmp.eq.s32.totalorder %s37, 0
      %p434 = por %p432, %p433
      %s436 = sadd.s32 %s435, 1
      %p439 = scmp.eq.s32.totalorder %s31, 1
      %p440 = scmp.ne.s32.totalorder %s435, %s437
      %p441 = scmp.eq.s32.totalorder %s31, 0
      %p442 = por %p440, %p441
      %p443 = scmp.ne.s32.totalorder %s435, %s437
      %p444 = scmp.eq.s32.totalorder %s36, 1
      %p445 = por %p443, %p444
      %p446 = scmp.ne.s32.totalorder %s437, %s438
      %p447 = scmp.eq.s32.totalorder %s36, 0
      %p448 = por %p446, %p447
      %p449 = scmp.ne.s32.totalorder %s437, %s438
      %p450 = scmp.eq.s32.totalorder %s37, 1
      %p451 = por %p449, %p450
      %p453 = scmp.ne.s32.totalorder %s438, %s452
      %p454 = scmp.eq.s32.totalorder %s37, 0
      %p455 = por %p453, %p454
      %s457 = sadd.s32 %s456, 1
      %p460 = scmp.eq.s32.totalorder %s31, 1
      %p461 = scmp.ne.s32.totalorder %s456, %s458
      %p462 = scmp.eq.s32.totalorder %s31, 0
      %p463 = por %p461, %p462
      %p464 = scmp.ne.s32.totalorder %s456, %s458
      %p465 = scmp.eq.s32.totalorder %s36, 1
      %p466 = por %p464, %p465
      %p467 = scmp.ne.s32.totalorder %s458, %s459
      %p468 = scmp.eq.s32.totalorder %s36, 0
      %p469 = por %p467, %p468
      %p470 = scmp.ne.s32.totalorder %s458, %s459
      %p471 = scmp.eq.s32.totalorder %s37, 1
      %p472 = por %p470, %p471
      %p474 = scmp.ne.s32.totalorder %s459, %s473
      %p475 = scmp.eq.s32.totalorder %s37, 0
      %p476 = por %p474, %p475
      %s478 = sadd.s32 %s477, 1
      %p481 = scmp.eq.s32.totalorder %s31, 1
      %p482 = scmp.ne.s32.totalorder %s477, %s479
      %p483 = scmp.eq.s32.totalorder %s31, 0
      %p484 = por %p482, %p483
      %p485 = scmp.ne.s32.totalorder %s477, %s479
      %p486 = scmp.eq.s32.totalorder %s36, 1
      %p487 = por %p485, %p486
      %p488 = scmp.ne.s32.totalorder %s479, %s480
      %p489 = scmp.eq.s32.totalorder %s36, 0
      %p490 = por %p488, %p489
      %p491 = scmp.ne.s32.totalorder %s479, %s480
      %p492 = scmp.eq.s32.totalorder %s37, 1
      %p493 = por %p491, %p492
      %p495 = scmp.ne.s32.totalorder %s480, %s494
      %p496 = scmp.eq.s32.totalorder %s37, 0
      %p497 = por %p495, %p496
      %s499 = sadd.s32 %s498, 1
      %p502 = scmp.eq.s32.totalorder %s31, 1
      %p503 = scmp.ne.s32.totalorder %s498, %s500
      %p504 = scmp.eq.s32.totalorder %s31, 0
      %p505 = por %p503, %p504
      %p506 = scmp.ne.s32.totalorder %s498, %s500
      %p507 = scmp.eq.s32.totalorder %s36, 1
      %p508 = por %p506, %p507
      %p509 = scmp.ne.s32.totalorder %s500, %s501
      %p510 = scmp.eq.s32.totalorder %s36, 0
      %p511 = por %p509, %p510
      %p512 = scmp.ne.s32.totalorder %s500, %s501
      %p513 = scmp.eq.s32.totalorder %s37, 1
      %p514 = por %p512, %p513
      %p516 = scmp.ne.s32.totalorder %s501, %s515
      %p517 = scmp.eq.s32.totalorder %s37, 0
      %p518 = por %p516, %p517
      %s520 = sadd.s32 %s519, 1
      %p523 = scmp.eq.s32.totalorder %s31, 1
      %p524 = scmp.ne.s32.totalorder %s519, %s521
      %p525 = scmp.eq.s32.totalorder %s31, 0
      %p526 = por %p524, %p525
      %p527 = scmp.ne.s32.totalorder %s519, %s521
      %p528 = scmp.eq.s32.totalorder %s36, 1
      %p529 = por %p527, %p528
      %p530 = scmp.ne.s32.totalorder %s521, %s522
      %p531 = scmp.eq.s32.totalorder %s36, 0
      %p532 = por %p530, %p531
      %p533 = scmp.ne.s32.totalorder %s521, %s522
      %p534 = scmp.eq.s32.totalorder %s37, 1
      %p535 = por %p533, %p534
      %p537 = scmp.ne.s32.totalorder %s522, %s536
      %p538 = scmp.eq.s32.totalorder %s37, 0
      %p539 = por %p537, %p538
      %p540 = scmp.le.s32.totalorder 1, %s31
      %p541 = scmp.lt.s32.totalorder %s31, 3
      %p542 = pnand %p540, %p541
      %p543 = pneg %p542
      // Predicated region
      $region9: #{tpu_custom_call.1} parent=5 // pred_check
        _
      $region10: #{tpu_custom_call.1} parent=5 // pred_check_branch
        %545 = sbr.rel (%p542) target = $region12
      $region11: #{tpu_custom_call.1} parent=5 // pred_region
        %s546 = ssub.s32 %s31, 1
        // Predicated region
        $region13: #{tpu_custom_call.1} parent=11 // pred_check
          %p547 = pneg %p52
        $region14: #{tpu_custom_call.1} parent=11 // pred_check_branch
          %549 = sbr.rel (%p547) target = $region16
        $region15: #{tpu_custom_call.1} parent=11 // pred_region
          %s551 = ssub.s32 256, 256
          %552 = vsyncadd [#allocation5], %s551
          %s553 = sshll.u32 [#allocation4], 4
          %s554 = int_to_ptr.vmem [resolvable:$true] %s553
          %559 = dma.hbm_to_vmem [thread:$0]  %s0, 256, %s554, [#allocation5], 128, 128, 8
        $region16: #{tpu_custom_call.1} parent=11 // pred_fallthru
          _
        // Predicated region
        $region17: #{tpu_custom_call.1} parent=11 // pred_check
          %p560 = pneg %p73
        $region18: #{tpu_custom_call.1} parent=11 // pred_check_branch
          %562 = sbr.rel (%p560) target = $region20
        $region19: #{tpu_custom_call.1} parent=11 // pred_region
          %s564 = ssub.s32 32, 32
          %565 = vsyncadd [#allocation8], %s564
          %s566 = sshll.u32 [#allocation7], 4
          %s567 = int_to_ptr.vmem [resolvable:$true] %s566
          %572 = dma.hbm_to_vmem [thread:$0]  %s1, 32, %s567, [#allocation8], 16, 16, 1
        $region20: #{tpu_custom_call.1} parent=11 // pred_fallthru
          _
        // Predicated region
        $region21: #{tpu_custom_call.1} parent=11 // pred_check
          %p573 = pneg %p406
        $region22: #{tpu_custom_call.1} parent=11 // pred_check_branch
          %575 = sbr.rel (%p573) target = $region24
        $region23: #{tpu_custom_call.1} parent=11 // pred_region
          _
        $region24: #{tpu_custom_call.1} parent=11 // pred_fallthru
          _
        // Predicated region
        $region25: #{tpu_custom_call.1} parent=11 // pred_check
          %p576 = pneg %p427
        $region26: #{tpu_custom_call.1} parent=11 // pred_check_branch
          %578 = sbr.rel (%p576) target = $region28
        $region27: #{tpu_custom_call.1} parent=11 // pred_region
          %s580 = ssub.s32 16, 16
          %581 = vsyncadd [#allocation8], %s580
          %s583 = sshll.u32 [#allocation17], 4
          %s584 = int_to_ptr.vmem [resolvable:$true] %s583
          %586 = dma.hbm_to_vmem [thread:$0]  %s15, 16, %s584, [#allocation8]
        $region28: #{tpu_custom_call.1} parent=11 // pred_fallthru
          _
        // Predicated region
        $region29: #{tpu_custom_call.1} parent=11 // pred_check
          %p587 = pneg %p448
        $region30: #{tpu_custom_call.1} parent=11 // pred_check_branch
          %589 = sbr.rel (%p587) target = $region32
        $region31: #{tpu_custom_call.1} parent=11 // pred_region
          _
        $region32: #{tpu_custom_call.1} parent=11 // pred_fallthru
          _
        // Predicated region
        $region33: #{tpu_custom_call.1} parent=11 // pred_check
          %p590 = pneg %p469
        $region34: #{tpu_custom_call.1} parent=11 // pred_check_branch
          %592 = sbr.rel (%p590) target = $region36
        $region35: #{tpu_custom_call.1} parent=11 // pred_region
          _
        $region36: #{tpu_custom_call.1} parent=11 // pred_fallthru
          _
        // Predicated region
        $region37: #{tpu_custom_call.1} parent=11 // pred_check
          %p593 = pneg %p490
        $region38: #{tpu_custom_call.1} parent=11 // pred_check_branch
          %595 = sbr.rel (%p593) target = $region40
        $region39: #{tpu_custom_call.1} parent=11 // pred_region
          _
        $region40: #{tpu_custom_call.1} parent=11 // pred_fallthru
          _
        // Predicated region
        $region41: #{tpu_custom_call.1} parent=11 // pred_check
          %p596 = pneg %p511
        $region42: #{tpu_custom_call.1} parent=11 // pred_check_branch
          %598 = sbr.rel (%p596) target = $region44
        $region43: #{tpu_custom_call.1} parent=11 // pred_region
          _
        $region44: #{tpu_custom_call.1} parent=11 // pred_fallthru
          _
      $region12: #{tpu_custom_call.1} parent=5 // pred_fallthru
        _
      %p599 = scmp.lt.s32.totalorder %s31, 2
      // Predicated region
      $region45: #{tpu_custom_call.1} parent=5 // pred_check
        %p600 = pneg %p599
      $region46: #{tpu_custom_call.1} parent=5 // pred_check_branch
        %602 = sbr.rel (%p600) target = $region48
      $region47: #{tpu_custom_call.1} parent=5 // pred_region
        // Predicated region
        $region49: #{tpu_custom_call.1} parent=47 // pred_check
          %p603 = pneg %p93
        $region50: #{tpu_custom_call.1} parent=47 // pred_check_branch
          %605 = sbr.rel (%p603) target = $region52
        $region51: #{tpu_custom_call.1} parent=47 // pred_region
          %p606 = scmp.lt.s32.totalorder %s31, 1
          %s607 = scalar_select %p606, %s31, 1
          %s608 = smul.addr %s607, 4
          %s609 = smul.addr %s608, 8
          %s610 = scalar_lea.vmem %s2, %s609
        $region52: #{tpu_custom_call.1} parent=47 // pred_fallthru
          _
        // Predicated region
        $region53: #{tpu_custom_call.1} parent=47 // pred_check
          %p611 = pneg %p119
        $region54: #{tpu_custom_call.1} parent=47 // pred_check_branch
          %613 = sbr.rel (%p611) target = $region56
        $region55: #{tpu_custom_call.1} parent=47 // pred_region
          %s614 = sand.u32 %s31, 1
          %s615 = scalar_lea.sflag [#allocation5], %s614
          %s616 = sand.u32 %s109, 1
          %s617 = scalar_lea.vmem [#allocation9], %s616
          %s619 = ssub.s32 16, 16
          %620 = vsyncadd %s615, %s619
          %s621 = smul.addr %s31, 16
          %s622 = scalar_lea.hbm %s3, %s621
          %s624 = sshll.u32 %s617, 4
          %s625 = int_to_ptr.vmem [resolvable:$true] %s624
          %627 = dma.hbm_to_vmem [thread:$0]  %s622, 16, %s625, %s615
        $region56: #{tpu_custom_call.1} parent=47 // pred_fallthru
          _
        // Predicated region
        $region57: #{tpu_custom_call.1} parent=47 // pred_check
          %p628 = pneg %p145
        $region58: #{tpu_custom_call.1} parent=47 // pred_check_branch
          %630 = sbr.rel (%p628) target = $region60
        $region59: #{tpu_custom_call.1} parent=47 // pred_region
          %p631 = scmp.lt.s32.totalorder %s31, 1
          %s632 = scalar_select %p631, %s31, 1
          %s633 = smul.addr %s632, 4
          %s634 = smul.addr %s633, 8
          %s635 = scalar_lea.vmem %s4, %s634
        $region60: #{tpu_custom_call.1} parent=47 // pred_fallthru
          _
        // Predicated region
        $region61: #{tpu_custom_call.1} parent=47 // pred_check
          %p636 = pneg %p171
        $region62: #{tpu_custom_call.1} parent=47 // pred_check_branch
          %638 = sbr.rel (%p636) target = $region64
        $region63: #{tpu_custom_call.1} parent=47 // pred_region
          %s639 = sand.u32 %s31, 1
          %s640 = scalar_lea.sflag [#allocation5], %s639
          %s641 = sand.u32 %s161, 1
          %s642 = scalar_lea.vmem [#allocation10], %s641
          %s644 = ssub.s32 16, 16
          %645 = vsyncadd %s640, %s644
          %s646 = smul.addr %s31, 16
          %s647 = scalar_lea.hbm %s5, %s646
          %s649 = sshll.u32 %s642, 4
          %s650 = int_to_ptr.vmem [resolvable:$true] %s649
          %652 = dma.hbm_to_vmem [thread:$0]  %s647, 16, %s650, %s640
        $region64: #{tpu_custom_call.1} parent=47 // pred_fallthru
          _
        // Predicated region
        $region65: #{tpu_custom_call.1} parent=47 // pred_check
          %p653 = pneg %p197
        $region66: #{tpu_custom_call.1} parent=47 // pred_check_branch
          %655 = sbr.rel (%p653) target = $region68
        $region67: #{tpu_custom_call.1} parent=47 // pred_region
          %s656 = sand.u32 %s31, 1
          %s657 = scalar_lea.sflag [#allocation5], %s656
          %s658 = sand.u32 %s187, 1
          %s659 = scalar_lea.vmem [#allocation11], %s658
          %s661 = ssub.s32 16, 16
          %662 = vsyncadd %s657, %s661
          %s663 = smul.addr %s31, 16
          %s664 = scalar_lea.hbm %s6, %s663
          %s666 = sshll.u32 %s659, 4
          %s667 = int_to_ptr.vmem [resolvable:$true] %s666
          %669 = dma.hbm_to_vmem [thread:$0]  %s664, 16, %s667, %s657
        $region68: #{tpu_custom_call.1} parent=47 // pred_fallthru
          _
        // Predicated region
        $region69: #{tpu_custom_call.1} parent=47 // pred_check
          %p670 = pneg %p223
        $region70: #{tpu_custom_call.1} parent=47 // pred_check_branch
          %672 = sbr.rel (%p670) target = $region72
        $region71: #{tpu_custom_call.1} parent=47 // pred_region
          %s673 = sand.u32 %s31, 1
          %s674 = scalar_lea.sflag [#allocation5], %s673
          %s675 = sand.u32 %s213, 1
          %s676 = scalar_lea.vmem [#allocation12], %s675
          %s678 = ssub.s32 16, 16
          %679 = vsyncadd %s674, %s678
          %s680 = smul.addr %s31, 16
          %s681 = scalar_lea.hbm %s7, %s680
          %s683 = sshll.u32 %s676, 4
          %s684 = int_to_ptr.vmem [resolvable:$true] %s683
          %686 = dma.hbm_to_vmem [thread:$0]  %s681, 16, %s684, %s674
        $region72: #{tpu_custom_call.1} parent=47 // pred_fallthru
          _
        // Predicated region
        $region73: #{tpu_custom_call.1} parent=47 // pred_check
          %p687 = pneg %p249
        $region74: #{tpu_custom_call.1} parent=47 // pred_check_branch
          %689 = sbr.rel (%p687) target = $region76
        $region75: #{tpu_custom_call.1} parent=47 // pred_region
          %p690 = scmp.lt.s32.totalorder %s31, 1
          %s691 = scalar_select %p690, %s31, 1
          %s692 = smul.addr %s691, 4
          %s693 = smul.addr %s692, 8
          %s694 = scalar_lea.vmem %s8, %s693
        $region76: #{tpu_custom_call.1} parent=47 // pred_fallthru
          _
        // Predicated region
        $region77: #{tpu_custom_call.1} parent=47 // pred_check
          %p695 = pneg %p275
        $region78: #{tpu_custom_call.1} parent=47 // pred_check_branch
          %697 = sbr.rel (%p695) target = $region80
        $region79: #{tpu_custom_call.1} parent=47 // pred_region
          %s698 = sand.u32 %s31, 1
          %s699 = scalar_lea.sflag [#allocation5], %s698
          %s700 = sand.u32 %s265, 1
          %s701 = scalar_lea.vmem [#allocation13], %s700
          %s703 = ssub.s32 16, 16
          %704 = vsyncadd %s699, %s703
          %s705 = smul.addr %s31, 16
          %s706 = scalar_lea.hbm %s9, %s705
          %s708 = sshll.u32 %s701, 4
          %s709 = int_to_ptr.vmem [resolvable:$true] %s708
          %711 = dma.hbm_to_vmem [thread:$0]  %s706, 16, %s709, %s699
        $region80: #{tpu_custom_call.1} parent=47 // pred_fallthru
          _
        // Predicated region
        $region81: #{tpu_custom_call.1} parent=47 // pred_check
          %p712 = pneg %p301
        $region82: #{tpu_custom_call.1} parent=47 // pred_check_branch
          %714 = sbr.rel (%p712) target = $region84
        $region83: #{tpu_custom_call.1} parent=47 // pred_region
          %p715 = scmp.lt.s32.totalorder %s31, 1
          %s716 = scalar_select %p715, %s31, 1
          %s717 = smul.addr %s716, 8
          %s718 = smul.addr %s717, 8
          %s719 = scalar_lea.vmem %s10, %s718
        $region84: #{tpu_custom_call.1} parent=47 // pred_fallthru
          _
        // Predicated region
        $region85: #{tpu_custom_call.1} parent=47 // pred_check
          %p720 = pneg %p327
        $region86: #{tpu_custom_call.1} parent=47 // pred_check_branch
          %722 = sbr.rel (%p720) target = $region88
        $region87: #{tpu_custom_call.1} parent=47 // pred_region
          %s723 = sand.u32 %s31, 1
          %s724 = scalar_lea.sflag [#allocation5], %s723
          %s725 = sand.u32 %s317, 1
          %s726 = scalar_lea.vmem [#allocation14], %s725
          %s728 = ssub.s32 16, 16
          %729 = vsyncadd %s724, %s728
          %s730 = smul.addr %s31, 16
          %s731 = scalar_lea.hbm %s11, %s730
          %s733 = sshll.u32 %s726, 4
          %s734 = int_to_ptr.vmem [resolvable:$true] %s733
          %736 = dma.hbm_to_vmem [thread:$0]  %s731, 16, %s734, %s724
        $region88: #{tpu_custom_call.1} parent=47 // pred_fallthru
          _
        // Predicated region
        $region89: #{tpu_custom_call.1} parent=47 // pred_check
          %p737 = pneg %p353
        $region90: #{tpu_custom_call.1} parent=47 // pred_check_branch
          %739 = sbr.rel (%p737) target = $region92
        $region91: #{tpu_custom_call.1} parent=47 // pred_region
          %s740 = sand.u32 %s31, 1
          %s741 = scalar_lea.sflag [#allocation5], %s740
          %s742 = sand.u32 %s343, 1
          %s743 = scalar_lea.vmem [#allocation15], %s742
          %s745 = ssub.s32 16, 16
          %746 = vsyncadd %s741, %s745
          %s747 = smul.addr %s31, 16
          %s748 = scalar_lea.hbm %s12, %s747
          %s750 = sshll.u32 %s743, 4
          %s751 = int_to_ptr.vmem [resolvable:$true] %s750
          %753 = dma.hbm_to_vmem [thread:$0]  %s748, 16, %s751, %s741
        $region92: #{tpu_custom_call.1} parent=47 // pred_fallthru
          _
        // Predicated region
        $region93: #{tpu_custom_call.1} parent=47 // pred_check
          %p754 = pneg %p379
        $region94: #{tpu_custom_call.1} parent=47 // pred_check_branch
          %756 = sbr.rel (%p754) target = $region96
        $region95: #{tpu_custom_call.1} parent=47 // pred_region
          %s757 = sand.u32 %s31, 1
          %s758 = scalar_lea.sflag [#allocation5], %s757
          %s759 = sand.u32 %s369, 1
          %s760 = scalar_lea.vmem [#allocation16], %s759
          %s762 = ssub.s32 16, 16
          %763 = vsyncadd %s758, %s762
          %s764 = smul.addr %s31, 16
          %s765 = scalar_lea.hbm %s13, %s764
          %s767 = sshll.u32 %s760, 4
          %s768 = int_to_ptr.vmem [resolvable:$true] %s767
          %770 = dma.hbm_to_vmem [thread:$0]  %s765, 16, %s768, %s758
        $region96: #{tpu_custom_call.1} parent=47 // pred_fallthru
          _
      $region48: #{tpu_custom_call.1} parent=5 // pred_fallthru
        _
      %p771 = scmp.le.s32.totalorder 1, %s31
      %p772 = scmp.lt.s32.totalorder %s31, 3
      %p773 = pnand %p771, %p772
      %p774 = pneg %p773
      // Predicated region
      $region97: #{tpu_custom_call.1} parent=5 // pred_check
        _
      $region98: #{tpu_custom_call.1} parent=5 // pred_check_branch
        %776 = sbr.rel (%p773) target = $region100
      $region99: #{tpu_custom_call.1} parent=5 // pred_region
        %s777 = ssub.s32 %s31, 1
        // Predicated region
        $region101: #{tpu_custom_call.1} parent=99 // pred_check
          %p778 = pneg %p52
        $region102: #{tpu_custom_call.1} parent=99 // pred_check_branch
          %780 = sbr.rel (%p778) target = $region104
        $region103: #{tpu_custom_call.1} parent=99 // pred_region
          %781 = dma.done [#allocation5], 256
        $region104: #{tpu_custom_call.1} parent=99 // pred_fallthru
          _
        // Predicated region
        $region105: #{tpu_custom_call.1} parent=99 // pred_check
          %p782 = pneg %p73
        $region106: #{tpu_custom_call.1} parent=99 // pred_check_branch
          %784 = sbr.rel (%p782) target = $region108
        $region107: #{tpu_custom_call.1} parent=99 // pred_region
          %785 = dma.done [#allocation8], 32
        $region108: #{tpu_custom_call.1} parent=99 // pred_fallthru
          _
        %s786 = sand.u32 %s36, 1
        %s787 = scalar_lea.sflag [#allocation5], %s786
        %s788 = sand.u32 %s112, 1
        %s789 = scalar_lea.vmem [#allocation9], %s788
        // Predicated region
        $region109: #{tpu_custom_call.1} parent=99 // pred_check
          %p790 = pneg %p125
        $region110: #{tpu_custom_call.1} parent=99 // pred_check_branch
          %792 = sbr.rel (%p790) target = $region112
        $region111: #{tpu_custom_call.1} parent=99 // pred_region
          %793 = dma.done %s787, 16
        $region112: #{tpu_custom_call.1} parent=99 // pred_fallthru
          _
        %s794 = sand.u32 %s36, 1
        %s795 = scalar_lea.sflag [#allocation5], %s794
        %s796 = sand.u32 %s164, 1
        %s797 = scalar_lea.vmem [#allocation10], %s796
        // Predicated region
        $region113: #{tpu_custom_call.1} parent=99 // pred_check
          %p798 = pneg %p177
        $region114: #{tpu_custom_call.1} parent=99 // pred_check_branch
          %800 = sbr.rel (%p798) target = $region116
        $region115: #{tpu_custom_call.1} parent=99 // pred_region
          %801 = dma.done %s795, 16
        $region116: #{tpu_custom_call.1} parent=99 // pred_fallthru
          _
        %s802 = sand.u32 %s36, 1
        %s803 = scalar_lea.sflag [#allocation5], %s802
        %s804 = sand.u32 %s190, 1
        %s805 = scalar_lea.vmem [#allocation11], %s804
        // Predicated region
        $region117: #{tpu_custom_call.1} parent=99 // pred_check
          %p806 = pneg %p203
        $region118: #{tpu_custom_call.1} parent=99 // pred_check_branch
          %808 = sbr.rel (%p806) target = $region120
        $region119: #{tpu_custom_call.1} parent=99 // pred_region
          %809 = dma.done %s803, 16
        $region120: #{tpu_custom_call.1} parent=99 // pred_fallthru
          _
        %s810 = sand.u32 %s36, 1
        %s811 = scalar_lea.sflag [#allocation5], %s810
        %s812 = sand.u32 %s216, 1
        %s813 = scalar_lea.vmem [#allocation12], %s812
        // Predicated region
        $region121: #{tpu_custom_call.1} parent=99 // pred_check
          %p814 = pneg %p229
        $region122: #{tpu_custom_call.1} parent=99 // pred_check_branch
          %816 = sbr.rel (%p814) target = $region124
        $region123: #{tpu_custom_call.1} parent=99 // pred_region
          %817 = dma.done %s811, 16
        $region124: #{tpu_custom_call.1} parent=99 // pred_fallthru
          _
        %s818 = sand.u32 %s36, 1
        %s819 = scalar_lea.sflag [#allocation5], %s818
        %s820 = sand.u32 %s268, 1
        %s821 = scalar_lea.vmem [#allocation13], %s820
        // Predicated region
        $region125: #{tpu_custom_call.1} parent=99 // pred_check
          %p822 = pneg %p281
        $region126: #{tpu_custom_call.1} parent=99 // pred_check_branch
          %824 = sbr.rel (%p822) target = $region128
        $region127: #{tpu_custom_call.1} parent=99 // pred_region
          %825 = dma.done %s819, 16
        $region128: #{tpu_custom_call.1} parent=99 // pred_fallthru
          _
        %s826 = sand.u32 %s36, 1
        %s827 = scalar_lea.sflag [#allocation5], %s826
        %s828 = sand.u32 %s320, 1
        %s829 = scalar_lea.vmem [#allocation14], %s828
        // Predicated region
        $region129: #{tpu_custom_call.1} parent=99 // pred_check
          %p830 = pneg %p333
        $region130: #{tpu_custom_call.1} parent=99 // pred_check_branch
          %832 = sbr.rel (%p830) target = $region132
        $region131: #{tpu_custom_call.1} parent=99 // pred_region
          %833 = dma.done %s827, 16
        $region132: #{tpu_custom_call.1} parent=99 // pred_fallthru
          _
        %s834 = sand.u32 %s36, 1
        %s835 = scalar_lea.sflag [#allocation5], %s834
        %s836 = sand.u32 %s346, 1
        %s837 = scalar_lea.vmem [#allocation15], %s836
        // Predicated region
        $region133: #{tpu_custom_call.1} parent=99 // pred_check
          %p838 = pneg %p359
        $region134: #{tpu_custom_call.1} parent=99 // pred_check_branch
          %840 = sbr.rel (%p838) target = $region136
        $region135: #{tpu_custom_call.1} parent=99 // pred_region
          %841 = dma.done %s835, 16
        $region136: #{tpu_custom_call.1} parent=99 // pred_fallthru
          _
        %s842 = sand.u32 %s36, 1
        %s843 = scalar_lea.sflag [#allocation5], %s842
        %s844 = sand.u32 %s372, 1
        %s845 = scalar_lea.vmem [#allocation16], %s844
        // Predicated region
        $region137: #{tpu_custom_call.1} parent=99 // pred_check
          %p846 = pneg %p385
        $region138: #{tpu_custom_call.1} parent=99 // pred_check_branch
          %848 = sbr.rel (%p846) target = $region140
        $region139: #{tpu_custom_call.1} parent=99 // pred_region
          %849 = dma.done %s843, 16
        $region140: #{tpu_custom_call.1} parent=99 // pred_fallthru
          _
        // Predicated region
        $region141: #{tpu_custom_call.1} parent=99 // pred_check
          %p850 = pneg %p427
        $region142: #{tpu_custom_call.1} parent=99 // pred_check_branch
          %852 = sbr.rel (%p850) target = $region144
        $region143: #{tpu_custom_call.1} parent=99 // pred_region
          %853 = dma.done [#allocation8], 16
        $region144: #{tpu_custom_call.1} parent=99 // pred_fallthru
          _
        %p854 = pneg %p52
        %p855 = pneg %p49
        %p856 = pneg %p73
        %p857 = pneg %p70
        %p858 = scmp.lt.s32.totalorder %s36, 1
        %s859 = scalar_select %p858, %s36, 1
        %s860 = smul.addr %s859, 4
        %s861 = smul.addr %s860, 8
        %s862 = scalar_lea.vmem %s2, %s861
        %p863 = pneg %p99
        %p864 = pneg %p96
        %s865 = sand.u32 %s36, 1
        %s866 = scalar_lea.sflag [#allocation5], %s865
        %s867 = sand.u32 %s112, 1
        %s868 = scalar_lea.vmem [#allocation9], %s867
        %p869 = pneg %p125
        %p870 = pneg %p122
        %p871 = scmp.lt.s32.totalorder %s36, 1
        %s872 = scalar_select %p871, %s36, 1
        %s873 = smul.addr %s872, 4
        %s874 = smul.addr %s873, 8
        %s875 = scalar_lea.vmem %s4, %s874
        %p876 = pneg %p151
        %p877 = pneg %p148
        %s878 = sand.u32 %s36, 1
        %s879 = scalar_lea.sflag [#allocation5], %s878
        %s880 = sand.u32 %s164, 1
        %s881 = scalar_lea.vmem [#allocation10], %s880
        %p882 = pneg %p177
        %p883 = pneg %p174
        %s884 = sand.u32 %s36, 1
        %s885 = scalar_lea.sflag [#allocation5], %s884
        %s886 = sand.u32 %s190, 1
        %s887 = scalar_lea.vmem [#allocation11], %s886
        %p888 = pneg %p203
        %p889 = pneg %p200
        %s890 = sand.u32 %s36, 1
        %s891 = scalar_lea.sflag [#allocation5], %s890
        %s892 = sand.u32 %s216, 1
        %s893 = scalar_lea.vmem [#allocation12], %s892
        %p894 = pneg %p229
        %p895 = pneg %p226
        %p896 = scmp.lt.s32.totalorder %s36, 1
        %s897 = scalar_select %p896, %s36, 1
        %s898 = smul.addr %s897, 4
        %s899 = smul.addr %s898, 8
        %s900 = scalar_lea.vmem %s8, %s899
        %p901 = pneg %p255
        %p902 = pneg %p252
        %s903 = sand.u32 %s36, 1
        %s904 = scalar_lea.sflag [#allocation5], %s903
        %s905 = sand.u32 %s268, 1
        %s906 = scalar_lea.vmem [#allocation13], %s905
        %p907 = pneg %p281
        %p908 = pneg %p278
        %p909 = scmp.lt.s32.totalorder %s36, 1
        %s910 = scalar_select %p909, %s36, 1
        %s911 = smul.addr %s910, 8
        %s912 = smul.addr %s911, 8
        %s913 = scalar_lea.vmem %s10, %s912
        %p914 = pneg %p307
        %p915 = pneg %p304
        %s916 = sand.u32 %s36, 1
        %s917 = scalar_lea.sflag [#allocation5], %s916
        %s918 = sand.u32 %s320, 1
        %s919 = scalar_lea.vmem [#allocation14], %s918
        %p920 = pneg %p333
        %p921 = pneg %p330
        %s922 = sand.u32 %s36, 1
        %s923 = scalar_lea.sflag [#allocation5], %s922
        %s924 = sand.u32 %s346, 1
        %s925 = scalar_lea.vmem [#allocation15], %s924
        %p926 = pneg %p359
        %p927 = pneg %p356
        %s928 = sand.u32 %s36, 1
        %s929 = scalar_lea.sflag [#allocation5], %s928
        %s930 = sand.u32 %s372, 1
        %s931 = scalar_lea.vmem [#allocation16], %s930
        %p932 = pneg %p385
        %p933 = pneg %p382
        %p934 = pneg %p406
        %p935 = pneg %p403
        %p936 = pneg %p427
        %p937 = pneg %p424
        %p938 = pneg %p448
        %p939 = pneg %p445
        %p940 = pneg %p469
        %p941 = pneg %p466
        %p942 = pneg %p490
        %p943 = pneg %p487
        %p944 = pneg %p511
        %p945 = pneg %p508
        %p946 = pneg %p532
        %p947 = pneg %p529
        %p948 = scmp.lt.s32.totalorder %s36, 1
        %s949 = scalar_select %p948, %s36, 1
        %s950 = smul.addr %s949, 4
        %s951 = smul.addr %s950, 8
        %s952 = scalar_lea.vmem %s2, %s951
        %p953 = scmp.lt.s32.totalorder %s36, 1
        %s954 = scalar_select %p953, %s36, 1
        %s955 = smul.addr %s954, 4
        %s956 = smul.addr %s955, 8
        %s957 = scalar_lea.vmem %s4, %s956
        %p958 = scmp.lt.s32.totalorder %s36, 1
        %s959 = scalar_select %p958, %s36, 1
        %s960 = smul.addr %s959, 4
        %s961 = smul.addr %s960, 8
        %s962 = scalar_lea.vmem %s8, %s961
        %p963 = scmp.lt.s32.totalorder %s36, 1
        %s964 = scalar_select %p963, %s36, 1
        %s965 = smul.addr %s964, 8
        %s966 = smul.addr %s965, 8
        %s967 = scalar_lea.vmem %s10, %s966
        %p968 = scmp.eq.s32.totalorder %s36, 0
        // Predicated region
        $region145: #{tpu_custom_call.1} parent=99 // pred_check
          %p969 = pneg %p968
        $region146: #{tpu_custom_call.1} parent=99 // pred_check_branch
          %971 = sbr.rel (%p969) target = $region148
        $region147: #{tpu_custom_call.1} parent=99 // pred_region
          %v972 = vld [vmem:[#allocation4] sm:$0xff]
          %v973 = vld [vmem:[#allocation4 + $0x8] sm:$0xff]
          %v974 = vld [vmem:[%s14] sm:$0x1]
          %v975 = vld [vmem:[#allocation17] sm:$0x1]
          %vm976 = vcmask 261120
          %v977 = vsel %vm976, %v972, 0.0
          %978 = vadd.xlane.f32.xlu0 %v977
          %v979 = vpop.xlane.xlu0 %978
          %v980 = vsel %vm976, %v973, 0.0
          %981 = vadd.xlane.f32.xlu0 %v980
          %v982 = vpop.xlane.xlu0 %981
          %v983 = vrcp.pop 32.0
          %v984 = vmul.f32 %v979, %v983
          %v985 = vmul.f32 %v982, %v983
          %v986 = vsub.f32 %v972, %v984
          %v987 = vsub.f32 %v973, %v985
          %v988 = vmul.f32 %v986, %v986
          %v989 = vmul.f32 %v987, %v987
          %v990 = vsel %vm976, %v988, 0.0
          %991 = vadd.xlane.f32.xlu0 %v990
          %v992 = vpop.xlane.xlu0 %991
          %v993 = vsel %vm976, %v989, 0.0
          %994 = vadd.xlane.f32.xlu0 %v993
          %v995 = vpop.xlane.xlu0 %994
          %v996 = vmul.f32 %v992, %v983
          %v997 = vmul.f32 %v995, %v983
          %v998 = vadd.f32 %v996, 1e-12
          %v999 = vadd.f32 %v997, 1e-12
          %v1000 = vrsqrt.pop %v998
          %v1001 = vrsqrt.pop %v999
          %v1002 = vmul.f32 %v986, %v1000
          %v1003 = vmul.f32 %v987, %v1001
          %v1005 = vlaneseq
          %v1006 = vshrl.u32 %v1005, 7
          %v1007 = vsub.s32 0, %v1006
          %v1008 = vrot.slane %v974, %v1007
          %v1010 = vmul.f32 %v1002, %v1008
          %v1011 = vmul.f32 %v1003, %v1008
          %v1013 = vlaneseq
          %v1014 = vshrl.u32 %v1013, 7
          %v1015 = vsub.s32 0, %v1014
          %v1016 = vrot.slane %v975, %v1015
          %v1018 = vadd.f32 %v1010, %v1016
          %v1019 = vadd.f32 %v1011, %v1016
          %1020 = vst.msk [vmem:[#allocation2] sm:$0xff] %vm976, %v1018
          %1021 = vst.msk [vmem:[#allocation2 + $0x8] sm:$0xff] %vm976, %v1019
        $region148: #{tpu_custom_call.1} parent=99 // pred_fallthru
          _
        %v1022 = vld [vmem:[#allocation2] sm:$0xff]
        %v1023 = vld [vmem:[#allocation2 + $0x8] sm:$0xff]
        %v1024 = vld [vmem:[%s952] sm:$0xff]
        %v1025 = vld [vmem:[%s952 + $0x8] sm:$0xff]
        %v1026 = vld [vmem:[%s952 + $0x10] sm:$0xff]
        %v1027 = vld [vmem:[%s952 + $0x18] sm:$0xff]
        %v1028 = vld [vmem:[%s789] sm:$0x1]
        %v1030 = vlaneseq
        %v1031 = vshrl.u32 %v1030, 7
        %v1032 = vsub.s32 0, %v1031
        %v1033 = vrot.slane %v1028, %v1032
        %vm1035 = vcmask 261120
        %v1037 = vsel %vm1035, %v1022, 0
        %v1040 = vsel %vm1035, %v1023, 0
        %1042 = vmatprep.subr.mxu0 0.0
        %1043 = vmatpush1.msra.mxu0 %v1024
        %1044 = vmatprep.subr.mxu0 0.0
        %1045 = vmatpush1.msra.mxu0 %v1025
        %1046 = vmatprep.subr.mxu0 0.0
        %1047 = vmatpush1.msra.mxu0 %v1026
        %1048 = vmatprep.subr.mxu0 0.0
        %1049 = vmatpush1.msra.mxu0 %v1027
        %1050 = vmatprep.subr.mxu0 0.0
        %1051 = vmatpush1.msra.mxu0 0.0
        %1052 = vmatprep.subr.mxu0 0.0
        %1053 = vmatpush1.msra.mxu0 0.0
        %1054 = vmatprep.subr.mxu0 0.0
        %1055 = vmatpush1.msra.mxu0 0.0
        %1056 = vmatprep.subr.mxu0 0.0
        %1057 = vmatpush1.msra.mxu0 0.0
        %1058 = vmatprep.subr.mxu0 0.0
        %1059 = vmatpush1.msra.mxu0 0.0
        %1060 = vmatprep.subr.mxu0 0.0
        %1061 = vmatpush1.msra.mxu0 0.0
        %1062 = vmatprep.subr.mxu0 0.0
        %1063 = vmatpush1.msra.mxu0 0.0
        %1064 = vmatprep.subr.mxu0 0.0
        %1065 = vmatpush1.msra.mxu0 0.0
        %1066 = vmatprep.subr.mxu0 0.0
        %1067 = vmatpush1.msra.mxu0 0.0
        %1068 = vmatprep.subr.mxu0 0.0
        %1069 = vmatpush1.msra.mxu0 0.0
        %1070 = vmatprep.subr.mxu0 0.0
        %1071 = vmatpush1.msra.mxu0 0.0
        %1072 = vmatprep.subr.mxu0 0.0
        %1073 = vmatpush1.msra.mxu0 0.0
        %1074 = vmatprep.subr.mxu0 0.0
        %1075 = vmatpush1.msra.mxu0 0.0
        %1076 = vmatprep.subr.mxu0 0.0
        %1077 = vmatpush1.msra.mxu0 0.0
        %1078 = vmatprep.subr.mxu0 0.0
        %1079 = vmatpush1.msra.mxu0 0.0
        %1080 = vmatprep.subr.mxu0 0.0
        %1081 = vmatpush1.msra.mxu0 0.0
        %1082 = vmatprep.subr.mxu0 0.0
        %1083 = vmatpush1.msra.mxu0 0.0
        %1084 = vmatprep.subr.mxu0 0.0
        %1085 = vmatpush1.msra.mxu0 0.0
        %1086 = vmatprep.subr.mxu0 0.0
        %1087 = vmatpush1.msra.mxu0 0.0
        %1088 = vmatprep.subr.mxu0 0.0
        %1089 = vmatpush1.msra.mxu0 0.0
        %1090 = vmatprep.subr.mxu0 0.0
        %1091 = vmatpush1.msra.mxu0 0.0
        %1092 = vmatprep.subr.mxu0 0.0
        %1093 = vmatpush1.msra.mxu0 0.0
        %1094 = vmatprep.subr.mxu0 0.0
        %1095 = vmatpush1.msra.mxu0 0.0
        %1096 = vmatprep.subr.mxu0 0.0
        %1097 = vmatpush1.msra.mxu0 0.0
        %1098 = vmatprep.subr.mxu0 0.0
        %1099 = vmatpush1.msra.mxu0 0.0
        %1100 = vmatprep.subr.mxu0 0.0
        %1101 = vmatpush1.msra.mxu0 0.0
        %1102 = vmatprep.subr.mxu0 0.0
        %1103 = vmatpush1.msra.mxu0 0.0
        %1104 = vmatprep.subr.mxu0 0.0
        %1105 = vmatpush1.msra.mxu0 0.0
        %1106 = vmatprep.mubr.f32.mxu0 0.0
        %1107 = vmatmul.mubr.f32.gmra.mrb[0].mxu0 %v1037
        %v1108 = vpop.f32.mrb[0].mxu0
        %v1109 = vadd.f32 %v1033, %v1108
        %v1110 = vpop.f32.mrb[0].mxu0
        %1111 = vmatprep.mubr.f32.mxu0 0.0
        %1112 = vmatmul.mubr.f32.gmra.mrb[0].mxu0 %v1040
        %v1113 = vpop.f32.mrb[0].mxu0
        %v1114 = vadd.f32 %v1033, %v1113
        %v1115 = vpop.f32.mrb[0].mxu0
        %1116 = vdwg.mxu0
        %v1117 = vld [vmem:[#allocation7] sm:$0x1]
        %v1118 = vld [vmem:[#allocation7 + $0x1] sm:$0x1]
        %1120 = vrot.lane.b32.xlu0 %v1109, 96
        %v1121 = vpop.permute.xlu0 %1120
        %vm1122 = vcmask 64512
        %v1123 = vsel %vm1122, %v1109, 0
        %v1125 = vsel %vm1122, %v1121, 0
        %1127 = vmatprep.subr.mxu0 0.0
        %1128 = vmatpush1.xpose.msra.mxu0 %v1125
        %1129 = vmatprep.subr.mxu0 0.0
        %1130 = vmatpush1.xpose.msra.mxu0 0.0
        %1131 = vmatprep.subr.mxu0 0.0
        %1132 = vmatpush1.xpose.msra.mxu0 0.0
        %1133 = vmatprep.subr.mxu0 0.0
        %1134 = vmatpush1.xpose.msra.mxu0 0.0
        %1135 = vmatprep.subr.mxu0 0.0
        %1136 = vmatpush1.xpose.msra.mxu0 0.0
        %1137 = vmatprep.subr.mxu0 0.0
        %1138 = vmatpush1.xpose.msra.mxu0 0.0
        %1139 = vmatprep.subr.mxu0 0.0
        %1140 = vmatpush1.xpose.msra.mxu0 0.0
        %1141 = vmatprep.subr.mxu0 0.0
        %1142 = vmatpush1.xpose.msra.mxu0 0.0
        %1143 = vmatprep.subr.mxu0 0.0
        %1144 = vmatpush1.xpose.msra.mxu0 0.0
        %1145 = vmatprep.subr.mxu0 0.0
        %1146 = vmatpush1.xpose.msra.mxu0 0.0
        %1147 = vmatprep.subr.mxu0 0.0
        %1148 = vmatpush1.xpose.msra.mxu0 0.0
        %1149 = vmatprep.subr.mxu0 0.0
        %1150 = vmatpush1.xpose.msra.mxu0 0.0
        %1151 = vmatprep.subr.mxu0 0.0
        %1152 = vmatpush1.xpose.msra.mxu0 0.0
        %1153 = vmatprep.subr.mxu0 0.0
        %1154 = vmatpush1.xpose.msra.mxu0 0.0
        %1155 = vmatprep.subr.mxu0 0.0
        %1156 = vmatpush1.xpose.msra.mxu0 0.0
        %1157 = vmatprep.subr.mxu0 0.0
        %1158 = vmatpush1.xpose.msra.mxu0 0.0
        %1159 = vmatprep.subr.mxu0 0.0
        %1160 = vmatpush1.xpose.msra.mxu0 0.0
        %1161 = vmatprep.subr.mxu0 0.0
        %1162 = vmatpush1.xpose.msra.mxu0 0.0
        %1163 = vmatprep.subr.mxu0 0.0
        %1164 = vmatpush1.xpose.msra.mxu0 0.0
        %1165 = vmatprep.subr.mxu0 0.0
        %1166 = vmatpush1.xpose.msra.mxu0 0.0
        %1167 = vmatprep.subr.mxu0 0.0
        %1168 = vmatpush1.xpose.msra.mxu0 0.0
        %1169 = vmatprep.subr.mxu0 0.0
        %1170 = vmatpush1.xpose.msra.mxu0 0.0
        %1171 = vmatprep.subr.mxu0 0.0
        %1172 = vmatpush1.xpose.msra.mxu0 0.0
        %1173 = vmatprep.subr.mxu0 0.0
        %1174 = vmatpush1.xpose.msra.mxu0 0.0
        %1175 = vmatprep.subr.mxu0 0.0
        %1176 = vmatpush1.xpose.msra.mxu0 0.0
        %1177 = vmatprep.subr.mxu0 0.0
        %1178 = vmatpush1.xpose.msra.mxu0 0.0
        %1179 = vmatprep.subr.mxu0 0.0
        %1180 = vmatpush1.xpose.msra.mxu0 0.0
        %1181 = vmatprep.subr.mxu0 0.0
        %1182 = vmatpush1.xpose.msra.mxu0 0.0
        %1183 = vmatprep.subr.mxu0 0.0
        %1184 = vmatpush1.xpose.msra.mxu0 0.0
        %1185 = vmatprep.subr.mxu0 0.0
        %1186 = vmatpush1.xpose.msra.mxu0 0.0
        %1187 = vmatprep.subr.mxu0 0.0
        %1188 = vmatpush1.xpose.msra.mxu0 0.0
        %1189 = vmatprep.subr.mxu0 0.0
        %1190 = vmatpush1.xpose.msra.mxu0 0.0
        %1191 = vmatprep.mubr.f32.mxu0 0.0
        %1192 = vmatmul.mubr.f32.gmra.mrb[0].mxu0 %v1123
        %v1193 = vpop.f32.mrb[0].mxu0
        %v1194 = vadd.f32 0.0, %v1193
        %v1195 = vpop.f32.mrb[0].mxu0
        %1196 = vdwg.mxu0
        %1198 = vrot.lane.b32.xlu0 %v1114, 96
        %v1199 = vpop.permute.xlu0 %1198
        %v1200 = vsel %vm1122, %v1114, 0
        %v1202 = vsel %vm1122, %v1199, 0
        %1204 = vmatprep.subr.mxu0 0.0
        %1205 = vmatpush1.xpose.msra.mxu0 %v1202
        %1206 = vmatprep.subr.mxu0 0.0
        %1207 = vmatpush1.xpose.msra.mxu0 0.0
        %1208 = vmatprep.subr.mxu0 0.0
        %1209 = vmatpush1.xpose.msra.mxu0 0.0
        %1210 = vmatprep.subr.mxu0 0.0
        %1211 = vmatpush1.xpose.msra.mxu0 0.0
        %1212 = vmatprep.subr.mxu0 0.0
        %1213 = vmatpush1.xpose.msra.mxu0 0.0
        %1214 = vmatprep.subr.mxu0 0.0
        %1215 = vmatpush1.xpose.msra.mxu0 0.0
        %1216 = vmatprep.subr.mxu0 0.0
        %1217 = vmatpush1.xpose.msra.mxu0 0.0
        %1218 = vmatprep.subr.mxu0 0.0
        %1219 = vmatpush1.xpose.msra.mxu0 0.0
        %1220 = vmatprep.subr.mxu0 0.0
        %1221 = vmatpush1.xpose.msra.mxu0 0.0
        %1222 = vmatprep.subr.mxu0 0.0
        %1223 = vmatpush1.xpose.msra.mxu0 0.0
        %1224 = vmatprep.subr.mxu0 0.0
        %1225 = vmatpush1.xpose.msra.mxu0 0.0
        %1226 = vmatprep.subr.mxu0 0.0
        %1227 = vmatpush1.xpose.msra.mxu0 0.0
        %1228 = vmatprep.subr.mxu0 0.0
        %1229 = vmatpush1.xpose.msra.mxu0 0.0
        %1230 = vmatprep.subr.mxu0 0.0
        %1231 = vmatpush1.xpose.msra.mxu0 0.0
        %1232 = vmatprep.subr.mxu0 0.0
        %1233 = vmatpush1.xpose.msra.mxu0 0.0
        %1234 = vmatprep.subr.mxu0 0.0
        %1235 = vmatpush1.xpose.msra.mxu0 0.0
        %1236 = vmatprep.subr.mxu0 0.0
        %1237 = vmatpush1.xpose.msra.mxu0 0.0
        %1238 = vmatprep.subr.mxu0 0.0
        %1239 = vmatpush1.xpose.msra.mxu0 0.0
        %1240 = vmatprep.subr.mxu0 0.0
        %1241 = vmatpush1.xpose.msra.mxu0 0.0
        %1242 = vmatprep.subr.mxu0 0.0
        %1243 = vmatpush1.xpose.msra.mxu0 0.0
        %1244 = vmatprep.subr.mxu0 0.0
        %1245 = vmatpush1.xpose.msra.mxu0 0.0
        %1246 = vmatprep.subr.mxu0 0.0
        %1247 = vmatpush1.xpose.msra.mxu0 0.0
        %1248 = vmatprep.subr.mxu0 0.0
        %1249 = vmatpush1.xpose.msra.mxu0 0.0
        %1250 = vmatprep.subr.mxu0 0.0
        %1251 = vmatpush1.xpose.msra.mxu0 0.0
        %1252 = vmatprep.subr.mxu0 0.0
        %1253 = vmatpush1.xpose.msra.mxu0 0.0
        %1254 = vmatprep.subr.mxu0 0.0
        %1255 = vmatpush1.xpose.msra.mxu0 0.0
        %1256 = vmatprep.subr.mxu0 0.0
        %1257 = vmatpush1.xpose.msra.mxu0 0.0
        %1258 = vmatprep.subr.mxu0 0.0
        %1259 = vmatpush1.xpose.msra.mxu0 0.0
        %1260 = vmatprep.subr.mxu0 0.0
        %1261 = vmatpush1.xpose.msra.mxu0 0.0
        %1262 = vmatprep.subr.mxu0 0.0
        %1263 = vmatpush1.xpose.msra.mxu0 0.0
        %1264 = vmatprep.subr.mxu0 0.0
        %1265 = vmatpush1.xpose.msra.mxu0 0.0
        %1266 = vmatprep.subr.mxu0 0.0
        %1267 = vmatpush1.xpose.msra.mxu0 0.0
        %1268 = vmatprep.mubr.f32.mxu0 0.0
        %1269 = vmatmul.mubr.f32.gmra.mrb[0].mxu0 %v1200
        %v1270 = vpop.f32.mrb[0].mxu0
        %v1271 = vadd.f32 0.0, %v1270
        %v1272 = vpop.f32.mrb[0].mxu0
        %1273 = vdwg.mxu0
        %v1274 = vmul.f32 %v1194, 0.35355338
        %v1275 = vmul.f32 %v1271, 0.35355338
        %v1278 = vlaneseq
        %v1279 = vshrl.u32 %v1278, 7
        %v1280 = vsub.s32 0, %v1279
        %v1281 = vrot.slane %v1117, %v1280
        %v1282 = vlaneseq
        %v1283 = vshrl.u32 %v1282, 7
        %v1284 = vsub.s32 0, %v1283
        %v1285 = vrot.slane %v1118, %v1284
        %v1288 = vadd.f32 %v1274, %v1281
        %v1289 = vadd.f32 %v1275, %v1285
        %v1290 = vsel %vm1122, %v1288, -inf
        %1291 = vmax.xlane.f32.xlu0 %v1290
        %v1292 = vpop.xlane.xlu0 %1291
        %v1293 = vsel %vm1122, %v1289, -inf
        %1294 = vmax.xlane.f32.xlu0 %v1293
        %v1295 = vpop.xlane.xlu0 %1294
        %v1296 = vsub.f32 %v1288, %v1292
        %v1297 = vsub.f32 %v1289, %v1295
        %v1298 = vmul.f32 %v1296, 1.442695
        %v1299 = vpow.pop %v1298
        %v1300 = vmul.f32 %v1297, 1.442695
        %v1301 = vpow.pop %v1300
        %v1302 = vsel %vm1122, %v1299, 0.0
        %1303 = vadd.xlane.f32.xlu0 %v1302
        %v1304 = vpop.xlane.xlu0 %1303
        %v1305 = vsel %vm1122, %v1301, 0.0
        %1306 = vadd.xlane.f32.xlu0 %v1305
        %v1307 = vpop.xlane.xlu0 %1306
        %v1308 = vrcp.pop %v1304
        %v1309 = vrcp.pop %v1307
        %v1310 = vmul.f32 %v1299, %v1308
        %v1311 = vmul.f32 %v1301, %v1309
        %1312 = vrot.lane.b32.xlu0 %v1109, 64
        %v1313 = vpop.permute.xlu0 %1312
        %v1316 = vsel %vm1122, %v1310, 0
        %1318 = vmatprep.subr.mxu0 0.0
        %1319 = vmatpush1.msra.mxu0 %v1313
        %1320 = vmatprep.subr.mxu0 0.0
        %1321 = vmatpush1.msra.mxu0 0.0
        %1322 = vmatprep.subr.mxu0 0.0
        %1323 = vmatpush1.msra.mxu0 0.0
        %1324 = vmatprep.subr.mxu0 0.0
        %1325 = vmatpush1.msra.mxu0 0.0
        %1326 = vmatprep.subr.mxu0 0.0
        %1327 = vmatpush1.msra.mxu0 0.0
        %1328 = vmatprep.subr.mxu0 0.0
        %1329 = vmatpush1.msra.mxu0 0.0
        %1330 = vmatprep.subr.mxu0 0.0
        %1331 = vmatpush1.msra.mxu0 0.0
        %1332 = vmatprep.subr.mxu0 0.0
        %1333 = vmatpush1.msra.mxu0 0.0
        %1334 = vmatprep.subr.mxu0 0.0
        %1335 = vmatpush1.msra.mxu0 0.0
        %1336 = vmatprep.subr.mxu0 0.0
        %1337 = vmatpush1.msra.mxu0 0.0
        %1338 = vmatprep.subr.mxu0 0.0
        %1339 = vmatpush1.msra.mxu0 0.0
        %1340 = vmatprep.subr.mxu0 0.0
        %1341 = vmatpush1.msra.mxu0 0.0
        %1342 = vmatprep.subr.mxu0 0.0
        %1343 = vmatpush1.msra.mxu0 0.0
        %1344 = vmatprep.subr.mxu0 0.0
        %1345 = vmatpush1.msra.mxu0 0.0
        %1346 = vmatprep.subr.mxu0 0.0
        %1347 = vmatpush1.msra.mxu0 0.0
        %1348 = vmatprep.subr.mxu0 0.0
        %1349 = vmatpush1.msra.mxu0 0.0
        %1350 = vmatprep.subr.mxu0 0.0
        %1351 = vmatpush1.msra.mxu0 0.0
        %1352 = vmatprep.subr.mxu0 0.0
        %1353 = vmatpush1.msra.mxu0 0.0
        %1354 = vmatprep.subr.mxu0 0.0
        %1355 = vmatpush1.msra.mxu0 0.0
        %1356 = vmatprep.subr.mxu0 0.0
        %1357 = vmatpush1.msra.mxu0 0.0
        %1358 = vmatprep.subr.mxu0 0.0
        %1359 = vmatpush1.msra.mxu0 0.0
        %1360 = vmatprep.subr.mxu0 0.0
        %1361 = vmatpush1.msra.mxu0 0.0
        %1362 = vmatprep.subr.mxu0 0.0
        %1363 = vmatpush1.msra.mxu0 0.0
        %1364 = vmatprep.subr.mxu0 0.0
        %1365 = vmatpush1.msra.mxu0 0.0
        %1366 = vmatprep.subr.mxu0 0.0
        %1367 = vmatpush1.msra.mxu0 0.0
        %1368 = vmatprep.subr.mxu0 0.0
        %1369 = vmatpush1.msra.mxu0 0.0
        %1370 = vmatprep.subr.mxu0 0.0
        %1371 = vmatpush1.msra.mxu0 0.0
        %1372 = vmatprep.subr.mxu0 0.0
        %1373 = vmatpush1.msra.mxu0 0.0
        %1374 = vmatprep.subr.mxu0 0.0
        %1375 = vmatpush1.msra.mxu0 0.0
        %1376 = vmatprep.subr.mxu0 0.0
        %1377 = vmatpush1.msra.mxu0 0.0
        %1378 = vmatprep.subr.mxu0 0.0
        %1379 = vmatpush1.msra.mxu0 0.0
        %1380 = vmatprep.subr.mxu0 0.0
        %1381 = vmatpush1.msra.mxu0 0.0
        %1382 = vmatprep.mubr.f32.mxu0 0.0
        %1383 = vmatmul.mubr.f32.gmra.mrb[0].mxu0 %v1316
        %v1384 = vpop.f32.mrb[0].mxu0
        %v1385 = vadd.f32 0.0, %v1384
        %v1386 = vpop.f32.mrb[0].mxu0
        %1387 = vdwg.mxu0
        %1388 = vrot.lane.b32.xlu0 %v1114, 64
        %v1389 = vpop.permute.xlu0 %1388
        %v1392 = vsel %vm1122, %v1311, 0
        %1394 = vmatprep.subr.mxu0 0.0
        %1395 = vmatpush1.msra.mxu0 %v1389
        %1396 = vmatprep.subr.mxu0 0.0
        %1397 = vmatpush1.msra.mxu0 0.0
        %1398 = vmatprep.subr.mxu0 0.0
        %1399 = vmatpush1.msra.mxu0 0.0
        %1400 = vmatprep.subr.mxu0 0.0
        %1401 = vmatpush1.msra.mxu0 0.0
        %1402 = vmatprep.subr.mxu0 0.0
        %1403 = vmatpush1.msra.mxu0 0.0
        %1404 = vmatprep.subr.mxu0 0.0
        %1405 = vmatpush1.msra.mxu0 0.0
        %1406 = vmatprep.subr.mxu0 0.0
        %1407 = vmatpush1.msra.mxu0 0.0
        %1408 = vmatprep.subr.mxu0 0.0
        %1409 = vmatpush1.msra.mxu0 0.0
        %1410 = vmatprep.subr.mxu0 0.0
        %1411 = vmatpush1.msra.mxu0 0.0
        %1412 = vmatprep.subr.mxu0 0.0
        %1413 = vmatpush1.msra.mxu0 0.0
        %1414 = vmatprep.subr.mxu0 0.0
        %1415 = vmatpush1.msra.mxu0 0.0
        %1416 = vmatprep.subr.mxu0 0.0
        %1417 = vmatpush1.msra.mxu0 0.0
        %1418 = vmatprep.subr.mxu0 0.0
        %1419 = vmatpush1.msra.mxu0 0.0
        %1420 = vmatprep.subr.mxu0 0.0
        %1421 = vmatpush1.msra.mxu0 0.0
        %1422 = vmatprep.subr.mxu0 0.0
        %1423 = vmatpush1.msra.mxu0 0.0
        %1424 = vmatprep.subr.mxu0 0.0
        %1425 = vmatpush1.msra.mxu0 0.0
        %1426 = vmatprep.subr.mxu0 0.0
        %1427 = vmatpush1.msra.mxu0 0.0
        %1428 = vmatprep.subr.mxu0 0.0
        %1429 = vmatpush1.msra.mxu0 0.0
        %1430 = vmatprep.subr.mxu0 0.0
        %1431 = vmatpush1.msra.mxu0 0.0
        %1432 = vmatprep.subr.mxu0 0.0
        %1433 = vmatpush1.msra.mxu0 0.0
        %1434 = vmatprep.subr.mxu0 0.0
        %1435 = vmatpush1.msra.mxu0 0.0
        %1436 = vmatprep.subr.mxu0 0.0
        %1437 = vmatpush1.msra.mxu0 0.0
        %1438 = vmatprep.subr.mxu0 0.0
        %1439 = vmatpush1.msra.mxu0 0.0
        %1440 = vmatprep.subr.mxu0 0.0
        %1441 = vmatpush1.msra.mxu0 0.0
        %1442 = vmatprep.subr.mxu0 0.0
        %1443 = vmatpush1.msra.mxu0 0.0
        %1444 = vmatprep.subr.mxu0 0.0
        %1445 = vmatpush1.msra.mxu0 0.0
        %1446 = vmatprep.subr.mxu0 0.0
        %1447 = vmatpush1.msra.mxu0 0.0
        %1448 = vmatprep.subr.mxu0 0.0
        %1449 = vmatpush1.msra.mxu0 0.0
        %1450 = vmatprep.subr.mxu0 0.0
        %1451 = vmatpush1.msra.mxu0 0.0
        %1452 = vmatprep.subr.mxu0 0.0
        %1453 = vmatpush1.msra.mxu0 0.0
        %1454 = vmatprep.subr.mxu0 0.0
        %1455 = vmatpush1.msra.mxu0 0.0
        %1456 = vmatprep.subr.mxu0 0.0
        %1457 = vmatpush1.msra.mxu0 0.0
        %1458 = vmatprep.mubr.f32.mxu0 0.0
        %1459 = vmatmul.mubr.f32.gmra.mrb[0].mxu0 %v1392
        %v1460 = vpop.f32.mrb[0].mxu0
        %v1461 = vadd.f32 0.0, %v1460
        %v1462 = vpop.f32.mrb[0].mxu0
        %1463 = vdwg.mxu0
        %1464 = vrot.lane.b32.xlu0 %v1109, 120
        %v1465 = vpop.permute.xlu0 %1464
        %1466 = vrot.lane.b32.xlu0 %v1109, 88
        %v1467 = vpop.permute.xlu0 %1466
        %v1468 = vsel %vm1122, %v1465, 0
        %v1470 = vsel %vm1122, %v1467, 0
        %1472 = vmatprep.subr.mxu0 0.0
        %1473 = vmatpush1.xpose.msra.mxu0 %v1470
        %1474 = vmatprep.subr.mxu0 0.0
        %1475 = vmatpush1.xpose.msra.mxu0 0.0
        %1476 = vmatprep.subr.mxu0 0.0
        %1477 = vmatpush1.xpose.msra.mxu0 0.0
        %1478 = vmatprep.subr.mxu0 0.0
        %1479 = vmatpush1.xpose.msra.mxu0 0.0
        %1480 = vmatprep.subr.mxu0 0.0
        %1481 = vmatpush1.xpose.msra.mxu0 0.0
        %1482 = vmatprep.subr.mxu0 0.0
        %1483 = vmatpush1.xpose.msra.mxu0 0.0
        %1484 = vmatprep.subr.mxu0 0.0
        %1485 = vmatpush1.xpose.msra.mxu0 0.0
        %1486 = vmatprep.subr.mxu0 0.0
        %1487 = vmatpush1.xpose.msra.mxu0 0.0
        %1488 = vmatprep.subr.mxu0 0.0
        %1489 = vmatpush1.xpose.msra.mxu0 0.0
        %1490 = vmatprep.subr.mxu0 0.0
        %1491 = vmatpush1.xpose.msra.mxu0 0.0
        %1492 = vmatprep.subr.mxu0 0.0
        %1493 = vmatpush1.xpose.msra.mxu0 0.0
        %1494 = vmatprep.subr.mxu0 0.0
        %1495 = vmatpush1.xpose.msra.mxu0 0.0
        %1496 = vmatprep.subr.mxu0 0.0
        %1497 = vmatpush1.xpose.msra.mxu0 0.0
        %1498 = vmatprep.subr.mxu0 0.0
        %1499 = vmatpush1.xpose.msra.mxu0 0.0
        %1500 = vmatprep.subr.mxu0 0.0
        %1501 = vmatpush1.xpose.msra.mxu0 0.0
        %1502 = vmatprep.subr.mxu0 0.0
        %1503 = vmatpush1.xpose.msra.mxu0 0.0
        %1504 = vmatprep.subr.mxu0 0.0
        %1505 = vmatpush1.xpose.msra.mxu0 0.0
        %1506 = vmatprep.subr.mxu0 0.0
        %1507 = vmatpush1.xpose.msra.mxu0 0.0
        %1508 = vmatprep.subr.mxu0 0.0
        %1509 = vmatpush1.xpose.msra.mxu0 0.0
        %1510 = vmatprep.subr.mxu0 0.0
        %1511 = vmatpush1.xpose.msra.mxu0 0.0
        %1512 = vmatprep.subr.mxu0 0.0
        %1513 = vmatpush1.xpose.msra.mxu0 0.0
        %1514 = vmatprep.subr.mxu0 0.0
        %1515 = vmatpush1.xpose.msra.mxu0 0.0
        %1516 = vmatprep.subr.mxu0 0.0
        %1517 = vmatpush1.xpose.msra.mxu0 0.0
        %1518 = vmatprep.subr.mxu0 0.0
        %1519 = vmatpush1.xpose.msra.mxu0 0.0
        %1520 = vmatprep.subr.mxu0 0.0
        %1521 = vmatpush1.xpose.msra.mxu0 0.0
        %1522 = vmatprep.subr.mxu0 0.0
        %1523 = vmatpush1.xpose.msra.mxu0 0.0
        %1524 = vmatprep.subr.mxu0 0.0
        %1525 = vmatpush1.xpose.msra.mxu0 0.0
        %1526 = vmatprep.subr.mxu0 0.0
        %1527 = vmatpush1.xpose.msra.mxu0 0.0
        %1528 = vmatprep.subr.mxu0 0.0
        %1529 = vmatpush1.xpose.msra.mxu0 0.0
        %1530 = vmatprep.subr.mxu0 0.0
        %1531 = vmatpush1.xpose.msra.mxu0 0.0
        %1532 = vmatprep.subr.mxu0 0.0
        %1533 = vmatpush1.xpose.msra.mxu0 0.0
        %1534 = vmatprep.subr.mxu0 0.0
        %1535 = vmatpush1.xpose.msra.mxu0 0.0
        %1536 = vmatprep.mubr.f32.mxu0 0.0
        %1537 = vmatmul.mubr.f32.gmra.mrb[0].mxu0 %v1468
        %v1538 = vpop.f32.mrb[0].mxu0
        %v1539 = vadd.f32 0.0, %v1538
        %v1540 = vpop.f32.mrb[0].mxu0
        %1541 = vdwg.mxu0
        %1542 = vrot.lane.b32.xlu0 %v1114, 120
        %v1543 = vpop.permute.xlu0 %1542
        %1544 = vrot.lane.b32.xlu0 %v1114, 88
        %v1545 = vpop.permute.xlu0 %1544
        %v1546 = vsel %vm1122, %v1543, 0
        %v1548 = vsel %vm1122, %v1545, 0
        %1550 = vmatprep.subr.mxu0 0.0
        %1551 = vmatpush1.xpose.msra.mxu0 %v1548
        %1552 = vmatprep.subr.mxu0 0.0
        %1553 = vmatpush1.xpose.msra.mxu0 0.0
        %1554 = vmatprep.subr.mxu0 0.0
        %1555 = vmatpush1.xpose.msra.mxu0 0.0
        %1556 = vmatprep.subr.mxu0 0.0
        %1557 = vmatpush1.xpose.msra.mxu0 0.0
        %1558 = vmatprep.subr.mxu0 0.0
        %1559 = vmatpush1.xpose.msra.mxu0 0.0
        %1560 = vmatprep.subr.mxu0 0.0
        %1561 = vmatpush1.xpose.msra.mxu0 0.0
        %1562 = vmatprep.subr.mxu0 0.0
        %1563 = vmatpush1.xpose.msra.mxu0 0.0
        %1564 = vmatprep.subr.mxu0 0.0
        %1565 = vmatpush1.xpose.msra.mxu0 0.0
        %1566 = vmatprep.subr.mxu0 0.0
        %1567 = vmatpush1.xpose.msra.mxu0 0.0
        %1568 = vmatprep.subr.mxu0 0.0
        %1569 = vmatpush1.xpose.msra.mxu0 0.0
        %1570 = vmatprep.subr.mxu0 0.0
        %1571 = vmatpush1.xpose.msra.mxu0 0.0
        %1572 = vmatprep.subr.mxu0 0.0
        %1573 = vmatpush1.xpose.msra.mxu0 0.0
        %1574 = vmatprep.subr.mxu0 0.0
        %1575 = vmatpush1.xpose.msra.mxu0 0.0
        %1576 = vmatprep.subr.mxu0 0.0
        %1577 = vmatpush1.xpose.msra.mxu0 0.0
        %1578 = vmatprep.subr.mxu0 0.0
        %1579 = vmatpush1.xpose.msra.mxu0 0.0
        %1580 = vmatprep.subr.mxu0 0.0
        %1581 = vmatpush1.xpose.msra.mxu0 0.0
        %1582 = vmatprep.subr.mxu0 0.0
        %1583 = vmatpush1.xpose.msra.mxu0 0.0
        %1584 = vmatprep.subr.mxu0 0.0
        %1585 = vmatpush1.xpose.msra.mxu0 0.0
        %1586 = vmatprep.subr.mxu0 0.0
        %1587 = vmatpush1.xpose.msra.mxu0 0.0
        %1588 = vmatprep.subr.mxu0 0.0
        %1589 = vmatpush1.xpose.msra.mxu0 0.0
        %1590 = vmatprep.subr.mxu0 0.0
        %1591 = vmatpush1.xpose.msra.mxu0 0.0
        %1592 = vmatprep.subr.mxu0 0.0
        %1593 = vmatpush1.xpose.msra.mxu0 0.0
        %1594 = vmatprep.subr.mxu0 0.0
        %1595 = vmatpush1.xpose.msra.mxu0 0.0
        %1596 = vmatprep.subr.mxu0 0.0
        %1597 = vmatpush1.xpose.msra.mxu0 0.0
        %1598 = vmatprep.subr.mxu0 0.0
        %1599 = vmatpush1.xpose.msra.mxu0 0.0
        %1600 = vmatprep.subr.mxu0 0.0
        %1601 = vmatpush1.xpose.msra.mxu0 0.0
        %1602 = vmatprep.subr.mxu0 0.0
        %1603 = vmatpush1.xpose.msra.mxu0 0.0
        %1604 = vmatprep.subr.mxu0 0.0
        %1605 = vmatpush1.xpose.msra.mxu0 0.0
        %1606 = vmatprep.subr.mxu0 0.0
        %1607 = vmatpush1.xpose.msra.mxu0 0.0
        %1608 = vmatprep.subr.mxu0 0.0
        %1609 = vmatpush1.xpose.msra.mxu0 0.0
        %1610 = vmatprep.subr.mxu0 0.0
        %1611 = vmatpush1.xpose.msra.mxu0 0.0
        %1612 = vmatprep.subr.mxu0 0.0
        %1613 = vmatpush1.xpose.msra.mxu0 0.0
        %1614 = vmatprep.mubr.f32.mxu0 0.0
        %1615 = vmatmul.mubr.f32.gmra.mrb[0].mxu0 %v1546
        %v1616 = vpop.f32.mrb[0].mxu0
        %v1617 = vadd.f32 0.0, %v1616
        %v1618 = vpop.f32.mrb[0].mxu0
        %1619 = vdwg.mxu0
        %v1620 = vmul.f32 %v1539, 0.35355338
        %v1621 = vmul.f32 %v1617, 0.35355338
        %v1622 = vadd.f32 %v1620, %v1281
        %v1623 = vadd.f32 %v1621, %v1285
        %v1624 = vsel %vm1122, %v1622, -inf
        %1625 = vmax.xlane.f32.xlu0 %v1624
        %v1626 = vpop.xlane.xlu0 %1625
        %v1627 = vsel %vm1122, %v1623, -inf
        %1628 = vmax.xlane.f32.xlu0 %v1627
        %v1629 = vpop.xlane.xlu0 %1628
        %v1630 = vsub.f32 %v1622, %v1626
        %v1631 = vsub.f32 %v1623, %v1629
        %v1632 = vmul.f32 %v1630, 1.442695
        %v1633 = vpow.pop %v1632
        %v1634 = vmul.f32 %v1631, 1.442695
        %v1635 = vpow.pop %v1634
        %v1636 = vsel %vm1122, %v1633, 0.0
        %1637 = vadd.xlane.f32.xlu0 %v1636
        %v1638 = vpop.xlane.xlu0 %1637
        %v1639 = vsel %vm1122, %v1635, 0.0
        %1640 = vadd.xlane.f32.xlu0 %v1639
        %v1641 = vpop.xlane.xlu0 %1640
        %v1642 = vrcp.pop %v1638
        %v1643 = vrcp.pop %v1641
        %v1644 = vmul.f32 %v1633, %v1642
        %v1645 = vmul.f32 %v1635, %v1643
        %1646 = vrot.lane.b32.xlu0 %v1109, 56
        %v1647 = vpop.permute.xlu0 %1646
        %v1650 = vsel %vm1122, %v1644, 0
        %1652 = vmatprep.subr.mxu0 0.0
        %1653 = vmatpush1.msra.mxu0 %v1647
        %1654 = vmatprep.subr.mxu0 0.0
        %1655 = vmatpush1.msra.mxu0 0.0
        %1656 = vmatprep.subr.mxu0 0.0
        %1657 = vmatpush1.msra.mxu0 0.0
        %1658 = vmatprep.subr.mxu0 0.0
        %1659 = vmatpush1.msra.mxu0 0.0
        %1660 = vmatprep.subr.mxu0 0.0
        %1661 = vmatpush1.msra.mxu0 0.0
        %1662 = vmatprep.subr.mxu0 0.0
        %1663 = vmatpush1.msra.mxu0 0.0
        %1664 = vmatprep.subr.mxu0 0.0
        %1665 = vmatpush1.msra.mxu0 0.0
        %1666 = vmatprep.subr.mxu0 0.0
        %1667 = vmatpush1.msra.mxu0 0.0
        %1668 = vmatprep.subr.mxu0 0.0
        %1669 = vmatpush1.msra.mxu0 0.0
        %1670 = vmatprep.subr.mxu0 0.0
        %1671 = vmatpush1.msra.mxu0 0.0
        %1672 = vmatprep.subr.mxu0 0.0
        %1673 = vmatpush1.msra.mxu0 0.0
        %1674 = vmatprep.subr.mxu0 0.0
        %1675 = vmatpush1.msra.mxu0 0.0
        %1676 = vmatprep.subr.mxu0 0.0
        %1677 = vmatpush1.msra.mxu0 0.0
        %1678 = vmatprep.subr.mxu0 0.0
        %1679 = vmatpush1.msra.mxu0 0.0
        %1680 = vmatprep.subr.mxu0 0.0
        %1681 = vmatpush1.msra.mxu0 0.0
        %1682 = vmatprep.subr.mxu0 0.0
        %1683 = vmatpush1.msra.mxu0 0.0
        %1684 = vmatprep.subr.mxu0 0.0
        %1685 = vmatpush1.msra.mxu0 0.0
        %1686 = vmatprep.subr.mxu0 0.0
        %1687 = vmatpush1.msra.mxu0 0.0
        %1688 = vmatprep.subr.mxu0 0.0
        %1689 = vmatpush1.msra.mxu0 0.0
        %1690 = vmatprep.subr.mxu0 0.0
        %1691 = vmatpush1.msra.mxu0 0.0
        %1692 = vmatprep.subr.mxu0 0.0
        %1693 = vmatpush1.msra.mxu0 0.0
        %1694 = vmatprep.subr.mxu0 0.0
        %1695 = vmatpush1.msra.mxu0 0.0
        %1696 = vmatprep.subr.mxu0 0.0
        %1697 = vmatpush1.msra.mxu0 0.0
        %1698 = vmatprep.subr.mxu0 0.0
        %1699 = vmatpush1.msra.mxu0 0.0
        %1700 = vmatprep.subr.mxu0 0.0
        %1701 = vmatpush1.msra.mxu0 0.0
        %1702 = vmatprep.subr.mxu0 0.0
        %1703 = vmatpush1.msra.mxu0 0.0
        %1704 = vmatprep.subr.mxu0 0.0
        %1705 = vmatpush1.msra.mxu0 0.0
        %1706 = vmatprep.subr.mxu0 0.0
        %1707 = vmatpush1.msra.mxu0 0.0
        %1708 = vmatprep.subr.mxu0 0.0
        %1709 = vmatpush1.msra.mxu0 0.0
        %1710 = vmatprep.subr.mxu0 0.0
        %1711 = vmatpush1.msra.mxu0 0.0
        %1712 = vmatprep.subr.mxu0 0.0
        %1713 = vmatpush1.msra.mxu0 0.0
        %1714 = vmatprep.subr.mxu0 0.0
        %1715 = vmatpush1.msra.mxu0 0.0
        %1716 = vmatprep.mubr.f32.mxu0 0.0
        %1717 = vmatmul.mubr.f32.gmra.mrb[0].mxu0 %v1650
        %v1718 = vpop.f32.mrb[0].mxu0
        %v1719 = vadd.f32 0.0, %v1718
        %v1720 = vpop.f32.mrb[0].mxu0
        %1721 = vdwg.mxu0
        %1722 = vrot.lane.b32.xlu0 %v1114, 56
        %v1723 = vpop.permute.xlu0 %1722
        %v1726 = vsel %vm1122, %v1645, 0
        %1728 = vmatprep.subr.mxu0 0.0
        %1729 = vmatpush1.msra.mxu0 %v1723
        %1730 = vmatprep.subr.mxu0 0.0
        %1731 = vmatpush1.msra.mxu0 0.0
        %1732 = vmatprep.subr.mxu0 0.0
        %1733 = vmatpush1.msra.mxu0 0.0
        %1734 = vmatprep.subr.mxu0 0.0
        %1735 = vmatpush1.msra.mxu0 0.0
        %1736 = vmatprep.subr.mxu0 0.0
        %1737 = vmatpush1.msra.mxu0 0.0
        %1738 = vmatprep.subr.mxu0 0.0
        %1739 = vmatpush1.msra.mxu0 0.0
        %1740 = vmatprep.subr.mxu0 0.0
        %1741 = vmatpush1.msra.mxu0 0.0
        %1742 = vmatprep.subr.mxu0 0.0
        %1743 = vmatpush1.msra.mxu0 0.0
        %1744 = vmatprep.subr.mxu0 0.0
        %1745 = vmatpush1.msra.mxu0 0.0
        %1746 = vmatprep.subr.mxu0 0.0
        %1747 = vmatpush1.msra.mxu0 0.0
        %1748 = vmatprep.subr.mxu0 0.0
        %1749 = vmatpush1.msra.mxu0 0.0
        %1750 = vmatprep.subr.mxu0 0.0
        %1751 = vmatpush1.msra.mxu0 0.0
        %1752 = vmatprep.subr.mxu0 0.0
        %1753 = vmatpush1.msra.mxu0 0.0
        %1754 = vmatprep.subr.mxu0 0.0
        %1755 = vmatpush1.msra.mxu0 0.0
        %1756 = vmatprep.subr.mxu0 0.0
        %1757 = vmatpush1.msra.mxu0 0.0
        %1758 = vmatprep.subr.mxu0 0.0
        %1759 = vmatpush1.msra.mxu0 0.0
        %1760 = vmatprep.subr.mxu0 0.0
        %1761 = vmatpush1.msra.mxu0 0.0
        %1762 = vmatprep.subr.mxu0 0.0
        %1763 = vmatpush1.msra.mxu0 0.0
        %1764 = vmatprep.subr.mxu0 0.0
        %1765 = vmatpush1.msra.mxu0 0.0
        %1766 = vmatprep.subr.mxu0 0.0
        %1767 = vmatpush1.msra.mxu0 0.0
        %1768 = vmatprep.subr.mxu0 0.0
        %1769 = vmatpush1.msra.mxu0 0.0
        %1770 = vmatprep.subr.mxu0 0.0
        %1771 = vmatpush1.msra.mxu0 0.0
        %1772 = vmatprep.subr.mxu0 0.0
        %1773 = vmatpush1.msra.mxu0 0.0
        %1774 = vmatprep.subr.mxu0 0.0
        %1775 = vmatpush1.msra.mxu0 0.0
        %1776 = vmatprep.subr.mxu0 0.0
        %1777 = vmatpush1.msra.mxu0 0.0
        %1778 = vmatprep.subr.mxu0 0.0
        %1779 = vmatpush1.msra.mxu0 0.0
        %1780 = vmatprep.subr.mxu0 0.0
        %1781 = vmatpush1.msra.mxu0 0.0
        %1782 = vmatprep.subr.mxu0 0.0
        %1783 = vmatpush1.msra.mxu0 0.0
        %1784 = vmatprep.subr.mxu0 0.0
        %1785 = vmatpush1.msra.mxu0 0.0
        %1786 = vmatprep.subr.mxu0 0.0
        %1787 = vmatpush1.msra.mxu0 0.0
        %1788 = vmatprep.subr.mxu0 0.0
        %1789 = vmatpush1.msra.mxu0 0.0
        %1790 = vmatprep.subr.mxu0 0.0
        %1791 = vmatpush1.msra.mxu0 0.0
        %1792 = vmatprep.mubr.f32.mxu0 0.0
        %1793 = vmatmul.mubr.f32.gmra.mrb[0].mxu0 %v1726
        %v1794 = vpop.f32.mrb[0].mxu0
        %v1795 = vadd.f32 0.0, %v1794
        %v1796 = vpop.f32.mrb[0].mxu0
        %1797 = vdwg.mxu0
        %1798 = vrot.lane.b32.xlu0 %v1109, 112
        %v1799 = vpop.permute.xlu0 %1798
        %1800 = vrot.lane.b32.xlu0 %v1109, 80
        %v1801 = vpop.permute.xlu0 %1800
        %v1802 = vsel %vm1122, %v1799, 0
        %v1804 = vsel %vm1122, %v1801, 0
        %1806 = vmatprep.subr.mxu0 0.0
        %1807 = vmatpush1.xpose.msra.mxu0 %v1804
        %1808 = vmatprep.subr.mxu0 0.0
        %1809 = vmatpush1.xpose.msra.mxu0 0.0
        %1810 = vmatprep.subr.mxu0 0.0
        %1811 = vmatpush1.xpose.msra.mxu0 0.0
        %1812 = vmatprep.subr.mxu0 0.0
        %1813 = vmatpush1.xpose.msra.mxu0 0.0
        %1814 = vmatprep.subr.mxu0 0.0
        %1815 = vmatpush1.xpose.msra.mxu0 0.0
        %1816 = vmatprep.subr.mxu0 0.0
        %1817 = vmatpush1.xpose.msra.mxu0 0.0
        %1818 = vmatprep.subr.mxu0 0.0
        %1819 = vmatpush1.xpose.msra.mxu0 0.0
        %1820 = vmatprep.subr.mxu0 0.0
        %1821 = vmatpush1.xpose.msra.mxu0 0.0
        %1822 = vmatprep.subr.mxu0 0.0
        %1823 = vmatpush1.xpose.msra.mxu0 0.0
        %1824 = vmatprep.subr.mxu0 0.0
        %1825 = vmatpush1.xpose.msra.mxu0 0.0
        %1826 = vmatprep.subr.mxu0 0.0
        %1827 = vmatpush1.xpose.msra.mxu0 0.0
        %1828 = vmatprep.subr.mxu0 0.0
        %1829 = vmatpush1.xpose.msra.mxu0 0.0
        %1830 = vmatprep.subr.mxu0 0.0
        %1831 = vmatpush1.xpose.msra.mxu0 0.0
        %1832 = vmatprep.subr.mxu0 0.0
        %1833 = vmatpush1.xpose.msra.mxu0 0.0
        %1834 = vmatprep.subr.mxu0 0.0
        %1835 = vmatpush1.xpose.msra.mxu0 0.0
        %1836 = vmatprep.subr.mxu0 0.0
        %1837 = vmatpush1.xpose.msra.mxu0 0.0
        %1838 = vmatprep.subr.mxu0 0.0
        %1839 = vmatpush1.xpose.msra.mxu0 0.0
        %1840 = vmatprep.subr.mxu0 0.0
        %1841 = vmatpush1.xpose.msra.mxu0 0.0
        %1842 = vmatprep.subr.mxu0 0.0
        %1843 = vmatpush1.xpose.msra.mxu0 0.0
        %1844 = vmatprep.subr.mxu0 0.0
        %1845 = vmatpush1.xpose.msra.mxu0 0.0
        %1846 = vmatprep.subr.mxu0 0.0
        %1847 = vmatpush1.xpose.msra.mxu0 0.0
        %1848 = vmatprep.subr.mxu0 0.0
        %1849 = vmatpush1.xpose.msra.mxu0 0.0
        %1850 = vmatprep.subr.mxu0 0.0
        %1851 = vmatpush1.xpose.msra.mxu0 0.0
        %1852 = vmatprep.subr.mxu0 0.0
        %1853 = vmatpush1.xpose.msra.mxu0 0.0
        %1854 = vmatprep.subr.mxu0 0.0
        %1855 = vmatpush1.xpose.msra.mxu0 0.0
        %1856 = vmatprep.subr.mxu0 0.0
        %1857 = vmatpush1.xpose.msra.mxu0 0.0
        %1858 = vmatprep.subr.mxu0 0.0
        %1859 = vmatpush1.xpose.msra.mxu0 0.0
        %1860 = vmatprep.subr.mxu0 0.0
        %1861 = vmatpush1.xpose.msra.mxu0 0.0
        %1862 = vmatprep.subr.mxu0 0.0
        %1863 = vmatpush1.xpose.msra.mxu0 0.0
        %1864 = vmatprep.subr.mxu0 0.0
        %1865 = vmatpush1.xpose.msra.mxu0 0.0
        %1866 = vmatprep.subr.mxu0 0.0
        %1867 = vmatpush1.xpose.msra.mxu0 0.0
        %1868 = vmatprep.subr.mxu0 0.0
        %1869 = vmatpush1.xpose.msra.mxu0 0.0
        %1870 = vmatprep.mubr.f32.mxu0 0.0
        %1871 = vmatmul.mubr.f32.gmra.mrb[0].mxu0 %v1802
        %v1872 = vpop.f32.mrb[0].mxu0
        %v1873 = vadd.f32 0.0, %v1872
        %v1874 = vpop.f32.mrb[0].mxu0
        %1875 = vdwg.mxu0
        %1876 = vrot.lane.b32.xlu0 %v1114, 112
        %v1877 = vpop.permute.xlu0 %1876
        %1878 = vrot.lane.b32.xlu0 %v1114, 80
        %v1879 = vpop.permute.xlu0 %1878
        %v1880 = vsel %vm1122, %v1877, 0
        %v1882 = vsel %vm1122, %v1879, 0
        %1884 = vmatprep.subr.mxu0 0.0
        %1885 = vmatpush1.xpose.msra.mxu0 %v1882
        %1886 = vmatprep.subr.mxu0 0.0
        %1887 = vmatpush1.xpose.msra.mxu0 0.0
        %1888 = vmatprep.subr.mxu0 0.0
        %1889 = vmatpush1.xpose.msra.mxu0 0.0
        %1890 = vmatprep.subr.mxu0 0.0
        %1891 = vmatpush1.xpose.msra.mxu0 0.0
        %1892 = vmatprep.subr.mxu0 0.0
        %1893 = vmatpush1.xpose.msra.mxu0 0.0
        %1894 = vmatprep.subr.mxu0 0.0
        %1895 = vmatpush1.xpose.msra.mxu0 0.0
        %1896 = vmatprep.subr.mxu0 0.0
        %1897 = vmatpush1.xpose.msra.mxu0 0.0
        %1898 = vmatprep.subr.mxu0 0.0
        %1899 = vmatpush1.xpose.msra.mxu0 0.0
        %1900 = vmatprep.subr.mxu0 0.0
        %1901 = vmatpush1.xpose.msra.mxu0 0.0
        %1902 = vmatprep.subr.mxu0 0.0
        %1903 = vmatpush1.xpose.msra.mxu0 0.0
        %1904 = vmatprep.subr.mxu0 0.0
        %1905 = vmatpush1.xpose.msra.mxu0 0.0
        %1906 = vmatprep.subr.mxu0 0.0
        %1907 = vmatpush1.xpose.msra.mxu0 0.0
        %1908 = vmatprep.subr.mxu0 0.0
        %1909 = vmatpush1.xpose.msra.mxu0 0.0
        %1910 = vmatprep.subr.mxu0 0.0
        %1911 = vmatpush1.xpose.msra.mxu0 0.0
        %1912 = vmatprep.subr.mxu0 0.0
        %1913 = vmatpush1.xpose.msra.mxu0 0.0
        %1914 = vmatprep.subr.mxu0 0.0
        %1915 = vmatpush1.xpose.msra.mxu0 0.0
        %1916 = vmatprep.subr.mxu0 0.0
        %1917 = vmatpush1.xpose.msra.mxu0 0.0
        %1918 = vmatprep.subr.mxu0 0.0
        %1919 = vmatpush1.xpose.msra.mxu0 0.0
        %1920 = vmatprep.subr.mxu0 0.0
        %1921 = vmatpush1.xpose.msra.mxu0 0.0
        %1922 = vmatprep.subr.mxu0 0.0
        %1923 = vmatpush1.xpose.msra.mxu0 0.0
        %1924 = vmatprep.subr.mxu0 0.0
        %1925 = vmatpush1.xpose.msra.mxu0 0.0
        %1926 = vmatprep.subr.mxu0 0.0
        %1927 = vmatpush1.xpose.msra.mxu0 0.0
        %1928 = vmatprep.subr.mxu0 0.0
        %1929 = vmatpush1.xpose.msra.mxu0 0.0
        %1930 = vmatprep.subr.mxu0 0.0
        %1931 = vmatpush1.xpose.msra.mxu0 0.0
        %1932 = vmatprep.subr.mxu0 0.0
        %1933 = vmatpush1.xpose.msra.mxu0 0.0
        %1934 = vmatprep.subr.mxu0 0.0
        %1935 = vmatpush1.xpose.msra.mxu0 0.0
        %1936 = vmatprep.subr.mxu0 0.0
        %1937 = vmatpush1.xpose.msra.mxu0 0.0
        %1938 = vmatprep.subr.mxu0 0.0
        %1939 = vmatpush1.xpose.msra.mxu0 0.0
        %1940 = vmatprep.subr.mxu0 0.0
        %1941 = vmatpush1.xpose.msra.mxu0 0.0
        %1942 = vmatprep.subr.mxu0 0.0
        %1943 = vmatpush1.xpose.msra.mxu0 0.0
        %1944 = vmatprep.subr.mxu0 0.0
        %1945 = vmatpush1.xpose.msra.mxu0 0.0
        %1946 = vmatprep.subr.mxu0 0.0
        %1947 = vmatpush1.xpose.msra.mxu0 0.0
        %1948 = vmatprep.mubr.f32.mxu0 0.0
        %1949 = vmatmul.mubr.f32.gmra.mrb[0].mxu0 %v1880
        %v1950 = vpop.f32.mrb[0].mxu0
        %v1951 = vadd.f32 0.0, %v1950
        %v1952 = vpop.f32.mrb[0].mxu0
        %1953 = vdwg.mxu0
        %v1954 = vmul.f32 %v1873, 0.35355338
        %v1955 = vmul.f32 %v1951, 0.35355338
        %v1956 = vadd.f32 %v1954, %v1281
        %v1957 = vadd.f32 %v1955, %v1285
        %v1958 = vsel %vm1122, %v1956, -inf
        %1959 = vmax.xlane.f32.xlu0 %v1958
        %v1960 = vpop.xlane.xlu0 %1959
        %v1961 = vsel %vm1122, %v1957, -inf
        %1962 = vmax.xlane.f32.xlu0 %v1961
        %v1963 = vpop.xlane.xlu0 %1962
        %v1964 = vsub.f32 %v1956, %v1960
        %v1965 = vsub.f32 %v1957, %v1963
        %v1966 = vmul.f32 %v1964, 1.442695
        %v1967 = vpow.pop %v1966
        %v1968 = vmul.f32 %v1965, 1.442695
        %v1969 = vpow.pop %v1968
        %v1970 = vsel %vm1122, %v1967, 0.0
        %1971 = vadd.xlane.f32.xlu0 %v1970
        %v1972 = vpop.xlane.xlu0 %1971
        %v1973 = vsel %vm1122, %v1969, 0.0
        %1974 = vadd.xlane.f32.xlu0 %v1973
        %v1975 = vpop.xlane.xlu0 %1974
        %v1976 = vrcp.pop %v1972
        %v1977 = vrcp.pop %v1975
        %v1978 = vmul.f32 %v1967, %v1976
        %v1979 = vmul.f32 %v1969, %v1977
        %1980 = vrot.lane.b32.xlu0 %v1109, 48
        %v1981 = vpop.permute.xlu0 %1980
        %v1984 = vsel %vm1122, %v1978, 0
        %1986 = vmatprep.subr.mxu0 0.0
        %1987 = vmatpush1.msra.mxu0 %v1981
        %1988 = vmatprep.subr.mxu0 0.0
        %1989 = vmatpush1.msra.mxu0 0.0
        %1990 = vmatprep.subr.mxu0 0.0
        %1991 = vmatpush1.msra.mxu0 0.0
        %1992 = vmatprep.subr.mxu0 0.0
        %1993 = vmatpush1.msra.mxu0 0.0
        %1994 = vmatprep.subr.mxu0 0.0
        %1995 = vmatpush1.msra.mxu0 0.0
        %1996 = vmatprep.subr.mxu0 0.0
        %1997 = vmatpush1.msra.mxu0 0.0
        %1998 = vmatprep.subr.mxu0 0.0
        %1999 = vmatpush1.msra.mxu0 0.0
        %2000 = vmatprep.subr.mxu0 0.0
        %2001 = vmatpush1.msra.mxu0 0.0
        %2002 = vmatprep.subr.mxu0 0.0
        %2003 = vmatpush1.msra.mxu0 0.0
        %2004 = vmatprep.subr.mxu0 0.0
        %2005 = vmatpush1.msra.mxu0 0.0
        %2006 = vmatprep.subr.mxu0 0.0
        %2007 = vmatpush1.msra.mxu0 0.0
        %2008 = vmatprep.subr.mxu0 0.0
        %2009 = vmatpush1.msra.mxu0 0.0
        %2010 = vmatprep.subr.mxu0 0.0
        %2011 = vmatpush1.msra.mxu0 0.0
        %2012 = vmatprep.subr.mxu0 0.0
        %2013 = vmatpush1.msra.mxu0 0.0
        %2014 = vmatprep.subr.mxu0 0.0
        %2015 = vmatpush1.msra.mxu0 0.0
        %2016 = vmatprep.subr.mxu0 0.0
        %2017 = vmatpush1.msra.mxu0 0.0
        %2018 = vmatprep.subr.mxu0 0.0
        %2019 = vmatpush1.msra.mxu0 0.0
        %2020 = vmatprep.subr.mxu0 0.0
        %2021 = vmatpush1.msra.mxu0 0.0
        %2022 = vmatprep.subr.mxu0 0.0
        %2023 = vmatpush1.msra.mxu0 0.0
        %2024 = vmatprep.subr.mxu0 0.0
        %2025 = vmatpush1.msra.mxu0 0.0
        %2026 = vmatprep.subr.mxu0 0.0
        %2027 = vmatpush1.msra.mxu0 0.0
        %2028 = vmatprep.subr.mxu0 0.0
        %2029 = vmatpush1.msra.mxu0 0.0
        %2030 = vmatprep.subr.mxu0 0.0
        %2031 = vmatpush1.msra.mxu0 0.0
        %2032 = vmatprep.subr.mxu0 0.0
        %2033 = vmatpush1.msra.mxu0 0.0
        %2034 = vmatprep.subr.mxu0 0.0
        %2035 = vmatpush1.msra.mxu0 0.0
        %2036 = vmatprep.subr.mxu0 0.0
        %2037 = vmatpush1.msra.mxu0 0.0
        %2038 = vmatprep.subr.mxu0 0.0
        %2039 = vmatpush1.msra.mxu0 0.0
        %2040 = vmatprep.subr.mxu0 0.0
        %2041 = vmatpush1.msra.mxu0 0.0
        %2042 = vmatprep.subr.mxu0 0.0
        %2043 = vmatpush1.msra.mxu0 0.0
        %2044 = vmatprep.subr.mxu0 0.0
        %2045 = vmatpush1.msra.mxu0 0.0
        %2046 = vmatprep.subr.mxu0 0.0
        %2047 = vmatpush1.msra.mxu0 0.0
        %2048 = vmatprep.subr.mxu0 0.0
        %2049 = vmatpush1.msra.mxu0 0.0
        %2050 = vmatprep.mubr.f32.mxu0 0.0
        %2051 = vmatmul.mubr.f32.gmra.mrb[0].mxu0 %v1984
        %v2052 = vpop.f32.mrb[0].mxu0
        %v2053 = vadd.f32 0.0, %v2052
        %v2054 = vpop.f32.mrb[0].mxu0
        %2055 = vdwg.mxu0
        %2056 = vrot.lane.b32.xlu0 %v1114, 48
        %v2057 = vpop.permute.xlu0 %2056
        %v2060 = vsel %vm1122, %v1979, 0
        %2062 = vmatprep.subr.mxu0 0.0
        %2063 = vmatpush1.msra.mxu0 %v2057
        %2064 = vmatprep.subr.mxu0 0.0
        %2065 = vmatpush1.msra.mxu0 0.0
        %2066 = vmatprep.subr.mxu0 0.0
        %2067 = vmatpush1.msra.mxu0 0.0
        %2068 = vmatprep.subr.mxu0 0.0
        %2069 = vmatpush1.msra.mxu0 0.0
        %2070 = vmatprep.subr.mxu0 0.0
        %2071 = vmatpush1.msra.mxu0 0.0
        %2072 = vmatprep.subr.mxu0 0.0
        %2073 = vmatpush1.msra.mxu0 0.0
        %2074 = vmatprep.subr.mxu0 0.0
        %2075 = vmatpush1.msra.mxu0 0.0
        %2076 = vmatprep.subr.mxu0 0.0
        %2077 = vmatpush1.msra.mxu0 0.0
        %2078 = vmatprep.subr.mxu0 0.0
        %2079 = vmatpush1.msra.mxu0 0.0
        %2080 = vmatprep.subr.mxu0 0.0
        %2081 = vmatpush1.msra.mxu0 0.0
        %2082 = vmatprep.subr.mxu0 0.0
        %2083 = vmatpush1.msra.mxu0 0.0
        %2084 = vmatprep.subr.mxu0 0.0
        %2085 = vmatpush1.msra.mxu0 0.0
        %2086 = vmatprep.subr.mxu0 0.0
        %2087 = vmatpush1.msra.mxu0 0.0
        %2088 = vmatprep.subr.mxu0 0.0
        %2089 = vmatpush1.msra.mxu0 0.0
        %2090 = vmatprep.subr.mxu0 0.0
        %2091 = vmatpush1.msra.mxu0 0.0
        %2092 = vmatprep.subr.mxu0 0.0
        %2093 = vmatpush1.msra.mxu0 0.0
        %2094 = vmatprep.subr.mxu0 0.0
        %2095 = vmatpush1.msra.mxu0 0.0
        %2096 = vmatprep.subr.mxu0 0.0
        %2097 = vmatpush1.msra.mxu0 0.0
        %2098 = vmatprep.subr.mxu0 0.0
        %2099 = vmatpush1.msra.mxu0 0.0
        %2100 = vmatprep.subr.mxu0 0.0
        %2101 = vmatpush1.msra.mxu0 0.0
        %2102 = vmatprep.subr.mxu0 0.0
        %2103 = vmatpush1.msra.mxu0 0.0
        %2104 = vmatprep.subr.mxu0 0.0
        %2105 = vmatpush1.msra.mxu0 0.0
        %2106 = vmatprep.subr.mxu0 0.0
        %2107 = vmatpush1.msra.mxu0 0.0
        %2108 = vmatprep.subr.mxu0 0.0
        %2109 = vmatpush1.msra.mxu0 0.0
        %2110 = vmatprep.subr.mxu0 0.0
        %2111 = vmatpush1.msra.mxu0 0.0
        %2112 = vmatprep.subr.mxu0 0.0
        %2113 = vmatpush1.msra.mxu0 0.0
        %2114 = vmatprep.subr.mxu0 0.0
        %2115 = vmatpush1.msra.mxu0 0.0
        %2116 = vmatprep.subr.mxu0 0.0
        %2117 = vmatpush1.msra.mxu0 0.0
        %2118 = vmatprep.subr.mxu0 0.0
        %2119 = vmatpush1.msra.mxu0 0.0
        %2120 = vmatprep.subr.mxu0 0.0
        %2121 = vmatpush1.msra.mxu0 0.0
        %2122 = vmatprep.subr.mxu0 0.0
        %2123 = vmatpush1.msra.mxu0 0.0
        %2124 = vmatprep.subr.mxu0 0.0
        %2125 = vmatpush1.msra.mxu0 0.0
        %2126 = vmatprep.mubr.f32.mxu0 0.0
        %2127 = vmatmul.mubr.f32.gmra.mrb[0].mxu0 %v2060
        %v2128 = vpop.f32.mrb[0].mxu0
        %v2129 = vadd.f32 0.0, %v2128
        %v2130 = vpop.f32.mrb[0].mxu0
        %2131 = vdwg.mxu0
        %2132 = vrot.lane.b32.xlu0 %v1109, 104
        %v2133 = vpop.permute.xlu0 %2132
        %2134 = vrot.lane.b32.xlu0 %v1109, 72
        %v2135 = vpop.permute.xlu0 %2134
        %v2136 = vsel %vm1122, %v2133, 0
        %v2138 = vsel %vm1122, %v2135, 0
        %2140 = vmatprep.subr.mxu0 0.0
        %2141 = vmatpush1.xpose.msra.mxu0 %v2138
        %2142 = vmatprep.subr.mxu0 0.0
        %2143 = vmatpush1.xpose.msra.mxu0 0.0
        %2144 = vmatprep.subr.mxu0 0.0
        %2145 = vmatpush1.xpose.msra.mxu0 0.0
        %2146 = vmatprep.subr.mxu0 0.0
        %2147 = vmatpush1.xpose.msra.mxu0 0.0
        %2148 = vmatprep.subr.mxu0 0.0
        %2149 = vmatpush1.xpose.msra.mxu0 0.0
        %2150 = vmatprep.subr.mxu0 0.0
        %2151 = vmatpush1.xpose.msra.mxu0 0.0
        %2152 = vmatprep.subr.mxu0 0.0
        %2153 = vmatpush1.xpose.msra.mxu0 0.0
        %2154 = vmatprep.subr.mxu0 0.0
        %2155 = vmatpush1.xpose.msra.mxu0 0.0
        %2156 = vmatprep.subr.mxu0 0.0
        %2157 = vmatpush1.xpose.msra.mxu0 0.0
        %2158 = vmatprep.subr.mxu0 0.0
        %2159 = vmatpush1.xpose.msra.mxu0 0.0
        %2160 = vmatprep.subr.mxu0 0.0
        %2161 = vmatpush1.xpose.msra.mxu0 0.0
        %2162 = vmatprep.subr.mxu0 0.0
        %2163 = vmatpush1.xpose.msra.mxu0 0.0
        %2164 = vmatprep.subr.mxu0 0.0
        %2165 = vmatpush1.xpose.msra.mxu0 0.0
        %2166 = vmatprep.subr.mxu0 0.0
        %2167 = vmatpush1.xpose.msra.mxu0 0.0
        %2168 = vmatprep.subr.mxu0 0.0
        %2169 = vmatpush1.xpose.msra.mxu0 0.0
        %2170 = vmatprep.subr.mxu0 0.0
        %2171 = vmatpush1.xpose.msra.mxu0 0.0
        %2172 = vmatprep.subr.mxu0 0.0
        %2173 = vmatpush1.xpose.msra.mxu0 0.0
        %2174 = vmatprep.subr.mxu0 0.0
        %2175 = vmatpush1.xpose.msra.mxu0 0.0
        %2176 = vmatprep.subr.mxu0 0.0
        %2177 = vmatpush1.xpose.msra.mxu0 0.0
        %2178 = vmatprep.subr.mxu0 0.0
        %2179 = vmatpush1.xpose.msra.mxu0 0.0
        %2180 = vmatprep.subr.mxu0 0.0
        %2181 = vmatpush1.xpose.msra.mxu0 0.0
        %2182 = vmatprep.subr.mxu0 0.0
        %2183 = vmatpush1.xpose.msra.mxu0 0.0
        %2184 = vmatprep.subr.mxu0 0.0
        %2185 = vmatpush1.xpose.msra.mxu0 0.0
        %2186 = vmatprep.subr.mxu0 0.0
        %2187 = vmatpush1.xpose.msra.mxu0 0.0
        %2188 = vmatprep.subr.mxu0 0.0
        %2189 = vmatpush1.xpose.msra.mxu0 0.0
        %2190 = vmatprep.subr.mxu0 0.0
        %2191 = vmatpush1.xpose.msra.mxu0 0.0
        %2192 = vmatprep.subr.mxu0 0.0
        %2193 = vmatpush1.xpose.msra.mxu0 0.0
        %2194 = vmatprep.subr.mxu0 0.0
        %2195 = vmatpush1.xpose.msra.mxu0 0.0
        %2196 = vmatprep.subr.mxu0 0.0
        %2197 = vmatpush1.xpose.msra.mxu0 0.0
        %2198 = vmatprep.subr.mxu0 0.0
        %2199 = vmatpush1.xpose.msra.mxu0 0.0
        %2200 = vmatprep.subr.mxu0 0.0
        %2201 = vmatpush1.xpose.msra.mxu0 0.0
        %2202 = vmatprep.subr.mxu0 0.0
        %2203 = vmatpush1.xpose.msra.mxu0 0.0
        %2204 = vmatprep.mubr.f32.mxu0 0.0
        %2205 = vmatmul.mubr.f32.gmra.mrb[0].mxu0 %v2136
        %v2206 = vpop.f32.mrb[0].mxu0
        %v2207 = vadd.f32 0.0, %v2206
        %v2208 = vpop.f32.mrb[0].mxu0
        %2209 = vdwg.mxu0
        %2210 = vrot.lane.b32.xlu0 %v1114, 104
        %v2211 = vpop.permute.xlu0 %2210
        %2212 = vrot.lane.b32.xlu0 %v1114, 72
        %v2213 = vpop.permute.xlu0 %2212
        %v2214 = vsel %vm1122, %v2211, 0
        %v2216 = vsel %vm1122, %v2213, 0
        %2218 = vmatprep.subr.mxu0 0.0
        %2219 = vmatpush1.xpose.msra.mxu0 %v2216
        %2220 = vmatprep.subr.mxu0 0.0
        %2221 = vmatpush1.xpose.msra.mxu0 0.0
        %2222 = vmatprep.subr.mxu0 0.0
        %2223 = vmatpush1.xpose.msra.mxu0 0.0
        %2224 = vmatprep.subr.mxu0 0.0
        %2225 = vmatpush1.xpose.msra.mxu0 0.0
        %2226 = vmatprep.subr.mxu0 0.0
        %2227 = vmatpush1.xpose.msra.mxu0 0.0
        %2228 = vmatprep.subr.mxu0 0.0
        %2229 = vmatpush1.xpose.msra.mxu0 0.0
        %2230 = vmatprep.subr.mxu0 0.0
        %2231 = vmatpush1.xpose.msra.mxu0 0.0
        %2232 = vmatprep.subr.mxu0 0.0
        %2233 = vmatpush1.xpose.msra.mxu0 0.0
        %2234 = vmatprep.subr.mxu0 0.0
        %2235 = vmatpush1.xpose.msra.mxu0 0.0
        %2236 = vmatprep.subr.mxu0 0.0
        %2237 = vmatpush1.xpose.msra.mxu0 0.0
        %2238 = vmatprep.subr.mxu0 0.0
        %2239 = vmatpush1.xpose.msra.mxu0 0.0
        %2240 = vmatprep.subr.mxu0 0.0
        %2241 = vmatpush1.xpose.msra.mxu0 0.0
        %2242 = vmatprep.subr.mxu0 0.0
        %2243 = vmatpush1.xpose.msra.mxu0 0.0
        %2244 = vmatprep.subr.mxu0 0.0
        %2245 = vmatpush1.xpose.msra.mxu0 0.0
        %2246 = vmatprep.subr.mxu0 0.0
        %2247 = vmatpush1.xpose.msra.mxu0 0.0
        %2248 = vmatprep.subr.mxu0 0.0
        %2249 = vmatpush1.xpose.msra.mxu0 0.0
        %2250 = vmatprep.subr.mxu0 0.0
        %2251 = vmatpush1.xpose.msra.mxu0 0.0
        %2252 = vmatprep.subr.mxu0 0.0
        %2253 = vmatpush1.xpose.msra.mxu0 0.0
        %2254 = vmatprep.subr.mxu0 0.0
        %2255 = vmatpush1.xpose.msra.mxu0 0.0
        %2256 = vmatprep.subr.mxu0 0.0
        %2257 = vmatpush1.xpose.msra.mxu0 0.0
        %2258 = vmatprep.subr.mxu0 0.0
        %2259 = vmatpush1.xpose.msra.mxu0 0.0
        %2260 = vmatprep.subr.mxu0 0.0
        %2261 = vmatpush1.xpose.msra.mxu0 0.0
        %2262 = vmatprep.subr.mxu0 0.0
        %2263 = vmatpush1.xpose.msra.mxu0 0.0
        %2264 = vmatprep.subr.mxu0 0.0
        %2265 = vmatpush1.xpose.msra.mxu0 0.0
        %2266 = vmatprep.subr.mxu0 0.0
        %2267 = vmatpush1.xpose.msra.mxu0 0.0
        %2268 = vmatprep.subr.mxu0 0.0
        %2269 = vmatpush1.xpose.msra.mxu0 0.0
        %2270 = vmatprep.subr.mxu0 0.0
        %2271 = vmatpush1.xpose.msra.mxu0 0.0
        %2272 = vmatprep.subr.mxu0 0.0
        %2273 = vmatpush1.xpose.msra.mxu0 0.0
        %2274 = vmatprep.subr.mxu0 0.0
        %2275 = vmatpush1.xpose.msra.mxu0 0.0
        %2276 = vmatprep.subr.mxu0 0.0
        %2277 = vmatpush1.xpose.msra.mxu0 0.0
        %2278 = vmatprep.subr.mxu0 0.0
        %2279 = vmatpush1.xpose.msra.mxu0 0.0
        %2280 = vmatprep.subr.mxu0 0.0
        %2281 = vmatpush1.xpose.msra.mxu0 0.0
        %2282 = vmatprep.mubr.f32.mxu0 0.0
        %2283 = vmatmul.mubr.f32.gmra.mrb[0].mxu0 %v2214
        %v2284 = vpop.f32.mrb[0].mxu0
        %v2285 = vadd.f32 0.0, %v2284
        %v2286 = vpop.f32.mrb[0].mxu0
        %2287 = vdwg.mxu0
        %v2288 = vmul.f32 %v2207, 0.35355338
        %v2289 = vmul.f32 %v2285, 0.35355338
        %v2290 = vadd.f32 %v2288, %v1281
        %v2291 = vadd.f32 %v2289, %v1285
        %v2292 = vsel %vm1122, %v2290, -inf
        %2293 = vmax.xlane.f32.xlu0 %v2292
        %v2294 = vpop.xlane.xlu0 %2293
        %v2295 = vsel %vm1122, %v2291, -inf
        %2296 = vmax.xlane.f32.xlu0 %v2295
        %v2297 = vpop.xlane.xlu0 %2296
        %v2298 = vsub.f32 %v2290, %v2294
        %v2299 = vsub.f32 %v2291, %v2297
        %v2300 = vmul.f32 %v2298, 1.442695
        %v2301 = vpow.pop %v2300
        %v2302 = vmul.f32 %v2299, 1.442695
        %v2303 = vpow.pop %v2302
        %v2304 = vsel %vm1122, %v2301, 0.0
        %2305 = vadd.xlane.f32.xlu0 %v2304
        %v2306 = vpop.xlane.xlu0 %2305
        %v2307 = vsel %vm1122, %v2303, 0.0
        %2308 = vadd.xlane.f32.xlu0 %v2307
        %v2309 = vpop.xlane.xlu0 %2308
        %v2310 = vrcp.pop %v2306
        %v2311 = vrcp.pop %v2309
        %v2312 = vmul.f32 %v2301, %v2310
        %v2313 = vmul.f32 %v2303, %v2311
        %2314 = vrot.lane.b32.xlu0 %v1109, 40
        %v2315 = vpop.permute.xlu0 %2314
        %v2318 = vsel %vm1122, %v2312, 0
        %2320 = vmatprep.subr.mxu0 0.0
        %2321 = vmatpush1.msra.mxu0 %v2315
        %2322 = vmatprep.subr.mxu0 0.0
        %2323 = vmatpush1.msra.mxu0 0.0
        %2324 = vmatprep.subr.mxu0 0.0
        %2325 = vmatpush1.msra.mxu0 0.0
        %2326 = vmatprep.subr.mxu0 0.0
        %2327 = vmatpush1.msra.mxu0 0.0
        %2328 = vmatprep.subr.mxu0 0.0
        %2329 = vmatpush1.msra.mxu0 0.0
        %2330 = vmatprep.subr.mxu0 0.0
        %2331 = vmatpush1.msra.mxu0 0.0
        %2332 = vmatprep.subr.mxu0 0.0
        %2333 = vmatpush1.msra.mxu0 0.0
        %2334 = vmatprep.subr.mxu0 0.0
        %2335 = vmatpush1.msra.mxu0 0.0
        %2336 = vmatprep.subr.mxu0 0.0
        %2337 = vmatpush1.msra.mxu0 0.0
        %2338 = vmatprep.subr.mxu0 0.0
        %2339 = vmatpush1.msra.mxu0 0.0
        %2340 = vmatprep.subr.mxu0 0.0
        %2341 = vmatpush1.msra.mxu0 0.0
        %2342 = vmatprep.subr.mxu0 0.0
        %2343 = vmatpush1.msra.mxu0 0.0
        %2344 = vmatprep.subr.mxu0 0.0
        %2345 = vmatpush1.msra.mxu0 0.0
        %2346 = vmatprep.subr.mxu0 0.0
        %2347 = vmatpush1.msra.mxu0 0.0
        %2348 = vmatprep.subr.mxu0 0.0
        %2349 = vmatpush1.msra.mxu0 0.0
        %2350 = vmatprep.subr.mxu0 0.0
        %2351 = vmatpush1.msra.mxu0 0.0
        %2352 = vmatprep.subr.mxu0 0.0
        %2353 = vmatpush1.msra.mxu0 0.0
        %2354 = vmatprep.subr.mxu0 0.0
        %2355 = vmatpush1.msra.mxu0 0.0
        %2356 = vmatprep.subr.mxu0 0.0
        %2357 = vmatpush1.msra.mxu0 0.0
        %2358 = vmatprep.subr.mxu0 0.0
        %2359 = vmatpush1.msra.mxu0 0.0
        %2360 = vmatprep.subr.mxu0 0.0
        %2361 = vmatpush1.msra.mxu0 0.0
        %2362 = vmatprep.subr.mxu0 0.0
        %2363 = vmatpush1.msra.mxu0 0.0
        %2364 = vmatprep.subr.mxu0 0.0
        %2365 = vmatpush1.msra.mxu0 0.0
        %2366 = vmatprep.subr.mxu0 0.0
        %2367 = vmatpush1.msra.mxu0 0.0
        %2368 = vmatprep.subr.mxu0 0.0
        %2369 = vmatpush1.msra.mxu0 0.0
        %2370 = vmatprep.subr.mxu0 0.0
        %2371 = vmatpush1.msra.mxu0 0.0
        %2372 = vmatprep.subr.mxu0 0.0
        %2373 = vmatpush1.msra.mxu0 0.0
        %2374 = vmatprep.subr.mxu0 0.0
        %2375 = vmatpush1.msra.mxu0 0.0
        %2376 = vmatprep.subr.mxu0 0.0
        %2377 = vmatpush1.msra.mxu0 0.0
        %2378 = vmatprep.subr.mxu0 0.0
        %2379 = vmatpush1.msra.mxu0 0.0
        %2380 = vmatprep.subr.mxu0 0.0
        %2381 = vmatpush1.msra.mxu0 0.0
        %2382 = vmatprep.subr.mxu0 0.0
        %2383 = vmatpush1.msra.mxu0 0.0
        %2384 = vmatprep.mubr.f32.mxu0 0.0
        %2385 = vmatmul.mubr.f32.gmra.mrb[0].mxu0 %v2318
        %v2386 = vpop.f32.mrb[0].mxu0
        %v2387 = vadd.f32 0.0, %v2386
        %v2388 = vpop.f32.mrb[0].mxu0
        %2389 = vdwg.mxu0
        %2390 = vrot.lane.b32.xlu0 %v1114, 40
        %v2391 = vpop.permute.xlu0 %2390
        %v2394 = vsel %vm1122, %v2313, 0
        %2396 = vmatprep.subr.mxu0 0.0
        %2397 = vmatpush1.msra.mxu0 %v2391
        %2398 = vmatprep.subr.mxu0 0.0
        %2399 = vmatpush1.msra.mxu0 0.0
        %2400 = vmatprep.subr.mxu0 0.0
        %2401 = vmatpush1.msra.mxu0 0.0
        %2402 = vmatprep.subr.mxu0 0.0
        %2403 = vmatpush1.msra.mxu0 0.0
        %2404 = vmatprep.subr.mxu0 0.0
        %2405 = vmatpush1.msra.mxu0 0.0
        %2406 = vmatprep.subr.mxu0 0.0
        %2407 = vmatpush1.msra.mxu0 0.0
        %2408 = vmatprep.subr.mxu0 0.0
        %2409 = vmatpush1.msra.mxu0 0.0
        %2410 = vmatprep.subr.mxu0 0.0
        %2411 = vmatpush1.msra.mxu0 0.0
        %2412 = vmatprep.subr.mxu0 0.0
        %2413 = vmatpush1.msra.mxu0 0.0
        %2414 = vmatprep.subr.mxu0 0.0
        %2415 = vmatpush1.msra.mxu0 0.0
        %2416 = vmatprep.subr.mxu0 0.0
        %2417 = vmatpush1.msra.mxu0 0.0
        %2418 = vmatprep.subr.mxu0 0.0
        %2419 = vmatpush1.msra.mxu0 0.0
        %2420 = vmatprep.subr.mxu0 0.0
        %2421 = vmatpush1.msra.mxu0 0.0
        %2422 = vmatprep.subr.mxu0 0.0
        %2423 = vmatpush1.msra.mxu0 0.0
        %2424 = vmatprep.subr.mxu0 0.0
        %2425 = vmatpush1.msra.mxu0 0.0
        %2426 = vmatprep.subr.mxu0 0.0
        %2427 = vmatpush1.msra.mxu0 0.0
        %2428 = vmatprep.subr.mxu0 0.0
        %2429 = vmatpush1.msra.mxu0 0.0
        %2430 = vmatprep.subr.mxu0 0.0
        %2431 = vmatpush1.msra.mxu0 0.0
        %2432 = vmatprep.subr.mxu0 0.0
        %2433 = vmatpush1.msra.mxu0 0.0
        %2434 = vmatprep.subr.mxu0 0.0
        %2435 = vmatpush1.msra.mxu0 0.0
        %2436 = vmatprep.subr.mxu0 0.0
        %2437 = vmatpush1.msra.mxu0 0.0
        %2438 = vmatprep.subr.mxu0 0.0
        %2439 = vmatpush1.msra.mxu0 0.0
        %2440 = vmatprep.subr.mxu0 0.0
        %2441 = vmatpush1.msra.mxu0 0.0
        %2442 = vmatprep.subr.mxu0 0.0
        %2443 = vmatpush1.msra.mxu0 0.0
        %2444 = vmatprep.subr.mxu0 0.0
        %2445 = vmatpush1.msra.mxu0 0.0
        %2446 = vmatprep.subr.mxu0 0.0
        %2447 = vmatpush1.msra.mxu0 0.0
        %2448 = vmatprep.subr.mxu0 0.0
        %2449 = vmatpush1.msra.mxu0 0.0
        %2450 = vmatprep.subr.mxu0 0.0
        %2451 = vmatpush1.msra.mxu0 0.0
        %2452 = vmatprep.subr.mxu0 0.0
        %2453 = vmatpush1.msra.mxu0 0.0
        %2454 = vmatprep.subr.mxu0 0.0
        %2455 = vmatpush1.msra.mxu0 0.0
        %2456 = vmatprep.subr.mxu0 0.0
        %2457 = vmatpush1.msra.mxu0 0.0
        %2458 = vmatprep.subr.mxu0 0.0
        %2459 = vmatpush1.msra.mxu0 0.0
        %2460 = vmatprep.mubr.f32.mxu0 0.0
        %2461 = vmatmul.mubr.f32.gmra.mrb[0].mxu0 %v2394
        %v2462 = vpop.f32.mrb[0].mxu0
        %v2463 = vadd.f32 0.0, %v2462
        %v2464 = vpop.f32.mrb[0].mxu0
        %2465 = vdwg.mxu0
        %2468 = vrot.lane.b32.xlu0 %v1719, 8
        %v2469 = vpop.permute.xlu0 %2468
        %2470 = vrot.lane.b32.xlu0 %v1795, 8
        %v2471 = vpop.permute.xlu0 %2470
        %2476 = vrot.lane.b32.xlu0 %v2053, 16
        %v2477 = vpop.permute.xlu0 %2476
        %2478 = vrot.lane.b32.xlu0 %v2129, 16
        %v2479 = vpop.permute.xlu0 %2478
        %2484 = vrot.lane.b32.xlu0 %v2387, 24
        %v2485 = vpop.permute.xlu0 %2484
        %2486 = vrot.lane.b32.xlu0 %v2463, 24
        %v2487 = vpop.permute.xlu0 %2486
        %v2490 = vsel %vm1122, %v1385, %v2469
        %v2491 = vsel %vm1122, %v1461, %v2471
        %vm2492 = vcmask 130048
        %v2493 = vsel %vm2492, %v2490, %v2477
        %v2494 = vsel %vm2492, %v2491, %v2479
        %vm2495 = vcmask 195584
        %v2496 = vsel %vm2495, %v2493, %v2485
        %v2497 = vsel %vm2495, %v2494, %v2487
        %v2498 = vld [vmem:[%s957] sm:$0xff]
        %v2499 = vld [vmem:[%s957 + $0x8] sm:$0xff]
        %v2500 = vld [vmem:[%s957 + $0x10] sm:$0xff]
        %v2501 = vld [vmem:[%s957 + $0x18] sm:$0xff]
        %v2502 = vld [vmem:[%s797] sm:$0x1]
        %v2504 = vlaneseq
        %v2505 = vshrl.u32 %v2504, 7
        %v2506 = vsub.s32 0, %v2505
        %v2507 = vrot.slane %v2502, %v2506
        %v2510 = vsel %vm1035, %v2496, 0
        %v2513 = vsel %vm1035, %v2497, 0
        %2515 = vmatprep.subr.mxu0 0.0
        %2516 = vmatpush1.msra.mxu0 %v2498
        %2517 = vmatprep.subr.mxu0 0.0
        %2518 = vmatpush1.msra.mxu0 %v2499
        %2519 = vmatprep.subr.mxu0 0.0
        %2520 = vmatpush1.msra.mxu0 %v2500
        %2521 = vmatprep.subr.mxu0 0.0
        %2522 = vmatpush1.msra.mxu0 %v2501
        %2523 = vmatprep.subr.mxu0 0.0
        %2524 = vmatpush1.msra.mxu0 0.0
        %2525 = vmatprep.subr.mxu0 0.0
        %2526 = vmatpush1.msra.mxu0 0.0
        %2527 = vmatprep.subr.mxu0 0.0
        %2528 = vmatpush1.msra.mxu0 0.0
        %2529 = vmatprep.subr.mxu0 0.0
        %2530 = vmatpush1.msra.mxu0 0.0
        %2531 = vmatprep.subr.mxu0 0.0
        %2532 = vmatpush1.msra.mxu0 0.0
        %2533 = vmatprep.subr.mxu0 0.0
        %2534 = vmatpush1.msra.mxu0 0.0
        %2535 = vmatprep.subr.mxu0 0.0
        %2536 = vmatpush1.msra.mxu0 0.0
        %2537 = vmatprep.subr.mxu0 0.0
        %2538 = vmatpush1.msra.mxu0 0.0
        %2539 = vmatprep.subr.mxu0 0.0
        %2540 = vmatpush1.msra.mxu0 0.0
        %2541 = vmatprep.subr.mxu0 0.0
        %2542 = vmatpush1.msra.mxu0 0.0
        %2543 = vmatprep.subr.mxu0 0.0
        %2544 = vmatpush1.msra.mxu0 0.0
        %2545 = vmatprep.subr.mxu0 0.0
        %2546 = vmatpush1.msra.mxu0 0.0
        %2547 = vmatprep.subr.mxu0 0.0
        %2548 = vmatpush1.msra.mxu0 0.0
        %2549 = vmatprep.subr.mxu0 0.0
        %2550 = vmatpush1.msra.mxu0 0.0
        %2551 = vmatprep.subr.mxu0 0.0
        %2552 = vmatpush1.msra.mxu0 0.0
        %2553 = vmatprep.subr.mxu0 0.0
        %2554 = vmatpush1.msra.mxu0 0.0
        %2555 = vmatprep.subr.mxu0 0.0
        %2556 = vmatpush1.msra.mxu0 0.0
        %2557 = vmatprep.subr.mxu0 0.0
        %2558 = vmatpush1.msra.mxu0 0.0
        %2559 = vmatprep.subr.mxu0 0.0
        %2560 = vmatpush1.msra.mxu0 0.0
        %2561 = vmatprep.subr.mxu0 0.0
        %2562 = vmatpush1.msra.mxu0 0.0
        %2563 = vmatprep.subr.mxu0 0.0
        %2564 = vmatpush1.msra.mxu0 0.0
        %2565 = vmatprep.subr.mxu0 0.0
        %2566 = vmatpush1.msra.mxu0 0.0
        %2567 = vmatprep.subr.mxu0 0.0
        %2568 = vmatpush1.msra.mxu0 0.0
        %2569 = vmatprep.subr.mxu0 0.0
        %2570 = vmatpush1.msra.mxu0 0.0
        %2571 = vmatprep.subr.mxu0 0.0
        %2572 = vmatpush1.msra.mxu0 0.0
        %2573 = vmatprep.subr.mxu0 0.0
        %2574 = vmatpush1.msra.mxu0 0.0
        %2575 = vmatprep.subr.mxu0 0.0
        %2576 = vmatpush1.msra.mxu0 0.0
        %2577 = vmatprep.subr.mxu0 0.0
        %2578 = vmatpush1.msra.mxu0 0.0
        %2579 = vmatprep.mubr.f32.mxu0 0.0
        %2580 = vmatmul.mubr.f32.gmra.mrb[0].mxu0 %v2510
        %v2581 = vpop.f32.mrb[0].mxu0
        %v2582 = vadd.f32 %v2507, %v2581
        %v2583 = vpop.f32.mrb[0].mxu0
        %2584 = vmatprep.mubr.f32.mxu0 0.0
        %2585 = vmatmul.mubr.f32.gmra.mrb[0].mxu0 %v2513
        %v2586 = vpop.f32.mrb[0].mxu0
        %v2587 = vadd.f32 %v2507, %v2586
        %v2588 = vpop.f32.mrb[0].mxu0
        %2589 = vdwg.mxu0
        %v2590 = vadd.f32 %v1022, %v2582
        %v2591 = vadd.f32 %v1023, %v2587
        %v2592 = vld [vmem:[%s805] sm:$0x1]
        %v2593 = vld [vmem:[%s813] sm:$0x1]
        %v2594 = vsel %vm1035, %v2590, 0.0
        %2595 = vadd.xlane.f32.xlu0 %v2594
        %v2596 = vpop.xlane.xlu0 %2595
        %v2597 = vsel %vm1035, %v2591, 0.0
        %2598 = vadd.xlane.f32.xlu0 %v2597
        %v2599 = vpop.xlane.xlu0 %2598
        %v2600 = vrcp.pop 32.0
        %v2601 = vmul.f32 %v2596, %v2600
        %v2602 = vmul.f32 %v2599, %v2600
        %v2603 = vsub.f32 %v2590, %v2601
        %v2604 = vsub.f32 %v2591, %v2602
        %v2605 = vmul.f32 %v2603, %v2603
        %v2606 = vmul.f32 %v2604, %v2604
        %v2607 = vsel %vm1035, %v2605, 0.0
        %2608 = vadd.xlane.f32.xlu0 %v2607
        %v2609 = vpop.xlane.xlu0 %2608
        %v2610 = vsel %vm1035, %v2606, 0.0
        %2611 = vadd.xlane.f32.xlu0 %v2610
        %v2612 = vpop.xlane.xlu0 %2611
        %v2613 = vmul.f32 %v2609, %v2600
        %v2614 = vmul.f32 %v2612, %v2600
        %v2615 = vadd.f32 %v2613, 1e-12
        %v2616 = vadd.f32 %v2614, 1e-12
        %v2617 = vrsqrt.pop %v2615
        %v2618 = vrsqrt.pop %v2616
        %v2619 = vmul.f32 %v2603, %v2617
        %v2620 = vmul.f32 %v2604, %v2618
        %v2622 = vlaneseq
        %v2623 = vshrl.u32 %v2622, 7
        %v2624 = vsub.s32 0, %v2623
        %v2625 = vrot.slane %v2592, %v2624
        %v2627 = vmul.f32 %v2619, %v2625
        %v2628 = vmul.f32 %v2620, %v2625
        %v2630 = vlaneseq
        %v2631 = vshrl.u32 %v2630, 7
        %v2632 = vsub.s32 0, %v2631
        %v2633 = vrot.slane %v2593, %v2632
        %v2635 = vadd.f32 %v2627, %v2633
        %v2636 = vadd.f32 %v2628, %v2633
        %v2637 = vld [vmem:[%s962] sm:$0xff]
        %v2638 = vld [vmem:[%s962 + $0x8] sm:$0xff]
        %v2639 = vld [vmem:[%s962 + $0x10] sm:$0xff]
        %v2640 = vld [vmem:[%s962 + $0x18] sm:$0xff]
        %v2641 = vld [vmem:[%s821] sm:$0x1]
        %v2643 = vlaneseq
        %v2644 = vshrl.u32 %v2643, 7
        %v2645 = vsub.s32 0, %v2644
        %v2646 = vrot.slane %v2641, %v2645
        %v2649 = vsel %vm1035, %v2635, 0
        %v2652 = vsel %vm1035, %v2636, 0
        %2654 = vmatprep.subr.mxu0 0.0
        %2655 = vmatpush1.msra.mxu0 %v2637
        %2656 = vmatprep.subr.mxu0 0.0
        %2657 = vmatpush1.msra.mxu0 %v2638
        %2658 = vmatprep.subr.mxu0 0.0
        %2659 = vmatpush1.msra.mxu0 %v2639
        %2660 = vmatprep.subr.mxu0 0.0
        %2661 = vmatpush1.msra.mxu0 %v2640
        %2662 = vmatprep.subr.mxu0 0.0
        %2663 = vmatpush1.msra.mxu0 0.0
        %2664 = vmatprep.subr.mxu0 0.0
        %2665 = vmatpush1.msra.mxu0 0.0
        %2666 = vmatprep.subr.mxu0 0.0
        %2667 = vmatpush1.msra.mxu0 0.0
        %2668 = vmatprep.subr.mxu0 0.0
        %2669 = vmatpush1.msra.mxu0 0.0
        %2670 = vmatprep.subr.mxu0 0.0
        %2671 = vmatpush1.msra.mxu0 0.0
        %2672 = vmatprep.subr.mxu0 0.0
        %2673 = vmatpush1.msra.mxu0 0.0
        %2674 = vmatprep.subr.mxu0 0.0
        %2675 = vmatpush1.msra.mxu0 0.0
        %2676 = vmatprep.subr.mxu0 0.0
        %2677 = vmatpush1.msra.mxu0 0.0
        %2678 = vmatprep.subr.mxu0 0.0
        %2679 = vmatpush1.msra.mxu0 0.0
        %2680 = vmatprep.subr.mxu0 0.0
        %2681 = vmatpush1.msra.mxu0 0.0
        %2682 = vmatprep.subr.mxu0 0.0
        %2683 = vmatpush1.msra.mxu0 0.0
        %2684 = vmatprep.subr.mxu0 0.0
        %2685 = vmatpush1.msra.mxu0 0.0
        %2686 = vmatprep.subr.mxu0 0.0
        %2687 = vmatpush1.msra.mxu0 0.0
        %2688 = vmatprep.subr.mxu0 0.0
        %2689 = vmatpush1.msra.mxu0 0.0
        %2690 = vmatprep.subr.mxu0 0.0
        %2691 = vmatpush1.msra.mxu0 0.0
        %2692 = vmatprep.subr.mxu0 0.0
        %2693 = vmatpush1.msra.mxu0 0.0
        %2694 = vmatprep.subr.mxu0 0.0
        %2695 = vmatpush1.msra.mxu0 0.0
        %2696 = vmatprep.subr.mxu0 0.0
        %2697 = vmatpush1.msra.mxu0 0.0
        %2698 = vmatprep.subr.mxu0 0.0
        %2699 = vmatpush1.msra.mxu0 0.0
        %2700 = vmatprep.subr.mxu0 0.0
        %2701 = vmatpush1.msra.mxu0 0.0
        %2702 = vmatprep.subr.mxu0 0.0
        %2703 = vmatpush1.msra.mxu0 0.0
        %2704 = vmatprep.subr.mxu0 0.0
        %2705 = vmatpush1.msra.mxu0 0.0
        %2706 = vmatprep.subr.mxu0 0.0
        %2707 = vmatpush1.msra.mxu0 0.0
        %2708 = vmatprep.subr.mxu0 0.0
        %2709 = vmatpush1.msra.mxu0 0.0
        %2710 = vmatprep.subr.mxu0 0.0
        %2711 = vmatpush1.msra.mxu0 0.0
        %2712 = vmatprep.subr.mxu0 0.0
        %2713 = vmatpush1.msra.mxu0 0.0
        %2714 = vmatprep.subr.mxu0 0.0
        %2715 = vmatpush1.msra.mxu0 0.0
        %2716 = vmatprep.subr.mxu0 0.0
        %2717 = vmatpush1.msra.mxu0 0.0
        %2718 = vmatprep.mubr.f32.mxu0 0.0
        %2719 = vmatmul.mubr.f32.gmra.mrb[0].mxu0 %v2649
        %v2720 = vpop.f32.mrb[0].mxu0
        %v2721 = vadd.f32 %v2646, %v2720
        %v2722 = vpop.f32.mrb[0].mxu0
        %2723 = vmatprep.mubr.f32.mxu0 0.0
        %2724 = vmatmul.mubr.f32.gmra.mrb[0].mxu0 %v2652
        %v2725 = vpop.f32.mrb[0].mxu0
        %v2726 = vadd.f32 %v2646, %v2725
        %v2727 = vpop.f32.mrb[0].mxu0
        %2728 = vdwg.mxu0
        %v2729 = vmul.f32 %v2721, 0.5
        %v2730 = vmul.f32 %v2726, 0.5
        %v2731 = vmul.f32 %v2721, 0.044715
        %v2732 = vmul.f32 %v2726, 0.044715
        %v2733 = vmul.f32 %v2731, %v2721
        %v2734 = vmul.f32 %v2732, %v2726
        %v2735 = vmul.f32 %v2733, %v2721
        %v2736 = vmul.f32 %v2734, %v2726
        %v2737 = vadd.f32 %v2721, %v2735
        %v2738 = vadd.f32 %v2726, %v2736
        %v2739 = vmul.f32 %v2737, 0.7978846
        %v2740 = vmul.f32 %v2738, 0.7978846
        %v2741 = vtanh.pop %v2739
        %v2742 = vtanh.pop %v2740
        %v2743 = vadd.f32 %v2741, 1.0
        %v2744 = vadd.f32 %v2742, 1.0
        %v2745 = vmul.f32 %v2729, %v2743
        %v2746 = vmul.f32 %v2730, %v2744
        %v2747 = vld [vmem:[%s967] sm:$0xff]
        %v2748 = vld [vmem:[%s967 + $0x8] sm:$0xff]
        %v2749 = vld [vmem:[%s967 + $0x10] sm:$0xff]
        %v2750 = vld [vmem:[%s967 + $0x18] sm:$0xff]
        %v2751 = vld [vmem:[%s967 + $0x20] sm:$0xff]
        %v2752 = vld [vmem:[%s967 + $0x28] sm:$0xff]
        %v2753 = vld [vmem:[%s967 + $0x30] sm:$0xff]
        %v2754 = vld [vmem:[%s967 + $0x38] sm:$0xff]
        %v2755 = vld [vmem:[%s829] sm:$0x1]
        %v2757 = vlaneseq
        %v2758 = vshrl.u32 %v2757, 7
        %v2759 = vsub.s32 0, %v2758
        %v2760 = vrot.slane %v2755, %v2759
        %vm2762 = vcmask 523264
        %v2764 = vsel %vm2762, %v2745, 0
        %v2767 = vsel %vm2762, %v2746, 0
        %2769 = vmatprep.subr.mxu0 0.0
        %2770 = vmatpush1.msra.mxu0 %v2747
        %2771 = vmatprep.subr.mxu0 0.0
        %2772 = vmatpush1.msra.mxu0 %v2748
        %2773 = vmatprep.subr.mxu0 0.0
        %2774 = vmatpush1.msra.mxu0 %v2749
        %2775 = vmatprep.subr.mxu0 0.0
        %2776 = vmatpush1.msra.mxu0 %v2750
        %2777 = vmatprep.subr.mxu0 0.0
        %2778 = vmatpush1.msra.mxu0 %v2751
        %2779 = vmatprep.subr.mxu0 0.0
        %2780 = vmatpush1.msra.mxu0 %v2752
        %2781 = vmatprep.subr.mxu0 0.0
        %2782 = vmatpush1.msra.mxu0 %v2753
        %2783 = vmatprep.subr.mxu0 0.0
        %2784 = vmatpush1.msra.mxu0 %v2754
        %2785 = vmatprep.subr.mxu0 0.0
        %2786 = vmatpush1.msra.mxu0 0.0
        %2787 = vmatprep.subr.mxu0 0.0
        %2788 = vmatpush1.msra.mxu0 0.0
        %2789 = vmatprep.subr.mxu0 0.0
        %2790 = vmatpush1.msra.mxu0 0.0
        %2791 = vmatprep.subr.mxu0 0.0
        %2792 = vmatpush1.msra.mxu0 0.0
        %2793 = vmatprep.subr.mxu0 0.0
        %2794 = vmatpush1.msra.mxu0 0.0
        %2795 = vmatprep.subr.mxu0 0.0
        %2796 = vmatpush1.msra.mxu0 0.0
        %2797 = vmatprep.subr.mxu0 0.0
        %2798 = vmatpush1.msra.mxu0 0.0
        %2799 = vmatprep.subr.mxu0 0.0
        %2800 = vmatpush1.msra.mxu0 0.0
        %2801 = vmatprep.subr.mxu0 0.0
        %2802 = vmatpush1.msra.mxu0 0.0
        %2803 = vmatprep.subr.mxu0 0.0
        %2804 = vmatpush1.msra.mxu0 0.0
        %2805 = vmatprep.subr.mxu0 0.0
        %2806 = vmatpush1.msra.mxu0 0.0
        %2807 = vmatprep.subr.mxu0 0.0
        %2808 = vmatpush1.msra.mxu0 0.0
        %2809 = vmatprep.subr.mxu0 0.0
        %2810 = vmatpush1.msra.mxu0 0.0
        %2811 = vmatprep.subr.mxu0 0.0
        %2812 = vmatpush1.msra.mxu0 0.0
        %2813 = vmatprep.subr.mxu0 0.0
        %2814 = vmatpush1.msra.mxu0 0.0
        %2815 = vmatprep.subr.mxu0 0.0
        %2816 = vmatpush1.msra.mxu0 0.0
        %2817 = vmatprep.subr.mxu0 0.0
        %2818 = vmatpush1.msra.mxu0 0.0
        %2819 = vmatprep.subr.mxu0 0.0
        %2820 = vmatpush1.msra.mxu0 0.0
        %2821 = vmatprep.subr.mxu0 0.0
        %2822 = vmatpush1.msra.mxu0 0.0
        %2823 = vmatprep.subr.mxu0 0.0
        %2824 = vmatpush1.msra.mxu0 0.0
        %2825 = vmatprep.subr.mxu0 0.0
        %2826 = vmatpush1.msra.mxu0 0.0
        %2827 = vmatprep.subr.mxu0 0.0
        %2828 = vmatpush1.msra.mxu0 0.0
        %2829 = vmatprep.subr.mxu0 0.0
        %2830 = vmatpush1.msra.mxu0 0.0
        %2831 = vmatprep.subr.mxu0 0.0
        %2832 = vmatpush1.msra.mxu0 0.0
        %2833 = vmatprep.mubr.f32.mxu0 0.0
        %2834 = vmatmul.mubr.f32.gmra.mrb[0].mxu0 %v2764
        %v2835 = vpop.f32.mrb[0].mxu0
        %v2836 = vadd.f32 %v2760, %v2835
        %v2837 = vpop.f32.mrb[0].mxu0
        %2838 = vmatprep.mubr.f32.mxu0 0.0
        %2839 = vmatmul.mubr.f32.gmra.mrb[0].mxu0 %v2767
        %v2840 = vpop.f32.mrb[0].mxu0
        %v2841 = vadd.f32 %v2760, %v2840
        %v2842 = vpop.f32.mrb[0].mxu0
        %2843 = vdwg.mxu0
        %v2844 = vadd.f32 %v2635, %v2836
        %v2845 = vadd.f32 %v2636, %v2841
        %v2846 = vld [vmem:[%s837] sm:$0x1]
        %v2847 = vld [vmem:[%s845] sm:$0x1]
        %v2848 = vsel %vm1035, %v2844, 0.0
        %2849 = vadd.xlane.f32.xlu0 %v2848
        %v2850 = vpop.xlane.xlu0 %2849
        %v2851 = vsel %vm1035, %v2845, 0.0
        %2852 = vadd.xlane.f32.xlu0 %v2851
        %v2853 = vpop.xlane.xlu0 %2852
        %v2854 = vmul.f32 %v2850, %v2600
        %v2855 = vmul.f32 %v2853, %v2600
        %v2856 = vsub.f32 %v2844, %v2854
        %v2857 = vsub.f32 %v2845, %v2855
        %v2858 = vmul.f32 %v2856, %v2856
        %v2859 = vmul.f32 %v2857, %v2857
        %v2860 = vsel %vm1035, %v2858, 0.0
        %2861 = vadd.xlane.f32.xlu0 %v2860
        %v2862 = vpop.xlane.xlu0 %2861
        %v2863 = vsel %vm1035, %v2859, 0.0
        %2864 = vadd.xlane.f32.xlu0 %v2863
        %v2865 = vpop.xlane.xlu0 %2864
        %v2866 = vmul.f32 %v2862, %v2600
        %v2867 = vmul.f32 %v2865, %v2600
        %v2868 = vadd.f32 %v2866, 1e-12
        %v2869 = vadd.f32 %v2867, 1e-12
        %v2870 = vrsqrt.pop %v2868
        %v2871 = vrsqrt.pop %v2869
        %v2872 = vmul.f32 %v2856, %v2870
        %v2873 = vmul.f32 %v2857, %v2871
        %v2875 = vlaneseq
        %v2876 = vshrl.u32 %v2875, 7
        %v2877 = vsub.s32 0, %v2876
        %v2878 = vrot.slane %v2846, %v2877
        %v2880 = vmul.f32 %v2872, %v2878
        %v2881 = vmul.f32 %v2873, %v2878
        %v2883 = vlaneseq
        %v2884 = vshrl.u32 %v2883, 7
        %v2885 = vsub.s32 0, %v2884
        %v2886 = vrot.slane %v2847, %v2885
        %v2888 = vadd.f32 %v2880, %v2886
        %v2889 = vadd.f32 %v2881, %v2886
        %2890 = vst.msk [vmem:[#allocation2] sm:$0xff] %vm1035, %v2888
        %2891 = vst.msk [vmem:[#allocation2 + $0x8] sm:$0xff] %vm1035, %v2889
        %p2892 = scmp.eq.s32.totalorder %s36, 1
        // Predicated region
        $region149: #{tpu_custom_call.1} parent=99 // pred_check
          %p2893 = pneg %p2892
        $region150: #{tpu_custom_call.1} parent=99 // pred_check_branch
          %2895 = sbr.rel (%p2893) target = $region152
        $region151: #{tpu_custom_call.1} parent=99 // pred_region
          %v2897 = vrot.slane %v2889, 7
          %vm2899 = vcmask 1040384
          %v2900 = vsel %vm2899, %v2888, %v2897
          %v2901 = vld [vmem:[%s16] sm:$0xff]
          %v2902 = vld [vmem:[%s16 + $0x8] sm:$0xff]
          %v2903 = vld [vmem:[%s16 + $0x10] sm:$0xff]
          %v2904 = vld [vmem:[%s16 + $0x18] sm:$0xff]
          %v2905 = vld [vmem:[%s17] sm:$0x1]
          %v2907 = vlaneseq
          %v2908 = vshrl.u32 %v2907, 7
          %v2909 = vsub.s32 0, %v2908
          %v2910 = vrot.slane %v2905, %v2909
          %v2913 = vsel %vm1035, %v2900, 0
          %2915 = vmatprep.subr.mxu0 0.0
          %2916 = vmatpush1.msra.mxu0 %v2901
          %2917 = vmatprep.subr.mxu0 0.0
          %2918 = vmatpush1.msra.mxu0 %v2902
          %2919 = vmatprep.subr.mxu0 0.0
          %2920 = vmatpush1.msra.mxu0 %v2903
          %2921 = vmatprep.subr.mxu0 0.0
          %2922 = vmatpush1.msra.mxu0 %v2904
          %2923 = vmatprep.subr.mxu0 0.0
          %2924 = vmatpush1.msra.mxu0 0.0
          %2925 = vmatprep.subr.mxu0 0.0
          %2926 = vmatpush1.msra.mxu0 0.0
          %2927 = vmatprep.subr.mxu0 0.0
          %2928 = vmatpush1.msra.mxu0 0.0
          %2929 = vmatprep.subr.mxu0 0.0
          %2930 = vmatpush1.msra.mxu0 0.0
          %2931 = vmatprep.subr.mxu0 0.0
          %2932 = vmatpush1.msra.mxu0 0.0
          %2933 = vmatprep.subr.mxu0 0.0
          %2934 = vmatpush1.msra.mxu0 0.0
          %2935 = vmatprep.subr.mxu0 0.0
          %2936 = vmatpush1.msra.mxu0 0.0
          %2937 = vmatprep.subr.mxu0 0.0
          %2938 = vmatpush1.msra.mxu0 0.0
          %2939 = vmatprep.subr.mxu0 0.0
          %2940 = vmatpush1.msra.mxu0 0.0
          %2941 = vmatprep.subr.mxu0 0.0
          %2942 = vmatpush1.msra.mxu0 0.0
          %2943 = vmatprep.subr.mxu0 0.0
          %2944 = vmatpush1.msra.mxu0 0.0
          %2945 = vmatprep.subr.mxu0 0.0
          %2946 = vmatpush1.msra.mxu0 0.0
          %2947 = vmatprep.subr.mxu0 0.0
          %2948 = vmatpush1.msra.mxu0 0.0
          %2949 = vmatprep.subr.mxu0 0.0
          %2950 = vmatpush1.msra.mxu0 0.0
          %2951 = vmatprep.subr.mxu0 0.0
          %2952 = vmatpush1.msra.mxu0 0.0
          %2953 = vmatprep.subr.mxu0 0.0
          %2954 = vmatpush1.msra.mxu0 0.0
          %2955 = vmatprep.subr.mxu0 0.0
          %2956 = vmatpush1.msra.mxu0 0.0
          %2957 = vmatprep.subr.mxu0 0.0
          %2958 = vmatpush1.msra.mxu0 0.0
          %2959 = vmatprep.subr.mxu0 0.0
          %2960 = vmatpush1.msra.mxu0 0.0
          %2961 = vmatprep.subr.mxu0 0.0
          %2962 = vmatpush1.msra.mxu0 0.0
          %2963 = vmatprep.subr.mxu0 0.0
          %2964 = vmatpush1.msra.mxu0 0.0
          %2965 = vmatprep.subr.mxu0 0.0
          %2966 = vmatpush1.msra.mxu0 0.0
          %2967 = vmatprep.subr.mxu0 0.0
          %2968 = vmatpush1.msra.mxu0 0.0
          %2969 = vmatprep.subr.mxu0 0.0
          %2970 = vmatpush1.msra.mxu0 0.0
          %2971 = vmatprep.subr.mxu0 0.0
          %2972 = vmatpush1.msra.mxu0 0.0
          %2973 = vmatprep.subr.mxu0 0.0
          %2974 = vmatpush1.msra.mxu0 0.0
          %2975 = vmatprep.subr.mxu0 0.0
          %2976 = vmatpush1.msra.mxu0 0.0
          %2977 = vmatprep.subr.mxu0 0.0
          %2978 = vmatpush1.msra.mxu0 0.0
          %2979 = vmatprep.mubr.f32.mxu0 0.0
          %2980 = vmatmul.mubr.f32.gmra.mrb[0].mxu0 %v2913
          %v2981 = vpop.f32.mrb[0].mxu0
          %v2982 = vadd.f32 %v2910, %v2981
          %v2983 = vpop.f32.mrb[0].mxu0
          %2984 = vdwg.mxu0
          %v2985 = vtanh.pop %v2982
          %v2986 = vld [vmem:[%s18] sm:$0xff]
          %v2987 = vld [vmem:[%s18 + $0x8] sm:$0xff]
          %v2988 = vld [vmem:[%s18 + $0x10] sm:$0xff]
          %v2989 = vld [vmem:[%s18 + $0x18] sm:$0xff]
          %v2990 = vld [vmem:[#allocation3] sm:$0x1]
          %v2992 = vlaneseq
          %v2993 = vshrl.u32 %v2992, 7
          %v2994 = vsub.s32 0, %v2993
          %v2995 = vrot.slane %v2990, %v2994
          %v2998 = vsel %vm1035, %v2985, 0
          %3000 = vmatprep.subr.mxu0 0.0
          %3001 = vmatpush1.msra.mxu0 %v2986
          %3002 = vmatprep.subr.mxu0 0.0
          %3003 = vmatpush1.msra.mxu0 %v2987
          %3004 = vmatprep.subr.mxu0 0.0
          %3005 = vmatpush1.msra.mxu0 %v2988
          %3006 = vmatprep.subr.mxu0 0.0
          %3007 = vmatpush1.msra.mxu0 %v2989
          %3008 = vmatprep.subr.mxu0 0.0
          %3009 = vmatpush1.msra.mxu0 0.0
          %3010 = vmatprep.subr.mxu0 0.0
          %3011 = vmatpush1.msra.mxu0 0.0
          %3012 = vmatprep.subr.mxu0 0.0
          %3013 = vmatpush1.msra.mxu0 0.0
          %3014 = vmatprep.subr.mxu0 0.0
          %3015 = vmatpush1.msra.mxu0 0.0
          %3016 = vmatprep.subr.mxu0 0.0
          %3017 = vmatpush1.msra.mxu0 0.0
          %3018 = vmatprep.subr.mxu0 0.0
          %3019 = vmatpush1.msra.mxu0 0.0
          %3020 = vmatprep.subr.mxu0 0.0
          %3021 = vmatpush1.msra.mxu0 0.0
          %3022 = vmatprep.subr.mxu0 0.0
          %3023 = vmatpush1.msra.mxu0 0.0
          %3024 = vmatprep.subr.mxu0 0.0
          %3025 = vmatpush1.msra.mxu0 0.0
          %3026 = vmatprep.subr.mxu0 0.0
          %3027 = vmatpush1.msra.mxu0 0.0
          %3028 = vmatprep.subr.mxu0 0.0
          %3029 = vmatpush1.msra.mxu0 0.0
          %3030 = vmatprep.subr.mxu0 0.0
          %3031 = vmatpush1.msra.mxu0 0.0
          %3032 = vmatprep.subr.mxu0 0.0
          %3033 = vmatpush1.msra.mxu0 0.0
          %3034 = vmatprep.subr.mxu0 0.0
          %3035 = vmatpush1.msra.mxu0 0.0
          %3036 = vmatprep.subr.mxu0 0.0
          %3037 = vmatpush1.msra.mxu0 0.0
          %3038 = vmatprep.subr.mxu0 0.0
          %3039 = vmatpush1.msra.mxu0 0.0
          %3040 = vmatprep.subr.mxu0 0.0
          %3041 = vmatpush1.msra.mxu0 0.0
          %3042 = vmatprep.subr.mxu0 0.0
          %3043 = vmatpush1.msra.mxu0 0.0
          %3044 = vmatprep.subr.mxu0 0.0
          %3045 = vmatpush1.msra.mxu0 0.0
          %3046 = vmatprep.subr.mxu0 0.0
          %3047 = vmatpush1.msra.mxu0 0.0
          %3048 = vmatprep.subr.mxu0 0.0
          %3049 = vmatpush1.msra.mxu0 0.0
          %3050 = vmatprep.subr.mxu0 0.0
          %3051 = vmatpush1.msra.mxu0 0.0
          %3052 = vmatprep.subr.mxu0 0.0
          %3053 = vmatpush1.msra.mxu0 0.0
          %3054 = vmatprep.subr.mxu0 0.0
          %3055 = vmatpush1.msra.mxu0 0.0
          %3056 = vmatprep.subr.mxu0 0.0
          %3057 = vmatpush1.msra.mxu0 0.0
          %3058 = vmatprep.subr.mxu0 0.0
          %3059 = vmatpush1.msra.mxu0 0.0
          %3060 = vmatprep.subr.mxu0 0.0
          %3061 = vmatpush1.msra.mxu0 0.0
          %3062 = vmatprep.subr.mxu0 0.0
          %3063 = vmatpush1.msra.mxu0 0.0
          %3064 = vmatprep.mubr.f32.mxu0 0.0
          %3065 = vmatmul.mubr.f32.gmra.mrb[0].mxu0 %v2998
          %v3066 = vpop.f32.mrb[0].mxu0
          %v3067 = vadd.f32 %v2995, %v3066
          %v3068 = vpop.f32.mrb[0].mxu0
          %3069 = vdwg.mxu0
          %3071 = vset.pattern.permute.xlu0 0
          %3072 = vperm.xlu0 %3071, %v3067
          %v3073 = vpop.permute.xlu0 %3072
          %3075 = vst [vmem:[#allocation18] sm:$0x3] %v3073
        $region152: #{tpu_custom_call.1} parent=99 // pred_fallthru
          _
        // Predicated region
        $region153: #{tpu_custom_call.1} parent=99 // pred_check
          %p3076 = pneg %p529
        $region154: #{tpu_custom_call.1} parent=99 // pred_check_branch
          %3078 = sbr.rel (%p3076) target = $region156
        $region155: #{tpu_custom_call.1} parent=99 // pred_region
          %s3080 = ssub.s32 32, 32
          %3081 = vsyncadd [#allocation6], %s3080
          %s3083 = sshll.u32 [#allocation18], 4
          %s3084 = int_to_ptr.vmem [resolvable:$true] %s3083
          %3086 = dma.vmem_to_hbm [thread:$0]  %s3084, 32, %s20, [#allocation6]
        $region156: #{tpu_custom_call.1} parent=99 // pred_fallthru
          _
        // Predicated region
        $region157: #{tpu_custom_call.1} parent=99 // pred_check
          %p3087 = pneg %p529
        $region158: #{tpu_custom_call.1} parent=99 // pred_check_branch
          %3089 = sbr.rel (%p3087) target = $region160
        $region159: #{tpu_custom_call.1} parent=99 // pred_region
          %3090 = dma.done [#allocation6], 32
        $region160: #{tpu_custom_call.1} parent=99 // pred_fallthru
          _
      $region100: #{tpu_custom_call.1} parent=5 // pred_fallthru
        _
      %p3091 = scmp.le.s32.totalorder 2, %s31
      // Predicated region
      $region161: #{tpu_custom_call.1} parent=5 // pred_check
        %p3092 = pneg %p3091
      $region162: #{tpu_custom_call.1} parent=5 // pred_check_branch
        %3094 = sbr.rel (%p3092) target = $region164
      $region163: #{tpu_custom_call.1} parent=5 // pred_region
        %s3095 = ssub.s32 %s31, 2
      $region164: #{tpu_custom_call.1} parent=5 // pred_fallthru
        _
    $region6: #{tpu_custom_call.1} parent=1 // loop_footer
      %s35 = sadd.s32 1, %s31
    $region7: #{tpu_custom_call.1} parent=1 // loop_footer_branch
      %30 = sbr.rel target = $region3
    $region8: #{tpu_custom_call.1} parent=1 // loop_exit
      _
    %3096 = vsyncpa [#allocation5], 1
    %s3097 = scalar_lea.sflag [#allocation5], 1
    %3098 = vsyncpa %s3097, 1
    %3099 = vsyncpa [#allocation8], 1
    %3100 = vsyncpa [#allocation6], 1
    %s3101 = scalar_lea.sflag [#allocation6], 1
    %3102 = vsyncpa %s3101, 1

</llo_original>
